<compile_context>
chip_gen: v6e
topology: v6e:2x2x1
jax: 0.10.0
libtpu: 0.0.40
codegen_flags: <defaults>
</compile_context>

<pallas_src>
import functools

import jax
import jax.numpy as jnp
from jax.experimental import pallas as pl
from jax.experimental.pallas import tpu as pltpu

CLASSES = 4
BN_EPS = 1e-5
LANE = 128
TM_MAX = 4096                       # absolute M-tile cap (lanes per grid step)
PATCH_TARGET = 3 * 2**19            # ~1.5 MiB of bf16 patch per grid step
VMEM_BUDGET = 32 * 1024 * 1024      # per-step footprint budget (v7x headroom)
VMEM_LIMIT = 48 * 1024 * 1024       # scoped VMEM limit (<= ~48 MiB for v7x)


def _round_up(x, m):
    return (x + m - 1) // m * m


def _pick_tile(m, kk, c_out, out_bytes):
    """Choose the M-tile (lanes per grid step) for one conv stage."""
    mp_min = _round_up(m, LANE)
    # Target ~1.5 MiB of bf16 patch per step: the block is (kk, 4*tm) bf16.
    tm = (PATCH_TARGET // (4 * kk * 2)) // LANE * LANE
    tm = max(LANE, min(tm, TM_MAX, mp_min))
    # Keep >= 2 grid steps on the "parallel" axis when there is enough work
    # (v7x has 2 TensorCores per chip).
    if mp_min >= 2 * LANE:
        tm = min(tm, max(LANE, (mp_min // 2) // LANE * LANE))

    # VMEM budget: double-buffered patch block + resident weight/bias +
    # double-buffered output block.
    def footprint(t):
        return (2 * (4 * kk * t * 2)            # patch blocks (bf16)
                + c_out * kk * 4 + c_out * 4    # weight (f32) + bias (f32)
                + 2 * (c_out * t * out_bytes))  # output blocks

    while tm > LANE and footprint(tm) > VMEM_BUDGET:
        tm -= LANE
    mp = _round_up(m, tm)
    return tm, mp


# ----------------------------------------------------------------------------
# Kernel: fused conv-as-matmul + 2x2 max-pool + bias + ReLU (lane-dense).
# ----------------------------------------------------------------------------
def _conv_relu_pool_kernel(p_ref, w_ref, b_ref, o_ref, *, tm):
    # p_ref : (1, K, 4*TM) bf16 -- im2col patches; lane slice [q*TM:(q+1)*TM]
    #                              holds pool-quadrant q of this M tile.
    # w_ref : (Cout, K)    f32  -- conv weight, K ordered (dy, dx, cin).
    # b_ref : (Cout, 1)    f32
    # o_ref : (Cout, TM)   bf16 (f32 for the last stage)
    p = p_ref[0].astype(jnp.float32)                                  # f32 MXU path
    y = jnp.dot(w_ref[...], p, preferred_element_type=jnp.float32)   # (Cout, 4*TM)
    # 2x2 max-pool == max over the four 128-aligned quadrant lane slices.
    out = jnp.maximum(jnp.maximum(y[:, 0 * tm:1 * tm], y[:, 1 * tm:2 * tm]),
                      jnp.maximum(y[:, 2 * tm:3 * tm], y[:, 3 * tm:4 * tm]))
    # Bias + ReLU hoisted out of the quadrant max (bias identical per quadrant).
    o_ref[...] = jnp.maximum(out + b_ref[...], 0.0).astype(o_ref.dtype)


def conv_relu_pool(x_cf, w, b, out_dtype):
    """One scalo_cnn stage: Conv2d(valid, stride 1) + ReLU + MaxPool2d(2).

    x_cf : (Cin, B, H, W) bf16 channels-first activation.
    w    : (Cout, Cin, k, k) PyTorch conv weight;  b: (Cout,).
    Returns (Cout, B, Hp, Wp) in `out_dtype`.
    """
    c_out, c_in, k, _ = w.shape
    c, batch, h, wdim = x_cf.shape
    assert c == c_in
    ho, wo = h - k + 1, wdim - k + 1
    hp, wp = ho // 2, wo // 2
    m = batch * hp * wp
    kk = k * k * c_in

    tm, mp = _pick_tile(m, kk, c_out, jnp.dtype(out_dtype).itemsize)
    ntile = mp // tm

    # im2col restricted to pooled output positions, grouped by pool quadrant.
    # x_cf is already bf16, so no large tensor is ever cast here.
    quads = []
    for qy in (0, 1):
        for qx in (0, 1):
            taps = []
            for dy in range(k):
                for dx in range(k):
                    sl = x_cf[:, :,
                              qy + dy: qy + dy + 2 * hp: 2,
                              qx + dx: qx + dx + 2 * wp: 2]      # (Cin,B,Hp,Wp)
                    taps.append(sl.reshape(c_in, m))
            quads.append(jnp.concatenate(taps, axis=0))           # (K, M)
    patches = jnp.stack(quads, axis=0).astype(jnp.bfloat16)       # (4, K, M)
    patches = jnp.pad(patches, ((0, 0), (0, 0), (0, mp - m)))
    # Regroup so each grid step reads ONE contiguous (K, 4*TM) block:
    # lane layout per tile = [quad0 | quad1 | quad2 | quad3], each TM wide.
    patches = patches.reshape(4, kk, ntile, tm)
    patches = jnp.transpose(patches, (2, 1, 0, 3)).reshape(ntile, kk, 4 * tm)

    # (Cout, K) with K ordered (dy, dx, cin) -- matches the patch layout.
    w_mat = jnp.transpose(w, (0, 2, 3, 1)).reshape(c_out, kk).astype(jnp.float32)
    b_col = b.reshape(c_out, 1).astype(jnp.float32)

    out = pl.pallas_call(
        functools.partial(_conv_relu_pool_kernel, tm=tm),
        out_shape=jax.ShapeDtypeStruct((c_out, mp), out_dtype),
        grid=(ntile,),
        in_specs=[
            pl.BlockSpec((1, kk, 4 * tm), lambda i: (i, 0, 0)),
            pl.BlockSpec((c_out, kk), lambda i: (0, 0)),   # resident weight
            pl.BlockSpec((c_out, 1), lambda i: (0, 0)),    # resident bias
        ],
        out_specs=pl.BlockSpec((c_out, tm), lambda i: (0, i)),
        compiler_params=pltpu.CompilerParams(
            dimension_semantics=("parallel",),
            vmem_limit_bytes=VMEM_LIMIT),
    )(patches, w_mat, b_col)

    # Drop the padded M columns (they contain ReLU(bias) garbage).
    return out[:, :m].reshape(c_out, batch, hp, wp)


# ----------------------------------------------------------------------------
# FC head: fc1 + ReLU + BatchNorm1d (eval) + (dropout=id) + fc2, in plain jnp.
# Tiny GEMM chain (B x 256 x 128 x classes); a dedicated Pallas kernel only
# added dispatch overhead and masked (lane < 128) stores, per the perf review.
# ----------------------------------------------------------------------------
def fc_head(x, w1, b1, gamma, beta, mean, var, w2, b2):
    h = jnp.maximum(jnp.dot(x, w1) + b1, 0.0)
    inv = jax.lax.rsqrt(var + BN_EPS)
    feat = (h - mean) * (gamma * inv) + beta     # BatchNorm1d, running stats
    logits = jnp.dot(feat, w2) + b2              # dropout (eval) = identity
    return logits, feat


# ----------------------------------------------------------------------------
# Forward pass
# ----------------------------------------------------------------------------
def scalo_cnn_forward(x_nchw, params):
    # NCHW (PyTorch) -> channels-first (C, B, H, W) so the pooled-pixel axis
    # stays on lanes inside the conv kernels; cast to bf16 ONCE here (all
    # intermediate stage outputs are already bf16).
    x = jnp.transpose(x_nchw, (1, 0, 2, 3)).astype(jnp.bfloat16)

    for i in range(1, 6):
        out_dtype = jnp.float32 if i == 5 else jnp.bfloat16
        x = conv_relu_pool(x, params[f"conv{i}_w"], params[f"conv{i}_b"],
                           out_dtype)
        # Dropout (eval mode) = identity.

    # AdaptiveAvgPool2d(1) + flatten: mean over spatial dims -> (B, 256).
    x = jnp.mean(x, axis=(2, 3)).T.astype(jnp.float32)

    return fc_head(
        x,
        params["fc1_w"].T.astype(jnp.float32), params["fc1_b"],
        params["bn1_gamma"], params["bn1_beta"],
        params["bn1_mean"], params["bn1_var"],
        params["fc2_w"].T.astype(jnp.float32), params["fc2_b"],
    )


# ----------------------------------------------------------------------------
# Deterministic parameter construction (synthetic, PyTorch-shaped)
# ----------------------------------------------------------------------------
def init_params(key):
    keys = jax.random.split(key, 16)
    n = lambda k, shape, s=0.05: (s * jax.random.normal(k, shape)).astype(jnp.float32)
    return {
        "conv1_w": n(keys[0], (16, 1, 4, 4)),    "conv1_b": n(keys[1], (16,)),
        "conv2_w": n(keys[2], (32, 16, 2, 2)),   "conv2_b": n(keys[3], (32,)),
        "conv3_w": n(keys[4], (64, 32, 2, 2)),   "conv3_b": n(keys[5], (64,)),
        "conv4_w": n(keys[6], (128, 64, 2, 2)),  "conv4_b": n(keys[7], (128,)),
        "conv5_w": n(keys[8], (256, 128, 2, 2)), "conv5_b": n(keys[9], (256,)),
        "fc1_w": n(keys[10], (128, 256)),        "fc1_b": n(keys[11], (128,)),
        "fc2_w": n(keys[12], (CLASSES, 128)),    "fc2_b": n(keys[13], (CLASSES,)),
        # BatchNorm1d(128) at default init / fresh running stats.
        "bn1_gamma": jnp.ones((128,), jnp.float32),
        "bn1_beta": jnp.zeros((128,), jnp.float32),
        "bn1_mean": jnp.zeros((128,), jnp.float32),
        "bn1_var": jnp.ones((128,), jnp.float32),
    }


if __name__ == "__main__":
    key = jax.random.PRNGKey(0)
    k_par, k_in = jax.random.split(key)
    params = init_params(k_par)

    # Small spatial size that survives 5 (conv, pool/2) stages: 67x67 -> 1x1.
    B, C, H, W = 2, 1, 67, 67
    x = jax.random.normal(k_in, (B, C, H, W), dtype=jnp.float32)

    logits, feature_x = jax.jit(scalo_cnn_forward)(x, params)
    jax.block_until_ready((logits, feature_x))

    assert logits.shape == (B, CLASSES) and feature_x.shape == (B, 128)
    assert bool(jnp.all(jnp.isfinite(logits))) and bool(jnp.all(jnp.isfinite(feature_x)))
    print("KERNEL_OK")
</pallas_src>

<mosaic_0001>
module attributes {stable_mosaic.version = 11 : i64} {
  func.func @_conv_relu_pool_kernel(%arg0: i32, %arg1: memref<1x16x4096xbf16, #tpu.memory_space<vmem>>, %arg2: memref<16x16xf32, #tpu.memory_space<vmem>>, %arg3: memref<16x1xf32, #tpu.memory_space<vmem>>, %arg4: memref<16x1024xbf16, #tpu.memory_space<vmem>>) attributes {dimension_semantics = [#tpu.dimension_semantics<parallel>], iteration_bounds = array<i64: 2>, scalar_prefetch = 0 : i64, scratch_operands = 0 : i64, tpu.core_type = #tpu.core_type<tc>, window_params = [{transform_indices = @transform_0, window_bounds = array<i64: 1, 16, 4096>}, {pipeline_mode = #tpu.pipeline_mode<synchronous>, transform_indices = @transform_1, window_bounds = array<i64: 16, 16>}, {pipeline_mode = #tpu.pipeline_mode<synchronous>, transform_indices = @transform_2, window_bounds = array<i64: 16, 1>}, {transform_indices = @transform_3, window_bounds = array<i64: 16, 1024>}]} {
    %c0 = arith.constant 0 : index
    %c0_0 = arith.constant 0 : index
    %c0_1 = arith.constant 0 : index
    %0 = vector.load %arg1[%c0, %c0_0, %c0_1] : memref<1x16x4096xbf16, #tpu.memory_space<vmem>>, vector<1x16x4096xbf16>
    %1 = vector.shape_cast %0 : vector<1x16x4096xbf16> to vector<16x4096xbf16>
    %2 = arith.extf %1 : vector<16x4096xbf16> to vector<16x4096xf32>
    %c0_2 = arith.constant 0 : index
    %c0_3 = arith.constant 0 : index
    %3 = vector.load %arg2[%c0_2, %c0_3] : memref<16x16xf32, #tpu.memory_space<vmem>>, vector<16x16xf32>
    %cst = arith.constant dense<0.000000e+00> : vector<16x4096xf32>
    %4 = tpu.matmul %3, %2, %cst {dimension_numbers = #tpu.dot_dimension_numbers<[1], [0], [0], [1], [0, 0, 1, 1], [], []>} : vector<16x16xf32>, vector<16x4096xf32>, vector<16x4096xf32> -> vector<16x4096xf32>
    %5 = vector.extract_strided_slice %4 {offsets = [0, 0], sizes = [16, 1024], strides = [1, 1]} : vector<16x4096xf32> to vector<16x1024xf32>
    %6 = vector.extract_strided_slice %4 {offsets = [0, 1024], sizes = [16, 1024], strides = [1, 1]} : vector<16x4096xf32> to vector<16x1024xf32>
    %7 = arith.maximumf %5, %6 : vector<16x1024xf32>
    %8 = vector.extract_strided_slice %4 {offsets = [0, 2048], sizes = [16, 1024], strides = [1, 1]} : vector<16x4096xf32> to vector<16x1024xf32>
    %9 = vector.extract_strided_slice %4 {offsets = [0, 3072], sizes = [16, 1024], strides = [1, 1]} : vector<16x4096xf32> to vector<16x1024xf32>
    %10 = arith.maximumf %8, %9 : vector<16x1024xf32>
    %11 = arith.maximumf %7, %10 : vector<16x1024xf32>
    %c0_4 = arith.constant 0 : index
    %c0_5 = arith.constant 0 : index
    %12 = vector.load %arg3[%c0_4, %c0_5] : memref<16x1xf32, #tpu.memory_space<vmem>>, vector<16x1xf32>
    %13 = vector.broadcast %12 : vector<16x1xf32> to vector<16x1024xf32>
    %14 = arith.addf %11, %13 : vector<16x1024xf32>
    %cst_6 = arith.constant 0.000000e+00 : f32
    %15 = vector.broadcast %cst_6 : f32 to vector<16x1024xf32>
    %16 = arith.maximumf %14, %15 : vector<16x1024xf32>
    %17 = arith.truncf %16 : vector<16x1024xf32> to vector<16x1024xbf16>
    %c0_7 = arith.constant 0 : index
    %c0_8 = arith.constant 0 : index
    %18 = vector.load %arg4[%c0_7, %c0_8] : memref<16x1024xbf16, #tpu.memory_space<vmem>>, vector<16x1024xbf16>
    tpu.vector_store %arg4[%c0_7, %c0_8], %17 {strides = array<i32>} : memref<16x1024xbf16, #tpu.memory_space<vmem>>, vector<16x1024xbf16>,
    return
  }
  func.func @transform_0(%arg0: i32) -> (i32, i32, i32) {
    %c0_i32 = arith.constant 0 : i32
    %c0_i32_0 = arith.constant 0 : i32
    %c0_i32_1 = arith.constant 0 : i32
    return %arg0, %c0_i32, %c0_i32_0 : i32, i32, i32
  }
  func.func @transform_1(%arg0: i32) -> (i32, i32) {
    %c0_i32 = arith.constant 0 : i32
    %c0_i32_0 = arith.constant 0 : i32
    %c0_i32_1 = arith.constant 0 : i32
    return %c0_i32, %c0_i32_0 : i32, i32
  }
  func.func @transform_2(%arg0: i32) -> (i32, i32) {
    %c0_i32 = arith.constant 0 : i32
    %c0_i32_0 = arith.constant 0 : i32
    %c0_i32_1 = arith.constant 0 : i32
    return %c0_i32, %c0_i32_0 : i32, i32
  }
  func.func @transform_3(%arg0: i32) -> (i32, i32) {
    %c0_i32 = arith.constant 0 : i32
    %c0_i32_0 = arith.constant 0 : i32
    return %c0_i32, %arg0 : i32, i32
  }
}

module attributes {stable_mosaic.version = 11 : i64} {
  func.func @_conv_relu_pool_kernel(%arg0: i32, %arg1: memref<1x64x1024xbf16, #tpu.memory_space<vmem>>, %arg2: memref<32x64xf32, #tpu.memory_space<vmem>>, %arg3: memref<32x1xf32, #tpu.memory_space<vmem>>, %arg4: memref<32x256xbf16, #tpu.memory_space<vmem>>) attributes {dimension_semantics = [#tpu.dimension_semantics<parallel>], iteration_bounds = array<i64: 2>, scalar_prefetch = 0 : i64, scratch_operands = 0 : i64, tpu.core_type = #tpu.core_type<tc>, window_params = [{transform_indices = @transform_0, window_bounds = array<i64: 1, 64, 1024>}, {pipeline_mode = #tpu.pipeline_mode<synchronous>, transform_indices = @transform_1, window_bounds = array<i64: 32, 64>}, {pipeline_mode = #tpu.pipeline_mode<synchronous>, transform_indices = @transform_2, window_bounds = array<i64: 32, 1>}, {transform_indices = @transform_3, window_bounds = array<i64: 32, 256>}]} {
    %c0 = arith.constant 0 : index
    %c0_0 = arith.constant 0 : index
    %c0_1 = arith.constant 0 : index
    %0 = vector.load %arg1[%c0, %c0_0, %c0_1] : memref<1x64x1024xbf16, #tpu.memory_space<vmem>>, vector<1x64x1024xbf16>
    %1 = vector.shape_cast %0 : vector<1x64x1024xbf16> to vector<64x1024xbf16>
    %2 = arith.extf %1 : vector<64x1024xbf16> to vector<64x1024xf32>
    %c0_2 = arith.constant 0 : index
    %c0_3 = arith.constant 0 : index
    %3 = vector.load %arg2[%c0_2, %c0_3] : memref<32x64xf32, #tpu.memory_space<vmem>>, vector<32x64xf32>
    %cst = arith.constant dense<0.000000e+00> : vector<32x1024xf32>
    %4 = tpu.matmul %3, %2, %cst {dimension_numbers = #tpu.dot_dimension_numbers<[1], [0], [0], [1], [0, 0, 1, 1], [], []>} : vector<32x64xf32>, vector<64x1024xf32>, vector<32x1024xf32> -> vector<32x1024xf32>
    %5 = vector.extract_strided_slice %4 {offsets = [0, 0], sizes = [32, 256], strides = [1, 1]} : vector<32x1024xf32> to vector<32x256xf32>
    %6 = vector.extract_strided_slice %4 {offsets = [0, 256], sizes = [32, 256], strides = [1, 1]} : vector<32x1024xf32> to vector<32x256xf32>
    %7 = arith.maximumf %5, %6 : vector<32x256xf32>
    %8 = vector.extract_strided_slice %4 {offsets = [0, 512], sizes = [32, 256], strides = [1, 1]} : vector<32x1024xf32> to vector<32x256xf32>
    %9 = vector.extract_strided_slice %4 {offsets = [0, 768], sizes = [32, 256], strides = [1, 1]} : vector<32x1024xf32> to vector<32x256xf32>
    %10 = arith.maximumf %8, %9 : vector<32x256xf32>
    %11 = arith.maximumf %7, %10 : vector<32x256xf32>
    %c0_4 = arith.constant 0 : index
    %c0_5 = arith.constant 0 : index
    %12 = vector.load %arg3[%c0_4, %c0_5] : memref<32x1xf32, #tpu.memory_space<vmem>>, vector<32x1xf32>
    %13 = vector.broadcast %12 : vector<32x1xf32> to vector<32x256xf32>
    %14 = arith.addf %11, %13 : vector<32x256xf32>
    %cst_6 = arith.constant 0.000000e+00 : f32
    %15 = vector.broadcast %cst_6 : f32 to vector<32x256xf32>
    %16 = arith.maximumf %14, %15 : vector<32x256xf32>
    %17 = arith.truncf %16 : vector<32x256xf32> to vector<32x256xbf16>
    %c0_7 = arith.constant 0 : index
    %c0_8 = arith.constant 0 : index
    %18 = vector.load %arg4[%c0_7, %c0_8] : memref<32x256xbf16, #tpu.memory_space<vmem>>, vector<32x256xbf16>
    tpu.vector_store %arg4[%c0_7, %c0_8], %17 {strides = array<i32>} : memref<32x256xbf16, #tpu.memory_space<vmem>>, vector<32x256xbf16>,
    return
  }
  func.func @transform_0(%arg0: i32) -> (i32, i32, i32) {
    %c0_i32 = arith.constant 0 : i32
    %c0_i32_0 = arith.constant 0 : i32
    %c0_i32_1 = arith.constant 0 : i32
    return %arg0, %c0_i32, %c0_i32_0 : i32, i32, i32
  }
  func.func @transform_1(%arg0: i32) -> (i32, i32) {
    %c0_i32 = arith.constant 0 : i32
    %c0_i32_0 = arith.constant 0 : i32
    %c0_i32_1 = arith.constant 0 : i32
    return %c0_i32, %c0_i32_0 : i32, i32
  }
  func.func @transform_2(%arg0: i32) -> (i32, i32) {
    %c0_i32 = arith.constant 0 : i32
    %c0_i32_0 = arith.constant 0 : i32
    %c0_i32_1 = arith.constant 0 : i32
    return %c0_i32, %c0_i32_0 : i32, i32
  }
  func.func @transform_3(%arg0: i32) -> (i32, i32) {
    %c0_i32 = arith.constant 0 : i32
    %c0_i32_0 = arith.constant 0 : i32
    return %c0_i32, %arg0 : i32, i32
  }
}

module attributes {stable_mosaic.version = 11 : i64} {
  func.func @_conv_relu_pool_kernel(%arg0: i32, %arg1: memref<1x128x512xbf16, #tpu.memory_space<vmem>>, %arg2: memref<64x128xf32, #tpu.memory_space<vmem>>, %arg3: memref<64x1xf32, #tpu.memory_space<vmem>>, %arg4: memref<64x128xbf16, #tpu.memory_space<vmem>>) attributes {dimension_semantics = [#tpu.dimension_semantics<parallel>], iteration_bounds = array<i64: 1>, scalar_prefetch = 0 : i64, scratch_operands = 0 : i64, tpu.core_type = #tpu.core_type<tc>, window_params = [{transform_indices = @transform_0, window_bounds = array<i64: 1, 128, 512>}, {pipeline_mode = #tpu.pipeline_mode<synchronous>, transform_indices = @transform_1, window_bounds = array<i64: 64, 128>}, {pipeline_mode = #tpu.pipeline_mode<synchronous>, transform_indices = @transform_2, window_bounds = array<i64: 64, 1>}, {transform_indices = @transform_3, window_bounds = array<i64: 64, 128>}]} {
    %c0 = arith.constant 0 : index
    %c0_0 = arith.constant 0 : index
    %c0_1 = arith.constant 0 : index
    %0 = vector.load %arg1[%c0, %c0_0, %c0_1] : memref<1x128x512xbf16, #tpu.memory_space<vmem>>, vector<1x128x512xbf16>
    %1 = vector.shape_cast %0 : vector<1x128x512xbf16> to vector<128x512xbf16>
    %2 = arith.extf %1 : vector<128x512xbf16> to vector<128x512xf32>
    %c0_2 = arith.constant 0 : index
    %c0_3 = arith.constant 0 : index
    %3 = vector.load %arg2[%c0_2, %c0_3] : memref<64x128xf32, #tpu.memory_space<vmem>>, vector<64x128xf32>
    %cst = arith.constant dense<0.000000e+00> : vector<64x512xf32>
    %4 = tpu.matmul %3, %2, %cst {dimension_numbers = #tpu.dot_dimension_numbers<[1], [0], [0], [1], [0, 0, 1, 1], [], []>} : vector<64x128xf32>, vector<128x512xf32>, vector<64x512xf32> -> vector<64x512xf32>
    %5 = vector.extract_strided_slice %4 {offsets = [0, 0], sizes = [64, 128], strides = [1, 1]} : vector<64x512xf32> to vector<64x128xf32>
    %6 = vector.extract_strided_slice %4 {offsets = [0, 128], sizes = [64, 128], strides = [1, 1]} : vector<64x512xf32> to vector<64x128xf32>
    %7 = arith.maximumf %5, %6 : vector<64x128xf32>
    %8 = vector.extract_strided_slice %4 {offsets = [0, 256], sizes = [64, 128], strides = [1, 1]} : vector<64x512xf32> to vector<64x128xf32>
    %9 = vector.extract_strided_slice %4 {offsets = [0, 384], sizes = [64, 128], strides = [1, 1]} : vector<64x512xf32> to vector<64x128xf32>
    %10 = arith.maximumf %8, %9 : vector<64x128xf32>
    %11 = arith.maximumf %7, %10 : vector<64x128xf32>
    %c0_4 = arith.constant 0 : index
    %c0_5 = arith.constant 0 : index
    %12 = vector.load %arg3[%c0_4, %c0_5] : memref<64x1xf32, #tpu.memory_space<vmem>>, vector<64x1xf32>
    %13 = vector.broadcast %12 : vector<64x1xf32> to vector<64x128xf32>
    %14 = arith.addf %11, %13 : vector<64x128xf32>
    %cst_6 = arith.constant 0.000000e+00 : f32
    %15 = vector.broadcast %cst_6 : f32 to vector<64x128xf32>
    %16 = arith.maximumf %14, %15 : vector<64x128xf32>
    %17 = arith.truncf %16 : vector<64x128xf32> to vector<64x128xbf16>
    %c0_7 = arith.constant 0 : index
    %c0_8 = arith.constant 0 : index
    %18 = vector.load %arg4[%c0_7, %c0_8] : memref<64x128xbf16, #tpu.memory_space<vmem>>, vector<64x128xbf16>
    tpu.vector_store %arg4[%c0_7, %c0_8], %17 {strides = array<i32>} : memref<64x128xbf16, #tpu.memory_space<vmem>>, vector<64x128xbf16>,
    return
  }
  func.func @transform_0(%arg0: i32) -> (i32, i32, i32) {
    %c0_i32 = arith.constant 0 : i32
    %c0_i32_0 = arith.constant 0 : i32
    %c0_i32_1 = arith.constant 0 : i32
    return %arg0, %c0_i32, %c0_i32_0 : i32, i32, i32
  }
  func.func @transform_1(%arg0: i32) -> (i32, i32) {
    %c0_i32 = arith.constant 0 : i32
    %c0_i32_0 = arith.constant 0 : i32
    %c0_i32_1 = arith.constant 0 : i32
    return %c0_i32, %c0_i32_0 : i32, i32
  }
  func.func @transform_2(%arg0: i32) -> (i32, i32) {
    %c0_i32 = arith.constant 0 : i32
    %c0_i32_0 = arith.constant 0 : i32
    %c0_i32_1 = arith.constant 0 : i32
    return %c0_i32, %c0_i32_0 : i32, i32
  }
  func.func @transform_3(%arg0: i32) -> (i32, i32) {
    %c0_i32 = arith.constant 0 : i32
    %c0_i32_0 = arith.constant 0 : i32
    return %c0_i32, %arg0 : i32, i32
  }
}

module attributes {stable_mosaic.version = 11 : i64} {
  func.func @_conv_relu_pool_kernel(%arg0: i32, %arg1: memref<1x256x512xbf16, #tpu.memory_space<vmem>>, %arg2: memref<128x256xf32, #tpu.memory_space<vmem>>, %arg3: memref<128x1xf32, #tpu.memory_space<vmem>>, %arg4: memref<128x128xbf16, #tpu.memory_space<vmem>>) attributes {dimension_semantics = [#tpu.dimension_semantics<parallel>], iteration_bounds = array<i64: 1>, scalar_prefetch = 0 : i64, scratch_operands = 0 : i64, tpu.core_type = #tpu.core_type<tc>, window_params = [{transform_indices = @transform_0, window_bounds = array<i64: 1, 256, 512>}, {pipeline_mode = #tpu.pipeline_mode<synchronous>, transform_indices = @transform_1, window_bounds = array<i64: 128, 256>}, {pipeline_mode = #tpu.pipeline_mode<synchronous>, transform_indices = @transform_2, window_bounds = array<i64: 128, 1>}, {transform_indices = @transform_3, window_bounds = array<i64: 128, 128>}]} {
    %c0 = arith.constant 0 : index
    %c0_0 = arith.constant 0 : index
    %c0_1 = arith.constant 0 : index
    %0 = vector.load %arg1[%c0, %c0_0, %c0_1] : memref<1x256x512xbf16, #tpu.memory_space<vmem>>, vector<1x256x512xbf16>
    %1 = vector.shape_cast %0 : vector<1x256x512xbf16> to vector<256x512xbf16>
    %2 = arith.extf %1 : vector<256x512xbf16> to vector<256x512xf32>
    %c0_2 = arith.constant 0 : index
    %c0_3 = arith.constant 0 : index
    %3 = vector.load %arg2[%c0_2, %c0_3] : memref<128x256xf32, #tpu.memory_space<vmem>>, vector<128x256xf32>
    %cst = arith.constant dense<0.000000e+00> : vector<128x512xf32>
    %4 = tpu.matmul %3, %2, %cst {dimension_numbers = #tpu.dot_dimension_numbers<[1], [0], [0], [1], [0, 0, 1, 1], [], []>} : vector<128x256xf32>, vector<256x512xf32>, vector<128x512xf32> -> vector<128x512xf32>
    %5 = vector.extract_strided_slice %4 {offsets = [0, 0], sizes = [128, 128], strides = [1, 1]} : vector<128x512xf32> to vector<128x128xf32>
    %6 = vector.extract_strided_slice %4 {offsets = [0, 128], sizes = [128, 128], strides = [1, 1]} : vector<128x512xf32> to vector<128x128xf32>
    %7 = arith.maximumf %5, %6 : vector<128x128xf32>
    %8 = vector.extract_strided_slice %4 {offsets = [0, 256], sizes = [128, 128], strides = [1, 1]} : vector<128x512xf32> to vector<128x128xf32>
    %9 = vector.extract_strided_slice %4 {offsets = [0, 384], sizes = [128, 128], strides = [1, 1]} : vector<128x512xf32> to vector<128x128xf32>
    %10 = arith.maximumf %8, %9 : vector<128x128xf32>
    %11 = arith.maximumf %7, %10 : vector<128x128xf32>
    %c0_4 = arith.constant 0 : index
    %c0_5 = arith.constant 0 : index
    %12 = vector.load %arg3[%c0_4, %c0_5] : memref<128x1xf32, #tpu.memory_space<vmem>>, vector<128x1xf32>
    %13 = vector.broadcast %12 : vector<128x1xf32> to vector<128x128xf32>
    %14 = arith.addf %11, %13 : vector<128x128xf32>
    %cst_6 = arith.constant 0.000000e+00 : f32
    %15 = vector.broadcast %cst_6 : f32 to vector<128x128xf32>
    %16 = arith.maximumf %14, %15 : vector<128x128xf32>
    %17 = arith.truncf %16 : vector<128x128xf32> to vector<128x128xbf16>
    %c0_7 = arith.constant 0 : index
    %c0_8 = arith.constant 0 : index
    %18 = vector.load %arg4[%c0_7, %c0_8] : memref<128x128xbf16, #tpu.memory_space<vmem>>, vector<128x128xbf16>
    tpu.vector_store %arg4[%c0_7, %c0_8], %17 {strides = array<i32>} : memref<128x128xbf16, #tpu.memory_space<vmem>>, vector<128x128xbf16>,
    return
  }
  func.func @transform_0(%arg0: i32) -> (i32, i32, i32) {
    %c0_i32 = arith.constant 0 : i32
    %c0_i32_0 = arith.constant 0 : i32
    %c0_i32_1 = arith.constant 0 : i32
    return %arg0, %c0_i32, %c0_i32_0 : i32, i32, i32
  }
  func.func @transform_1(%arg0: i32) -> (i32, i32) {
    %c0_i32 = arith.constant 0 : i32
    %c0_i32_0 = arith.constant 0 : i32
    %c0_i32_1 = arith.constant 0 : i32
    return %c0_i32, %c0_i32_0 : i32, i32
  }
  func.func @transform_2(%arg0: i32) -> (i32, i32) {
    %c0_i32 = arith.constant 0 : i32
    %c0_i32_0 = arith.constant 0 : i32
    %c0_i32_1 = arith.constant 0 : i32
    return %c0_i32, %c0_i32_0 : i32, i32
  }
  func.func @transform_3(%arg0: i32) -> (i32, i32) {
    %c0_i32 = arith.constant 0 : i32
    %c0_i32_0 = arith.constant 0 : i32
    return %c0_i32, %arg0 : i32, i32
  }
}

module attributes {stable_mosaic.version = 11 : i64} {
  func.func @_conv_relu_pool_kernel(%arg0: i32, %arg1: memref<1x512x512xbf16, #tpu.memory_space<vmem>>, %arg2: memref<256x512xf32, #tpu.memory_space<vmem>>, %arg3: memref<256x1xf32, #tpu.memory_space<vmem>>, %arg4: memref<256x128xf32, #tpu.memory_space<vmem>>) attributes {dimension_semantics = [#tpu.dimension_semantics<parallel>], iteration_bounds = array<i64: 1>, scalar_prefetch = 0 : i64, scratch_operands = 0 : i64, tpu.core_type = #tpu.core_type<tc>, window_params = [{transform_indices = @transform_0, window_bounds = array<i64: 1, 512, 512>}, {pipeline_mode = #tpu.pipeline_mode<synchronous>, transform_indices = @transform_1, window_bounds = array<i64: 256, 512>}, {pipeline_mode = #tpu.pipeline_mode<synchronous>, transform_indices = @transform_2, window_bounds = array<i64: 256, 1>}, {transform_indices = @transform_3, window_bounds = array<i64: 256, 128>}]} {
    %c0 = arith.constant 0 : index
    %c0_0 = arith.constant 0 : index
    %c0_1 = arith.constant 0 : index
    %0 = vector.load %arg1[%c0, %c0_0, %c0_1] : memref<1x512x512xbf16, #tpu.memory_space<vmem>>, vector<1x512x512xbf16>
    %1 = vector.shape_cast %0 : vector<1x512x512xbf16> to vector<512x512xbf16>
    %2 = arith.extf %1 : vector<512x512xbf16> to vector<512x512xf32>
    %c0_2 = arith.constant 0 : index
    %c0_3 = arith.constant 0 : index
    %3 = vector.load %arg2[%c0_2, %c0_3] : memref<256x512xf32, #tpu.memory_space<vmem>>, vector<256x512xf32>
    %cst = arith.constant dense<0.000000e+00> : vector<256x512xf32>
    %4 = tpu.matmul %3, %2, %cst {dimension_numbers = #tpu.dot_dimension_numbers<[1], [0], [0], [1], [0, 0, 1, 1], [], []>} : vector<256x512xf32>, vector<512x512xf32>, vector<256x512xf32> -> vector<256x512xf32>
    %5 = vector.extract_strided_slice %4 {offsets = [0, 0], sizes = [256, 128], strides = [1, 1]} : vector<256x512xf32> to vector<256x128xf32>
    %6 = vector.extract_strided_slice %4 {offsets = [0, 128], sizes = [256, 128], strides = [1, 1]} : vector<256x512xf32> to vector<256x128xf32>
    %7 = arith.maximumf %5, %6 : vector<256x128xf32>
    %8 = vector.extract_strided_slice %4 {offsets = [0, 256], sizes = [256, 128], strides = [1, 1]} : vector<256x512xf32> to vector<256x128xf32>
    %9 = vector.extract_strided_slice %4 {offsets = [0, 384], sizes = [256, 128], strides = [1, 1]} : vector<256x512xf32> to vector<256x128xf32>
    %10 = arith.maximumf %8, %9 : vector<256x128xf32>
    %11 = arith.maximumf %7, %10 : vector<256x128xf32>
    %c0_4 = arith.constant 0 : index
    %c0_5 = arith.constant 0 : index
    %12 = vector.load %arg3[%c0_4, %c0_5] : memref<256x1xf32, #tpu.memory_space<vmem>>, vector<256x1xf32>
    %13 = vector.broadcast %12 : vector<256x1xf32> to vector<256x128xf32>
    %14 = arith.addf %11, %13 : vector<256x128xf32>
    %cst_6 = arith.constant 0.000000e+00 : f32
    %15 = vector.broadcast %cst_6 : f32 to vector<256x128xf32>
    %16 = arith.maximumf %14, %15 : vector<256x128xf32>
    %c0_7 = arith.constant 0 : index
    %c0_8 = arith.constant 0 : index
    %17 = vector.load %arg4[%c0_7, %c0_8] : memref<256x128xf32, #tpu.memory_space<vmem>>, vector<256x128xf32>
    tpu.vector_store %arg4[%c0_7, %c0_8], %16 {strides = array<i32>} : memref<256x128xf32, #tpu.memory_space<vmem>>, vector<256x128xf32>,
    return
  }
  func.func @transform_0(%arg0: i32) -> (i32, i32, i32) {
    %c0_i32 = arith.constant 0 : i32
    %c0_i32_0 = arith.constant 0 : i32
    %c0_i32_1 = arith.constant 0 : i32
    return %arg0, %c0_i32, %c0_i32_0 : i32, i32, i32
  }
  func.func @transform_1(%arg0: i32) -> (i32, i32) {
    %c0_i32 = arith.constant 0 : i32
    %c0_i32_0 = arith.constant 0 : i32
    %c0_i32_1 = arith.constant 0 : i32
    return %c0_i32, %c0_i32_0 : i32, i32
  }
  func.func @transform_2(%arg0: i32) -> (i32, i32) {
    %c0_i32 = arith.constant 0 : i32
    %c0_i32_0 = arith.constant 0 : i32
    %c0_i32_1 = arith.constant 0 : i32
    return %c0_i32, %c0_i32_0 : i32, i32
  }
  func.func @transform_3(%arg0: i32) -> (i32, i32) {
    %c0_i32 = arith.constant 0 : i32
    %c0_i32_0 = arith.constant 0 : i32
    return %c0_i32, %arg0 : i32, i32
  }
}

</mosaic_0001>

<llo_original>
// kernel: scalo_cnn_forward.5
$region0: #{scalo_cnn_forward.5}
  #allocation0 [shape = 'u32[]', space=smem, size = 0x4, offset = 0x4, fixed_abs, tag = 'smem constant byte address 0x4 - core index']
  #allocation1 [shape = 'u32[144,128]{1,0:T(1,128)}', space=vmem, size = 0x12000, scoped, tag = 'internal scratch']
  %s0 = inlined_call_operand.vmem [shape: bf16[2,16,4096], index: 0, kind: input, shape index: {}]
  %s1 = inlined_call_operand.vmem [shape: f32[16,16], index: 1, kind: input, shape index: {}]
  %s2 = inlined_call_operand.vmem [shape: f32[16,1], index: 2, kind: input, shape index: {}]
  %s3 = inlined_call_operand.vmem [shape: bf16[16,2048], index: 3, kind: output, shape index: {}]
  %s4 = sld [smem:[#allocation0]]
  $region64: #{scalo_cnn_forward.5} parent=0
    _
  %s6 = ssub.s32 1, %s4
  %s7 = scalar_select 0, %s6, %s4
  $region1: #{scalo_cnn_forward.5} parent=0
    #allocation2 [shape = 'u8[65536]{0}', space=vmem, size = 0x10000, scoped, tag = 'output window, operand 0']
    loop: start=0, step=1, limit=4
    $region2: #{scalo_cnn_forward.5} parent=1 // loop_pre_header
      _
    $region3: #{scalo_cnn_forward.5} parent=1 // loop_header
      %s9 = sphi 0, %s13
      %p10 = scmp.ge.s32.totalorder %s9, 4
      %s19 = sphi 0, %s21
      %s22 = sphi 0, %s19
      %s23 = sphi 0, %s22
      %s39 = sphi 0, %s23
      %s43 = sphi 0, %s43
      %s45 = sphi 0, %s43
      %s46 = sphi 0, %s45
      %s60 = sphi 0, %s46
      %s64 = sphi 0, %s64
      %s66 = sphi 0, %s64
      %s67 = sphi 0, %s66
      %s81 = sphi 0, %s67
      %s87 = sphi 0, %s89
      %s90 = sphi 0, %s87
      %s91 = sphi 0, %s90
      %s107 = sphi 0, %s91
    $region4: #{scalo_cnn_forward.5} parent=1 // loop_header_branch
      %12 = sbr.rel (%p10) target = $region8
    $region5: #{scalo_cnn_forward.5} parent=1 // loop_body
      %s14 = ssub.s32 %s9, 1
      %s15 = ssub.s32 %s9, 2
      %s16 = sadd.s32 %s9, 1
      %s17 = ssub.s32 %s9, %s16
      %p18 = scmp.eq.s32.totalorder %s17, 0
      %s20 = sadd.s32 %s19, 1
      %s21 = scalar_select %p18, %s19, %s20
      %p24 = pneg %p18
      %p25 = scmp.eq.s32.totalorder %s9, 1
      %p26 = por %p24, %p25
      %p27 = scmp.ne.s32.totalorder %s19, %s22
      %p28 = scmp.eq.s32.totalorder %s9, 0
      %p29 = por %p27, %p28
      %p30 = scmp.ne.s32.totalorder %s19, %s22
      %p31 = scmp.eq.s32.totalorder %s14, 1
      %p32 = por %p30, %p31
      %p33 = scmp.ne.s32.totalorder %s22, %s23
      %p34 = scmp.eq.s32.totalorder %s14, 0
      %p35 = por %p33, %p34
      %p36 = scmp.ne.s32.totalorder %s22, %s23
      %p37 = scmp.eq.s32.totalorder %s15, 1
      %p38 = por %p36, %p37
      %p40 = scmp.ne.s32.totalorder %s23, %s39
      %p41 = scmp.eq.s32.totalorder %s15, 0
      %p42 = por %p40, %p41
      %s44 = sadd.s32 %s43, 1
      %p47 = scmp.eq.s32.totalorder %s9, 1
      %p48 = scmp.ne.s32.totalorder %s43, %s45
      %p49 = scmp.eq.s32.totalorder %s9, 0
      %p50 = por %p48, %p49
      %p51 = scmp.ne.s32.totalorder %s43, %s45
      %p52 = scmp.eq.s32.totalorder %s14, 1
      %p53 = por %p51, %p52
      %p54 = scmp.ne.s32.totalorder %s45, %s46
      %p55 = scmp.eq.s32.totalorder %s14, 0
      %p56 = por %p54, %p55
      %p57 = scmp.ne.s32.totalorder %s45, %s46
      %p58 = scmp.eq.s32.totalorder %s15, 1
      %p59 = por %p57, %p58
      %p61 = scmp.ne.s32.totalorder %s46, %s60
      %p62 = scmp.eq.s32.totalorder %s15, 0
      %p63 = por %p61, %p62
      %s65 = sadd.s32 %s64, 1
      %p68 = scmp.eq.s32.totalorder %s9, 1
      %p69 = scmp.ne.s32.totalorder %s64, %s66
      %p70 = scmp.eq.s32.totalorder %s9, 0
      %p71 = por %p69, %p70
      %p72 = scmp.ne.s32.totalorder %s64, %s66
      %p73 = scmp.eq.s32.totalorder %s14, 1
      %p74 = por %p72, %p73
      %p75 = scmp.ne.s32.totalorder %s66, %s67
      %p76 = scmp.eq.s32.totalorder %s14, 0
      %p77 = por %p75, %p76
      %p78 = scmp.ne.s32.totalorder %s66, %s67
      %p79 = scmp.eq.s32.totalorder %s15, 1
      %p80 = por %p78, %p79
      %p82 = scmp.ne.s32.totalorder %s67, %s81
      %p83 = scmp.eq.s32.totalorder %s15, 0
      %p84 = por %p82, %p83
      %s85 = ssub.s32 %s9, %s16
      %p86 = scmp.eq.s32.totalorder %s85, 0
      %s88 = sadd.s32 %s87, 1
      %s89 = scalar_select %p86, %s87, %s88
      %p92 = pneg %p86
      %p93 = scmp.eq.s32.totalorder %s9, 1
      %p94 = por %p92, %p93
      %p95 = scmp.ne.s32.totalorder %s87, %s90
      %p96 = scmp.eq.s32.totalorder %s9, 0
      %p97 = por %p95, %p96
      %p98 = scmp.ne.s32.totalorder %s87, %s90
      %p99 = scmp.eq.s32.totalorder %s14, 1
      %p100 = por %p98, %p99
      %p101 = scmp.ne.s32.totalorder %s90, %s91
      %p102 = scmp.eq.s32.totalorder %s14, 0
      %p103 = por %p101, %p102
      %p104 = scmp.ne.s32.totalorder %s90, %s91
      %p105 = scmp.eq.s32.totalorder %s15, 1
      %p106 = por %p104, %p105
      %p108 = scmp.ne.s32.totalorder %s91, %s107
      %p109 = scmp.eq.s32.totalorder %s15, 0
      %p110 = por %p108, %p109
      %p111 = scmp.le.s32.totalorder 1, %s9
      %p112 = scmp.lt.s32.totalorder %s9, 3
      %p113 = pnand %p111, %p112
      %p114 = pneg %p113
      // Predicated region
      $region9: #{scalo_cnn_forward.5} parent=5 // pred_check
        _
      $region10: #{scalo_cnn_forward.5} parent=5 // pred_check_branch
        %116 = sbr.rel (%p113) target = $region12
      $region11: #{scalo_cnn_forward.5} parent=5 // pred_region
        %s117 = ssub.s32 %s9, 1
        // Predicated region
        $region13: #{scalo_cnn_forward.5} parent=11 // pred_check
          %p118 = pneg %p56
        $region14: #{scalo_cnn_forward.5} parent=11 // pred_check_branch
          %120 = sbr.rel (%p118) target = $region16
        $region15: #{scalo_cnn_forward.5} parent=11 // pred_region
          _
        $region16: #{scalo_cnn_forward.5} parent=11 // pred_fallthru
          _
        // Predicated region
        $region17: #{scalo_cnn_forward.5} parent=11 // pred_check
          %p121 = pneg %p77
        $region18: #{scalo_cnn_forward.5} parent=11 // pred_check_branch
          %123 = sbr.rel (%p121) target = $region20
        $region19: #{scalo_cnn_forward.5} parent=11 // pred_region
          _
        $region20: #{scalo_cnn_forward.5} parent=11 // pred_fallthru
          _
      $region12: #{scalo_cnn_forward.5} parent=5 // pred_fallthru
        _
      %p124 = scmp.lt.s32.totalorder %s9, 2
      // Predicated region
      $region21: #{scalo_cnn_forward.5} parent=5 // pred_check
        %p125 = pneg %p124
      $region22: #{scalo_cnn_forward.5} parent=5 // pred_check_branch
        %127 = sbr.rel (%p125) target = $region24
      $region23: #{scalo_cnn_forward.5} parent=5 // pred_region
        // Predicated region
        $region25: #{scalo_cnn_forward.5} parent=23 // pred_check
          %p128 = pneg %p29
        $region26: #{scalo_cnn_forward.5} parent=23 // pred_check_branch
          %130 = sbr.rel (%p128) target = $region28
        $region27: #{scalo_cnn_forward.5} parent=23 // pred_region
          %p131 = scmp.lt.s32.totalorder %s9, 1
          %s132 = scalar_select %p131, %s9, 1
          %s133 = smul.addr %s132, 64
          %s134 = smul.addr %s133, 4
          %s135 = scalar_lea.vmem %s0, %s134
        $region28: #{scalo_cnn_forward.5} parent=23 // pred_fallthru
          _
      $region24: #{scalo_cnn_forward.5} parent=5 // pred_fallthru
        _
      %p136 = scmp.le.s32.totalorder 1, %s9
      %p137 = scmp.lt.s32.totalorder %s9, 3
      %p138 = pnand %p136, %p137
      %p139 = pneg %p138
      // Predicated region
      $region29: #{scalo_cnn_forward.5} parent=5 // pred_check
        _
      $region30: #{scalo_cnn_forward.5} parent=5 // pred_check_branch
        %141 = sbr.rel (%p138) target = $region32
      $region31: #{scalo_cnn_forward.5} parent=5 // pred_region
        %s142 = ssub.s32 %s9, 1
        %p143 = scmp.lt.s32.totalorder %s14, 1
        %s144 = scalar_select %p143, %s14, 1
        %s145 = smul.addr %s144, 64
        %s146 = smul.addr %s145, 4
        %s147 = scalar_lea.vmem %s0, %s146
        %p148 = pneg %p35
        %p149 = pneg %p32
        %p150 = pneg %p56
        %p151 = pneg %p53
        %p152 = pneg %p77
        %p153 = pneg %p74
        %p154 = pneg %p103
        %p155 = pneg %p100
        %s156 = sand.u32 %s90, 1
        %s157 = sand.u32 %s90, 1
        %s158 = smul.addr %s157, 64
        %s159 = scalar_lea.vmem [#allocation2], %s158
        %p160 = scmp.lt.s32.totalorder %s14, 1
        %s161 = scalar_select %p160, %s14, 1
        %s162 = smul.addr %s161, 64
        %s163 = smul.addr %s162, 4
        %s164 = scalar_lea.vmem %s0, %s163
        %s165 = smul.u32 8, %s14
        %v166 = vld [vmem:[%s164] sm:$0xff]
        %v167 = vld [vmem:[%s164 + $0x8] sm:$0xff]
        %v168 = vld [vmem:[%s164 + $0x10] sm:$0xff]
        %v169 = vld [vmem:[%s164 + $0x18] sm:$0xff]
        %v170 = vld [vmem:[%s164 + $0x20] sm:$0xff]
        %v171 = vld [vmem:[%s164 + $0x28] sm:$0xff]
        %v172 = vld [vmem:[%s164 + $0x30] sm:$0xff]
        %v173 = vld [vmem:[%s164 + $0x38] sm:$0xff]
        %v174 = vld [vmem:[%s164 + $0x40] sm:$0xff]
        %v175 = vld [vmem:[%s164 + $0x48] sm:$0xff]
        %v176 = vld [vmem:[%s164 + $0x50] sm:$0xff]
        %v177 = vld [vmem:[%s164 + $0x58] sm:$0xff]
        %v178 = vld [vmem:[%s164 + $0x60] sm:$0xff]
        %v179 = vld [vmem:[%s164 + $0x68] sm:$0xff]
        %v180 = vld [vmem:[%s164 + $0x70] sm:$0xff]
        %v181 = vld [vmem:[%s164 + $0x78] sm:$0xff]
        %v182 = vld [vmem:[%s164 + $0x80] sm:$0xff]
        %v183 = vld [vmem:[%s164 + $0x88] sm:$0xff]
        %v184 = vld [vmem:[%s164 + $0x90] sm:$0xff]
        %v185 = vld [vmem:[%s164 + $0x98] sm:$0xff]
        %v186 = vld [vmem:[%s164 + $0xa0] sm:$0xff]
        %v187 = vld [vmem:[%s164 + $0xa8] sm:$0xff]
        %v188 = vld [vmem:[%s164 + $0xb0] sm:$0xff]
        %v189 = vld [vmem:[%s164 + $0xb8] sm:$0xff]
        %v190 = vld [vmem:[%s164 + $0xc0] sm:$0xff]
        %v191 = vld [vmem:[%s164 + $0xc8] sm:$0xff]
        %v192 = vld [vmem:[%s164 + $0xd0] sm:$0xff]
        %v193 = vld [vmem:[%s164 + $0xd8] sm:$0xff]
        %v194 = vld [vmem:[%s164 + $0xe0] sm:$0xff]
        %v195 = vld [vmem:[%s164 + $0xe8] sm:$0xff]
        %v196 = vld [vmem:[%s164 + $0xf0] sm:$0xff]
        %v197 = vld [vmem:[%s164 + $0xf8] sm:$0xff]
        %v198 = vunpack.c.l.bf16 %v166
        %v199 = vunpack.c.h.bf16 %v166
        %v200 = vunpack.c.l.bf16 %v167
        %v201 = vunpack.c.h.bf16 %v167
        %v202 = vunpack.c.l.bf16 %v168
        %v203 = vunpack.c.h.bf16 %v168
        %v204 = vunpack.c.l.bf16 %v169
        %v205 = vunpack.c.h.bf16 %v169
        %v206 = vunpack.c.l.bf16 %v170
        %v207 = vunpack.c.h.bf16 %v170
        %v208 = vunpack.c.l.bf16 %v171
        %v209 = vunpack.c.h.bf16 %v171
        %v210 = vunpack.c.l.bf16 %v172
        %v211 = vunpack.c.h.bf16 %v172
        %v212 = vunpack.c.l.bf16 %v173
        %v213 = vunpack.c.h.bf16 %v173
        %v214 = vunpack.c.l.bf16 %v174
        %v215 = vunpack.c.h.bf16 %v174
        %v216 = vunpack.c.l.bf16 %v175
        %v217 = vunpack.c.h.bf16 %v175
        %v218 = vunpack.c.l.bf16 %v176
        %v219 = vunpack.c.h.bf16 %v176
        %v220 = vunpack.c.l.bf16 %v177
        %v221 = vunpack.c.h.bf16 %v177
        %v222 = vunpack.c.l.bf16 %v178
        %v223 = vunpack.c.h.bf16 %v178
        %v224 = vunpack.c.l.bf16 %v179
        %v225 = vunpack.c.h.bf16 %v179
        %v226 = vunpack.c.l.bf16 %v180
        %v227 = vunpack.c.h.bf16 %v180
        %v228 = vunpack.c.l.bf16 %v181
        %v229 = vunpack.c.h.bf16 %v181
        %v230 = vunpack.c.l.bf16 %v182
        %v231 = vunpack.c.h.bf16 %v182
        %v232 = vunpack.c.l.bf16 %v183
        %v233 = vunpack.c.h.bf16 %v183
        %v234 = vunpack.c.l.bf16 %v184
        %v235 = vunpack.c.h.bf16 %v184
        %v236 = vunpack.c.l.bf16 %v185
        %v237 = vunpack.c.h.bf16 %v185
        %v238 = vunpack.c.l.bf16 %v186
        %v239 = vunpack.c.h.bf16 %v186
        %v240 = vunpack.c.l.bf16 %v187
        %v241 = vunpack.c.h.bf16 %v187
        %v242 = vunpack.c.l.bf16 %v188
        %v243 = vunpack.c.h.bf16 %v188
        %v244 = vunpack.c.l.bf16 %v189
        %v245 = vunpack.c.h.bf16 %v189
        %v246 = vunpack.c.l.bf16 %v190
        %v247 = vunpack.c.h.bf16 %v190
        %v248 = vunpack.c.l.bf16 %v191
        %v249 = vunpack.c.h.bf16 %v191
        %v250 = vunpack.c.l.bf16 %v192
        %v251 = vunpack.c.h.bf16 %v192
        %v252 = vunpack.c.l.bf16 %v193
        %v253 = vunpack.c.h.bf16 %v193
        %v254 = vunpack.c.l.bf16 %v194
        %v255 = vunpack.c.h.bf16 %v194
        %v256 = vunpack.c.l.bf16 %v195
        %v257 = vunpack.c.h.bf16 %v195
        %v258 = vunpack.c.l.bf16 %v196
        %v259 = vunpack.c.h.bf16 %v196
        %v260 = vunpack.c.l.bf16 %v197
        %v261 = vunpack.c.h.bf16 %v197
        %v262 = vld [vmem:[%s1] sm:$0xff]
        %v263 = vld [vmem:[%s1 + $0x8] sm:$0xff]
        %vm264 = vcmask 130048
        %v266 = vsel %vm264, %v262, 0
        %v269 = vsel %vm264, %v263, 0
        %271 = vmatprep.subr.mxu0 0.0
        %272 = vmatpush1.msra.mxu0 0.0
        %273 = vmatprep.subr.mxu0 0.0
        %274 = vmatpush1.msra.mxu0 0.0
        %275 = vmatprep.subr.mxu0 0.0
        %276 = vmatpush1.msra.mxu0 0.0
        %277 = vmatprep.subr.mxu0 0.0
        %278 = vmatpush1.msra.mxu0 0.0
        %279 = vmatprep.subr.mxu0 0.0
        %280 = vmatpush1.msra.mxu0 0.0
        %281 = vmatprep.subr.mxu0 0.0
        %282 = vmatpush1.msra.mxu0 0.0
        %283 = vmatprep.subr.mxu0 0.0
        %284 = vmatpush1.msra.mxu0 0.0
        %285 = vmatprep.subr.mxu0 0.0
        %286 = vmatpush1.msra.mxu0 0.0
        %287 = vmatprep.subr.mxu0 0.0
        %288 = vmatpush1.msra.mxu0 0.0
        %289 = vmatprep.subr.mxu0 0.0
        %290 = vmatpush1.msra.mxu0 0.0
        %291 = vmatprep.subr.mxu0 0.0
        %292 = vmatpush1.msra.mxu0 0.0
        %293 = vmatprep.subr.mxu0 0.0
        %294 = vmatpush1.msra.mxu0 0.0
        %295 = vmatprep.subr.mxu0 0.0
        %296 = vmatpush1.msra.mxu0 0.0
        %297 = vmatprep.subr.mxu0 0.0
        %298 = vmatpush1.msra.mxu0 0.0
        %299 = vmatprep.subr.mxu0 %v231
        %300 = vmatpush1.msra.mxu0 %v230
        %301 = vmatprep.subr.mxu0 %v199
        %302 = vmatpush1.msra.mxu0 %v198
        %303 = vmatprep.subr.mxu0 0.0
        %304 = vmatpush2.msra.mxu0 0.0
        %305 = vmatprep.subr.mxu0 0.0
        %306 = vmatpush2.msra.mxu0 0.0
        %307 = vmatprep.subr.mxu0 0.0
        %308 = vmatpush2.msra.mxu0 0.0
        %309 = vmatprep.subr.mxu0 0.0
        %310 = vmatpush2.msra.mxu0 0.0
        %311 = vmatprep.subr.mxu0 0.0
        %312 = vmatpush2.msra.mxu0 0.0
        %313 = vmatprep.subr.mxu0 0.0
        %314 = vmatpush2.msra.mxu0 0.0
        %315 = vmatprep.subr.mxu0 0.0
        %316 = vmatpush2.msra.mxu0 0.0
        %317 = vmatprep.subr.mxu0 0.0
        %318 = vmatpush2.msra.mxu0 0.0
        %319 = vmatprep.subr.mxu0 0.0
        %320 = vmatpush2.msra.mxu0 0.0
        %321 = vmatprep.subr.mxu0 0.0
        %322 = vmatpush2.msra.mxu0 0.0
        %323 = vmatprep.subr.mxu0 0.0
        %324 = vmatpush2.msra.mxu0 0.0
        %325 = vmatprep.subr.mxu0 0.0
        %326 = vmatpush2.msra.mxu0 0.0
        %327 = vmatprep.subr.mxu0 0.0
        %328 = vmatpush2.msra.mxu0 0.0
        %329 = vmatprep.subr.mxu0 0.0
        %330 = vmatpush2.msra.mxu0 0.0
        %331 = vmatprep.subr.mxu0 0.0
        %332 = vmatpush2.msra.mxu0 0.0
        %333 = vmatprep.subr.mxu0 0.0
        %334 = vmatpush2.msra.mxu0 0.0
        %335 = vmatprep.mubr.f32.mxu0 0.0
        %336 = vmatmul.mubr.f32.gmra.mxu0 %v266
        %v337 = vpop.f32.mrf.mxu0
        %v338 = vadd.f32 0.0, %v337
        %v339 = vpop.f32.mrf.mxu0
        %v340 = vadd.f32 0.0, %v339
        %341 = vmatprep.mubr.f32.mxu0 0.0
        %342 = vmatmul.mubr.f32.gmra.mxu0 %v269
        %v343 = vpop.f32.mrf.mxu0
        %v344 = vadd.f32 0.0, %v343
        %v345 = vpop.f32.mrf.mxu0
        %v346 = vadd.f32 0.0, %v345
        %347 = vdwg.mxu0
        %348 = vmatprep.subr.mxu0 0.0
        %349 = vmatpush1.msra.mxu0 0.0
        %350 = vmatprep.subr.mxu0 0.0
        %351 = vmatpush1.msra.mxu0 0.0
        %352 = vmatprep.subr.mxu0 0.0
        %353 = vmatpush1.msra.mxu0 0.0
        %354 = vmatprep.subr.mxu0 0.0
        %355 = vmatpush1.msra.mxu0 0.0
        %356 = vmatprep.subr.mxu0 0.0
        %357 = vmatpush1.msra.mxu0 0.0
        %358 = vmatprep.subr.mxu0 0.0
        %359 = vmatpush1.msra.mxu0 0.0
        %360 = vmatprep.subr.mxu0 0.0
        %361 = vmatpush1.msra.mxu0 0.0
        %362 = vmatprep.subr.mxu0 0.0
        %363 = vmatpush1.msra.mxu0 0.0
        %364 = vmatprep.subr.mxu0 0.0
        %365 = vmatpush1.msra.mxu0 0.0
        %366 = vmatprep.subr.mxu0 0.0
        %367 = vmatpush1.msra.mxu0 0.0
        %368 = vmatprep.subr.mxu0 0.0
        %369 = vmatpush1.msra.mxu0 0.0
        %370 = vmatprep.subr.mxu0 0.0
        %371 = vmatpush1.msra.mxu0 0.0
        %372 = vmatprep.subr.mxu0 0.0
        %373 = vmatpush1.msra.mxu0 0.0
        %374 = vmatprep.subr.mxu0 0.0
        %375 = vmatpush1.msra.mxu0 0.0
        %376 = vmatprep.subr.mxu0 %v233
        %377 = vmatpush1.msra.mxu0 %v232
        %378 = vmatprep.subr.mxu0 %v201
        %379 = vmatpush1.msra.mxu0 %v200
        %380 = vmatprep.subr.mxu0 0.0
        %381 = vmatpush2.msra.mxu0 0.0
        %382 = vmatprep.subr.mxu0 0.0
        %383 = vmatpush2.msra.mxu0 0.0
        %384 = vmatprep.subr.mxu0 0.0
        %385 = vmatpush2.msra.mxu0 0.0
        %386 = vmatprep.subr.mxu0 0.0
        %387 = vmatpush2.msra.mxu0 0.0
        %388 = vmatprep.subr.mxu0 0.0
        %389 = vmatpush2.msra.mxu0 0.0
        %390 = vmatprep.subr.mxu0 0.0
        %391 = vmatpush2.msra.mxu0 0.0
        %392 = vmatprep.subr.mxu0 0.0
        %393 = vmatpush2.msra.mxu0 0.0
        %394 = vmatprep.subr.mxu0 0.0
        %395 = vmatpush2.msra.mxu0 0.0
        %396 = vmatprep.subr.mxu0 0.0
        %397 = vmatpush2.msra.mxu0 0.0
        %398 = vmatprep.subr.mxu0 0.0
        %399 = vmatpush2.msra.mxu0 0.0
        %400 = vmatprep.subr.mxu0 0.0
        %401 = vmatpush2.msra.mxu0 0.0
        %402 = vmatprep.subr.mxu0 0.0
        %403 = vmatpush2.msra.mxu0 0.0
        %404 = vmatprep.subr.mxu0 0.0
        %405 = vmatpush2.msra.mxu0 0.0
        %406 = vmatprep.subr.mxu0 0.0
        %407 = vmatpush2.msra.mxu0 0.0
        %408 = vmatprep.subr.mxu0 0.0
        %409 = vmatpush2.msra.mxu0 0.0
        %410 = vmatprep.subr.mxu0 0.0
        %411 = vmatpush2.msra.mxu0 0.0
        %412 = vmatprep.mubr.f32.mxu0 0.0
        %413 = vmatmul.mubr.f32.gmra.mxu0 %v266
        %v414 = vpop.f32.mrf.mxu0
        %v415 = vadd.f32 0.0, %v414
        %v416 = vpop.f32.mrf.mxu0
        %v417 = vadd.f32 0.0, %v416
        %418 = vmatprep.mubr.f32.mxu0 0.0
        %419 = vmatmul.mubr.f32.gmra.mxu0 %v269
        %v420 = vpop.f32.mrf.mxu0
        %v421 = vadd.f32 0.0, %v420
        %v422 = vpop.f32.mrf.mxu0
        %v423 = vadd.f32 0.0, %v422
        %424 = vdwg.mxu0
        %425 = vmatprep.subr.mxu0 0.0
        %426 = vmatpush1.msra.mxu0 0.0
        %427 = vmatprep.subr.mxu0 0.0
        %428 = vmatpush1.msra.mxu0 0.0
        %429 = vmatprep.subr.mxu0 0.0
        %430 = vmatpush1.msra.mxu0 0.0
        %431 = vmatprep.subr.mxu0 0.0
        %432 = vmatpush1.msra.mxu0 0.0
        %433 = vmatprep.subr.mxu0 0.0
        %434 = vmatpush1.msra.mxu0 0.0
        %435 = vmatprep.subr.mxu0 0.0
        %436 = vmatpush1.msra.mxu0 0.0
        %437 = vmatprep.subr.mxu0 0.0
        %438 = vmatpush1.msra.mxu0 0.0
        %439 = vmatprep.subr.mxu0 0.0
        %440 = vmatpush1.msra.mxu0 0.0
        %441 = vmatprep.subr.mxu0 0.0
        %442 = vmatpush1.msra.mxu0 0.0
        %443 = vmatprep.subr.mxu0 0.0
        %444 = vmatpush1.msra.mxu0 0.0
        %445 = vmatprep.subr.mxu0 0.0
        %446 = vmatpush1.msra.mxu0 0.0
        %447 = vmatprep.subr.mxu0 0.0
        %448 = vmatpush1.msra.mxu0 0.0
        %449 = vmatprep.subr.mxu0 0.0
        %450 = vmatpush1.msra.mxu0 0.0
        %451 = vmatprep.subr.mxu0 0.0
        %452 = vmatpush1.msra.mxu0 0.0
        %453 = vmatprep.subr.mxu0 %v235
        %454 = vmatpush1.msra.mxu0 %v234
        %455 = vmatprep.subr.mxu0 %v203
        %456 = vmatpush1.msra.mxu0 %v202
        %457 = vmatprep.subr.mxu0 0.0
        %458 = vmatpush2.msra.mxu0 0.0
        %459 = vmatprep.subr.mxu0 0.0
        %460 = vmatpush2.msra.mxu0 0.0
        %461 = vmatprep.subr.mxu0 0.0
        %462 = vmatpush2.msra.mxu0 0.0
        %463 = vmatprep.subr.mxu0 0.0
        %464 = vmatpush2.msra.mxu0 0.0
        %465 = vmatprep.subr.mxu0 0.0
        %466 = vmatpush2.msra.mxu0 0.0
        %467 = vmatprep.subr.mxu0 0.0
        %468 = vmatpush2.msra.mxu0 0.0
        %469 = vmatprep.subr.mxu0 0.0
        %470 = vmatpush2.msra.mxu0 0.0
        %471 = vmatprep.subr.mxu0 0.0
        %472 = vmatpush2.msra.mxu0 0.0
        %473 = vmatprep.subr.mxu0 0.0
        %474 = vmatpush2.msra.mxu0 0.0
        %475 = vmatprep.subr.mxu0 0.0
        %476 = vmatpush2.msra.mxu0 0.0
        %477 = vmatprep.subr.mxu0 0.0
        %478 = vmatpush2.msra.mxu0 0.0
        %479 = vmatprep.subr.mxu0 0.0
        %480 = vmatpush2.msra.mxu0 0.0
        %481 = vmatprep.subr.mxu0 0.0
        %482 = vmatpush2.msra.mxu0 0.0
        %483 = vmatprep.subr.mxu0 0.0
        %484 = vmatpush2.msra.mxu0 0.0
        %485 = vmatprep.subr.mxu0 0.0
        %486 = vmatpush2.msra.mxu0 0.0
        %487 = vmatprep.subr.mxu0 0.0
        %488 = vmatpush2.msra.mxu0 0.0
        %489 = vmatprep.mubr.f32.mxu0 0.0
        %490 = vmatmul.mubr.f32.gmra.mxu0 %v266
        %v491 = vpop.f32.mrf.mxu0
        %v492 = vadd.f32 0.0, %v491
        %v493 = vpop.f32.mrf.mxu0
        %v494 = vadd.f32 0.0, %v493
        %495 = vmatprep.mubr.f32.mxu0 0.0
        %496 = vmatmul.mubr.f32.gmra.mxu0 %v269
        %v497 = vpop.f32.mrf.mxu0
        %v498 = vadd.f32 0.0, %v497
        %v499 = vpop.f32.mrf.mxu0
        %v500 = vadd.f32 0.0, %v499
        %501 = vdwg.mxu0
        %502 = vmatprep.subr.mxu0 0.0
        %503 = vmatpush1.msra.mxu0 0.0
        %504 = vmatprep.subr.mxu0 0.0
        %505 = vmatpush1.msra.mxu0 0.0
        %506 = vmatprep.subr.mxu0 0.0
        %507 = vmatpush1.msra.mxu0 0.0
        %508 = vmatprep.subr.mxu0 0.0
        %509 = vmatpush1.msra.mxu0 0.0
        %510 = vmatprep.subr.mxu0 0.0
        %511 = vmatpush1.msra.mxu0 0.0
        %512 = vmatprep.subr.mxu0 0.0
        %513 = vmatpush1.msra.mxu0 0.0
        %514 = vmatprep.subr.mxu0 0.0
        %515 = vmatpush1.msra.mxu0 0.0
        %516 = vmatprep.subr.mxu0 0.0
        %517 = vmatpush1.msra.mxu0 0.0
        %518 = vmatprep.subr.mxu0 0.0
        %519 = vmatpush1.msra.mxu0 0.0
        %520 = vmatprep.subr.mxu0 0.0
        %521 = vmatpush1.msra.mxu0 0.0
        %522 = vmatprep.subr.mxu0 0.0
        %523 = vmatpush1.msra.mxu0 0.0
        %524 = vmatprep.subr.mxu0 0.0
        %525 = vmatpush1.msra.mxu0 0.0
        %526 = vmatprep.subr.mxu0 0.0
        %527 = vmatpush1.msra.mxu0 0.0
        %528 = vmatprep.subr.mxu0 0.0
        %529 = vmatpush1.msra.mxu0 0.0
        %530 = vmatprep.subr.mxu0 %v237
        %531 = vmatpush1.msra.mxu0 %v236
        %532 = vmatprep.subr.mxu0 %v205
        %533 = vmatpush1.msra.mxu0 %v204
        %534 = vmatprep.subr.mxu0 0.0
        %535 = vmatpush2.msra.mxu0 0.0
        %536 = vmatprep.subr.mxu0 0.0
        %537 = vmatpush2.msra.mxu0 0.0
        %538 = vmatprep.subr.mxu0 0.0
        %539 = vmatpush2.msra.mxu0 0.0
        %540 = vmatprep.subr.mxu0 0.0
        %541 = vmatpush2.msra.mxu0 0.0
        %542 = vmatprep.subr.mxu0 0.0
        %543 = vmatpush2.msra.mxu0 0.0
        %544 = vmatprep.subr.mxu0 0.0
        %545 = vmatpush2.msra.mxu0 0.0
        %546 = vmatprep.subr.mxu0 0.0
        %547 = vmatpush2.msra.mxu0 0.0
        %548 = vmatprep.subr.mxu0 0.0
        %549 = vmatpush2.msra.mxu0 0.0
        %550 = vmatprep.subr.mxu0 0.0
        %551 = vmatpush2.msra.mxu0 0.0
        %552 = vmatprep.subr.mxu0 0.0
        %553 = vmatpush2.msra.mxu0 0.0
        %554 = vmatprep.subr.mxu0 0.0
        %555 = vmatpush2.msra.mxu0 0.0
        %556 = vmatprep.subr.mxu0 0.0
        %557 = vmatpush2.msra.mxu0 0.0
        %558 = vmatprep.subr.mxu0 0.0
        %559 = vmatpush2.msra.mxu0 0.0
        %560 = vmatprep.subr.mxu0 0.0
        %561 = vmatpush2.msra.mxu0 0.0
        %562 = vmatprep.subr.mxu0 0.0
        %563 = vmatpush2.msra.mxu0 0.0
        %564 = vmatprep.subr.mxu0 0.0
        %565 = vmatpush2.msra.mxu0 0.0
        %566 = vmatprep.mubr.f32.mxu0 0.0
        %567 = vmatmul.mubr.f32.gmra.mxu0 %v266
        %v568 = vpop.f32.mrf.mxu0
        %v569 = vadd.f32 0.0, %v568
        %v570 = vpop.f32.mrf.mxu0
        %v571 = vadd.f32 0.0, %v570
        %572 = vmatprep.mubr.f32.mxu0 0.0
        %573 = vmatmul.mubr.f32.gmra.mxu0 %v269
        %v574 = vpop.f32.mrf.mxu0
        %v575 = vadd.f32 0.0, %v574
        %v576 = vpop.f32.mrf.mxu0
        %v577 = vadd.f32 0.0, %v576
        %578 = vdwg.mxu0
        %579 = vmatprep.subr.mxu0 0.0
        %580 = vmatpush1.msra.mxu0 0.0
        %581 = vmatprep.subr.mxu0 0.0
        %582 = vmatpush1.msra.mxu0 0.0
        %583 = vmatprep.subr.mxu0 0.0
        %584 = vmatpush1.msra.mxu0 0.0
        %585 = vmatprep.subr.mxu0 0.0
        %586 = vmatpush1.msra.mxu0 0.0
        %587 = vmatprep.subr.mxu0 0.0
        %588 = vmatpush1.msra.mxu0 0.0
        %589 = vmatprep.subr.mxu0 0.0
        %590 = vmatpush1.msra.mxu0 0.0
        %591 = vmatprep.subr.mxu0 0.0
        %592 = vmatpush1.msra.mxu0 0.0
        %593 = vmatprep.subr.mxu0 0.0
        %594 = vmatpush1.msra.mxu0 0.0
        %595 = vmatprep.subr.mxu0 0.0
        %596 = vmatpush1.msra.mxu0 0.0
        %597 = vmatprep.subr.mxu0 0.0
        %598 = vmatpush1.msra.mxu0 0.0
        %599 = vmatprep.subr.mxu0 0.0
        %600 = vmatpush1.msra.mxu0 0.0
        %601 = vmatprep.subr.mxu0 0.0
        %602 = vmatpush1.msra.mxu0 0.0
        %603 = vmatprep.subr.mxu0 0.0
        %604 = vmatpush1.msra.mxu0 0.0
        %605 = vmatprep.subr.mxu0 0.0
        %606 = vmatpush1.msra.mxu0 0.0
        %607 = vmatprep.subr.mxu0 %v239
        %608 = vmatpush1.msra.mxu0 %v238
        %609 = vmatprep.subr.mxu0 %v207
        %610 = vmatpush1.msra.mxu0 %v206
        %611 = vmatprep.subr.mxu0 0.0
        %612 = vmatpush2.msra.mxu0 0.0
        %613 = vmatprep.subr.mxu0 0.0
        %614 = vmatpush2.msra.mxu0 0.0
        %615 = vmatprep.subr.mxu0 0.0
        %616 = vmatpush2.msra.mxu0 0.0
        %617 = vmatprep.subr.mxu0 0.0
        %618 = vmatpush2.msra.mxu0 0.0
        %619 = vmatprep.subr.mxu0 0.0
        %620 = vmatpush2.msra.mxu0 0.0
        %621 = vmatprep.subr.mxu0 0.0
        %622 = vmatpush2.msra.mxu0 0.0
        %623 = vmatprep.subr.mxu0 0.0
        %624 = vmatpush2.msra.mxu0 0.0
        %625 = vmatprep.subr.mxu0 0.0
        %626 = vmatpush2.msra.mxu0 0.0
        %627 = vmatprep.subr.mxu0 0.0
        %628 = vmatpush2.msra.mxu0 0.0
        %629 = vmatprep.subr.mxu0 0.0
        %630 = vmatpush2.msra.mxu0 0.0
        %631 = vmatprep.subr.mxu0 0.0
        %632 = vmatpush2.msra.mxu0 0.0
        %633 = vmatprep.subr.mxu0 0.0
        %634 = vmatpush2.msra.mxu0 0.0
        %635 = vmatprep.subr.mxu0 0.0
        %636 = vmatpush2.msra.mxu0 0.0
        %637 = vmatprep.subr.mxu0 0.0
        %638 = vmatpush2.msra.mxu0 0.0
        %639 = vmatprep.subr.mxu0 0.0
        %640 = vmatpush2.msra.mxu0 0.0
        %641 = vmatprep.subr.mxu0 0.0
        %642 = vmatpush2.msra.mxu0 0.0
        %643 = vmatprep.mubr.f32.mxu0 0.0
        %644 = vmatmul.mubr.f32.gmra.mxu0 %v266
        %v645 = vpop.f32.mrf.mxu0
        %v646 = vadd.f32 0.0, %v645
        %v647 = vpop.f32.mrf.mxu0
        %v648 = vadd.f32 0.0, %v647
        %649 = vmatprep.mubr.f32.mxu0 0.0
        %650 = vmatmul.mubr.f32.gmra.mxu0 %v269
        %v651 = vpop.f32.mrf.mxu0
        %v652 = vadd.f32 0.0, %v651
        %v653 = vpop.f32.mrf.mxu0
        %v654 = vadd.f32 0.0, %v653
        %655 = vdwg.mxu0
        %656 = vmatprep.subr.mxu0 0.0
        %657 = vmatpush1.msra.mxu0 0.0
        %658 = vmatprep.subr.mxu0 0.0
        %659 = vmatpush1.msra.mxu0 0.0
        %660 = vmatprep.subr.mxu0 0.0
        %661 = vmatpush1.msra.mxu0 0.0
        %662 = vmatprep.subr.mxu0 0.0
        %663 = vmatpush1.msra.mxu0 0.0
        %664 = vmatprep.subr.mxu0 0.0
        %665 = vmatpush1.msra.mxu0 0.0
        %666 = vmatprep.subr.mxu0 0.0
        %667 = vmatpush1.msra.mxu0 0.0
        %668 = vmatprep.subr.mxu0 0.0
        %669 = vmatpush1.msra.mxu0 0.0
        %670 = vmatprep.subr.mxu0 0.0
        %671 = vmatpush1.msra.mxu0 0.0
        %672 = vmatprep.subr.mxu0 0.0
        %673 = vmatpush1.msra.mxu0 0.0
        %674 = vmatprep.subr.mxu0 0.0
        %675 = vmatpush1.msra.mxu0 0.0
        %676 = vmatprep.subr.mxu0 0.0
        %677 = vmatpush1.msra.mxu0 0.0
        %678 = vmatprep.subr.mxu0 0.0
        %679 = vmatpush1.msra.mxu0 0.0
        %680 = vmatprep.subr.mxu0 0.0
        %681 = vmatpush1.msra.mxu0 0.0
        %682 = vmatprep.subr.mxu0 0.0
        %683 = vmatpush1.msra.mxu0 0.0
        %684 = vmatprep.subr.mxu0 %v241
        %685 = vmatpush1.msra.mxu0 %v240
        %686 = vmatprep.subr.mxu0 %v209
        %687 = vmatpush1.msra.mxu0 %v208
        %688 = vmatprep.subr.mxu0 0.0
        %689 = vmatpush2.msra.mxu0 0.0
        %690 = vmatprep.subr.mxu0 0.0
        %691 = vmatpush2.msra.mxu0 0.0
        %692 = vmatprep.subr.mxu0 0.0
        %693 = vmatpush2.msra.mxu0 0.0
        %694 = vmatprep.subr.mxu0 0.0
        %695 = vmatpush2.msra.mxu0 0.0
        %696 = vmatprep.subr.mxu0 0.0
        %697 = vmatpush2.msra.mxu0 0.0
        %698 = vmatprep.subr.mxu0 0.0
        %699 = vmatpush2.msra.mxu0 0.0
        %700 = vmatprep.subr.mxu0 0.0
        %701 = vmatpush2.msra.mxu0 0.0
        %702 = vmatprep.subr.mxu0 0.0
        %703 = vmatpush2.msra.mxu0 0.0
        %704 = vmatprep.subr.mxu0 0.0
        %705 = vmatpush2.msra.mxu0 0.0
        %706 = vmatprep.subr.mxu0 0.0
        %707 = vmatpush2.msra.mxu0 0.0
        %708 = vmatprep.subr.mxu0 0.0
        %709 = vmatpush2.msra.mxu0 0.0
        %710 = vmatprep.subr.mxu0 0.0
        %711 = vmatpush2.msra.mxu0 0.0
        %712 = vmatprep.subr.mxu0 0.0
        %713 = vmatpush2.msra.mxu0 0.0
        %714 = vmatprep.subr.mxu0 0.0
        %715 = vmatpush2.msra.mxu0 0.0
        %716 = vmatprep.subr.mxu0 0.0
        %717 = vmatpush2.msra.mxu0 0.0
        %718 = vmatprep.subr.mxu0 0.0
        %719 = vmatpush2.msra.mxu0 0.0
        %720 = vmatprep.mubr.f32.mxu0 0.0
        %721 = vmatmul.mubr.f32.gmra.mxu0 %v266
        %v722 = vpop.f32.mrf.mxu0
        %v723 = vadd.f32 0.0, %v722
        %v724 = vpop.f32.mrf.mxu0
        %v725 = vadd.f32 0.0, %v724
        %726 = vmatprep.mubr.f32.mxu0 0.0
        %727 = vmatmul.mubr.f32.gmra.mxu0 %v269
        %v728 = vpop.f32.mrf.mxu0
        %v729 = vadd.f32 0.0, %v728
        %v730 = vpop.f32.mrf.mxu0
        %v731 = vadd.f32 0.0, %v730
        %732 = vdwg.mxu0
        %733 = vmatprep.subr.mxu0 0.0
        %734 = vmatpush1.msra.mxu0 0.0
        %735 = vmatprep.subr.mxu0 0.0
        %736 = vmatpush1.msra.mxu0 0.0
        %737 = vmatprep.subr.mxu0 0.0
        %738 = vmatpush1.msra.mxu0 0.0
        %739 = vmatprep.subr.mxu0 0.0
        %740 = vmatpush1.msra.mxu0 0.0
        %741 = vmatprep.subr.mxu0 0.0
        %742 = vmatpush1.msra.mxu0 0.0
        %743 = vmatprep.subr.mxu0 0.0
        %744 = vmatpush1.msra.mxu0 0.0
        %745 = vmatprep.subr.mxu0 0.0
        %746 = vmatpush1.msra.mxu0 0.0
        %747 = vmatprep.subr.mxu0 0.0
        %748 = vmatpush1.msra.mxu0 0.0
        %749 = vmatprep.subr.mxu0 0.0
        %750 = vmatpush1.msra.mxu0 0.0
        %751 = vmatprep.subr.mxu0 0.0
        %752 = vmatpush1.msra.mxu0 0.0
        %753 = vmatprep.subr.mxu0 0.0
        %754 = vmatpush1.msra.mxu0 0.0
        %755 = vmatprep.subr.mxu0 0.0
        %756 = vmatpush1.msra.mxu0 0.0
        %757 = vmatprep.subr.mxu0 0.0
        %758 = vmatpush1.msra.mxu0 0.0
        %759 = vmatprep.subr.mxu0 0.0
        %760 = vmatpush1.msra.mxu0 0.0
        %761 = vmatprep.subr.mxu0 %v243
        %762 = vmatpush1.msra.mxu0 %v242
        %763 = vmatprep.subr.mxu0 %v211
        %764 = vmatpush1.msra.mxu0 %v210
        %765 = vmatprep.subr.mxu0 0.0
        %766 = vmatpush2.msra.mxu0 0.0
        %767 = vmatprep.subr.mxu0 0.0
        %768 = vmatpush2.msra.mxu0 0.0
        %769 = vmatprep.subr.mxu0 0.0
        %770 = vmatpush2.msra.mxu0 0.0
        %771 = vmatprep.subr.mxu0 0.0
        %772 = vmatpush2.msra.mxu0 0.0
        %773 = vmatprep.subr.mxu0 0.0
        %774 = vmatpush2.msra.mxu0 0.0
        %775 = vmatprep.subr.mxu0 0.0
        %776 = vmatpush2.msra.mxu0 0.0
        %777 = vmatprep.subr.mxu0 0.0
        %778 = vmatpush2.msra.mxu0 0.0
        %779 = vmatprep.subr.mxu0 0.0
        %780 = vmatpush2.msra.mxu0 0.0
        %781 = vmatprep.subr.mxu0 0.0
        %782 = vmatpush2.msra.mxu0 0.0
        %783 = vmatprep.subr.mxu0 0.0
        %784 = vmatpush2.msra.mxu0 0.0
        %785 = vmatprep.subr.mxu0 0.0
        %786 = vmatpush2.msra.mxu0 0.0
        %787 = vmatprep.subr.mxu0 0.0
        %788 = vmatpush2.msra.mxu0 0.0
        %789 = vmatprep.subr.mxu0 0.0
        %790 = vmatpush2.msra.mxu0 0.0
        %791 = vmatprep.subr.mxu0 0.0
        %792 = vmatpush2.msra.mxu0 0.0
        %793 = vmatprep.subr.mxu0 0.0
        %794 = vmatpush2.msra.mxu0 0.0
        %795 = vmatprep.subr.mxu0 0.0
        %796 = vmatpush2.msra.mxu0 0.0
        %797 = vmatprep.mubr.f32.mxu0 0.0
        %798 = vmatmul.mubr.f32.gmra.mxu0 %v266
        %v799 = vpop.f32.mrf.mxu0
        %v800 = vadd.f32 0.0, %v799
        %v801 = vpop.f32.mrf.mxu0
        %v802 = vadd.f32 0.0, %v801
        %803 = vmatprep.mubr.f32.mxu0 0.0
        %804 = vmatmul.mubr.f32.gmra.mxu0 %v269
        %v805 = vpop.f32.mrf.mxu0
        %v806 = vadd.f32 0.0, %v805
        %v807 = vpop.f32.mrf.mxu0
        %v808 = vadd.f32 0.0, %v807
        %809 = vdwg.mxu0
        %810 = vmatprep.subr.mxu0 0.0
        %811 = vmatpush1.msra.mxu0 0.0
        %812 = vmatprep.subr.mxu0 0.0
        %813 = vmatpush1.msra.mxu0 0.0
        %814 = vmatprep.subr.mxu0 0.0
        %815 = vmatpush1.msra.mxu0 0.0
        %816 = vmatprep.subr.mxu0 0.0
        %817 = vmatpush1.msra.mxu0 0.0
        %818 = vmatprep.subr.mxu0 0.0
        %819 = vmatpush1.msra.mxu0 0.0
        %820 = vmatprep.subr.mxu0 0.0
        %821 = vmatpush1.msra.mxu0 0.0
        %822 = vmatprep.subr.mxu0 0.0
        %823 = vmatpush1.msra.mxu0 0.0
        %824 = vmatprep.subr.mxu0 0.0
        %825 = vmatpush1.msra.mxu0 0.0
        %826 = vmatprep.subr.mxu0 0.0
        %827 = vmatpush1.msra.mxu0 0.0
        %828 = vmatprep.subr.mxu0 0.0
        %829 = vmatpush1.msra.mxu0 0.0
        %830 = vmatprep.subr.mxu0 0.0
        %831 = vmatpush1.msra.mxu0 0.0
        %832 = vmatprep.subr.mxu0 0.0
        %833 = vmatpush1.msra.mxu0 0.0
        %834 = vmatprep.subr.mxu0 0.0
        %835 = vmatpush1.msra.mxu0 0.0
        %836 = vmatprep.subr.mxu0 0.0
        %837 = vmatpush1.msra.mxu0 0.0
        %838 = vmatprep.subr.mxu0 %v245
        %839 = vmatpush1.msra.mxu0 %v244
        %840 = vmatprep.subr.mxu0 %v213
        %841 = vmatpush1.msra.mxu0 %v212
        %842 = vmatprep.subr.mxu0 0.0
        %843 = vmatpush2.msra.mxu0 0.0
        %844 = vmatprep.subr.mxu0 0.0
        %845 = vmatpush2.msra.mxu0 0.0
        %846 = vmatprep.subr.mxu0 0.0
        %847 = vmatpush2.msra.mxu0 0.0
        %848 = vmatprep.subr.mxu0 0.0
        %849 = vmatpush2.msra.mxu0 0.0
        %850 = vmatprep.subr.mxu0 0.0
        %851 = vmatpush2.msra.mxu0 0.0
        %852 = vmatprep.subr.mxu0 0.0
        %853 = vmatpush2.msra.mxu0 0.0
        %854 = vmatprep.subr.mxu0 0.0
        %855 = vmatpush2.msra.mxu0 0.0
        %856 = vmatprep.subr.mxu0 0.0
        %857 = vmatpush2.msra.mxu0 0.0
        %858 = vmatprep.subr.mxu0 0.0
        %859 = vmatpush2.msra.mxu0 0.0
        %860 = vmatprep.subr.mxu0 0.0
        %861 = vmatpush2.msra.mxu0 0.0
        %862 = vmatprep.subr.mxu0 0.0
        %863 = vmatpush2.msra.mxu0 0.0
        %864 = vmatprep.subr.mxu0 0.0
        %865 = vmatpush2.msra.mxu0 0.0
        %866 = vmatprep.subr.mxu0 0.0
        %867 = vmatpush2.msra.mxu0 0.0
        %868 = vmatprep.subr.mxu0 0.0
        %869 = vmatpush2.msra.mxu0 0.0
        %870 = vmatprep.subr.mxu0 0.0
        %871 = vmatpush2.msra.mxu0 0.0
        %872 = vmatprep.subr.mxu0 0.0
        %873 = vmatpush2.msra.mxu0 0.0
        %874 = vmatprep.mubr.f32.mxu0 0.0
        %875 = vmatmul.mubr.f32.gmra.mxu0 %v266
        %v876 = vpop.f32.mrf.mxu0
        %v877 = vadd.f32 0.0, %v876
        %v878 = vpop.f32.mrf.mxu0
        %v879 = vadd.f32 0.0, %v878
        %880 = vmatprep.mubr.f32.mxu0 0.0
        %881 = vmatmul.mubr.f32.gmra.mxu0 %v269
        %v882 = vpop.f32.mrf.mxu0
        %v883 = vadd.f32 0.0, %v882
        %v884 = vpop.f32.mrf.mxu0
        %v885 = vadd.f32 0.0, %v884
        %886 = vdwg.mxu0
        %887 = vmatprep.subr.mxu0 0.0
        %888 = vmatpush1.msra.mxu0 0.0
        %889 = vmatprep.subr.mxu0 0.0
        %890 = vmatpush1.msra.mxu0 0.0
        %891 = vmatprep.subr.mxu0 0.0
        %892 = vmatpush1.msra.mxu0 0.0
        %893 = vmatprep.subr.mxu0 0.0
        %894 = vmatpush1.msra.mxu0 0.0
        %895 = vmatprep.subr.mxu0 0.0
        %896 = vmatpush1.msra.mxu0 0.0
        %897 = vmatprep.subr.mxu0 0.0
        %898 = vmatpush1.msra.mxu0 0.0
        %899 = vmatprep.subr.mxu0 0.0
        %900 = vmatpush1.msra.mxu0 0.0
        %901 = vmatprep.subr.mxu0 0.0
        %902 = vmatpush1.msra.mxu0 0.0
        %903 = vmatprep.subr.mxu0 0.0
        %904 = vmatpush1.msra.mxu0 0.0
        %905 = vmatprep.subr.mxu0 0.0
        %906 = vmatpush1.msra.mxu0 0.0
        %907 = vmatprep.subr.mxu0 0.0
        %908 = vmatpush1.msra.mxu0 0.0
        %909 = vmatprep.subr.mxu0 0.0
        %910 = vmatpush1.msra.mxu0 0.0
        %911 = vmatprep.subr.mxu0 0.0
        %912 = vmatpush1.msra.mxu0 0.0
        %913 = vmatprep.subr.mxu0 0.0
        %914 = vmatpush1.msra.mxu0 0.0
        %915 = vmatprep.subr.mxu0 %v247
        %916 = vmatpush1.msra.mxu0 %v246
        %917 = vmatprep.subr.mxu0 %v215
        %918 = vmatpush1.msra.mxu0 %v214
        %919 = vmatprep.subr.mxu0 0.0
        %920 = vmatpush2.msra.mxu0 0.0
        %921 = vmatprep.subr.mxu0 0.0
        %922 = vmatpush2.msra.mxu0 0.0
        %923 = vmatprep.subr.mxu0 0.0
        %924 = vmatpush2.msra.mxu0 0.0
        %925 = vmatprep.subr.mxu0 0.0
        %926 = vmatpush2.msra.mxu0 0.0
        %927 = vmatprep.subr.mxu0 0.0
        %928 = vmatpush2.msra.mxu0 0.0
        %929 = vmatprep.subr.mxu0 0.0
        %930 = vmatpush2.msra.mxu0 0.0
        %931 = vmatprep.subr.mxu0 0.0
        %932 = vmatpush2.msra.mxu0 0.0
        %933 = vmatprep.subr.mxu0 0.0
        %934 = vmatpush2.msra.mxu0 0.0
        %935 = vmatprep.subr.mxu0 0.0
        %936 = vmatpush2.msra.mxu0 0.0
        %937 = vmatprep.subr.mxu0 0.0
        %938 = vmatpush2.msra.mxu0 0.0
        %939 = vmatprep.subr.mxu0 0.0
        %940 = vmatpush2.msra.mxu0 0.0
        %941 = vmatprep.subr.mxu0 0.0
        %942 = vmatpush2.msra.mxu0 0.0
        %943 = vmatprep.subr.mxu0 0.0
        %944 = vmatpush2.msra.mxu0 0.0
        %945 = vmatprep.subr.mxu0 0.0
        %946 = vmatpush2.msra.mxu0 0.0
        %947 = vmatprep.subr.mxu0 0.0
        %948 = vmatpush2.msra.mxu0 0.0
        %949 = vmatprep.subr.mxu0 0.0
        %950 = vmatpush2.msra.mxu0 0.0
        %951 = vmatprep.mubr.f32.mxu0 0.0
        %952 = vmatmul.mubr.f32.gmra.mxu0 %v266
        %v953 = vpop.f32.mrf.mxu0
        %v954 = vadd.f32 0.0, %v953
        %v955 = vpop.f32.mrf.mxu0
        %v956 = vadd.f32 0.0, %v955
        %957 = vmatprep.mubr.f32.mxu0 0.0
        %958 = vmatmul.mubr.f32.gmra.mxu0 %v269
        %v959 = vpop.f32.mrf.mxu0
        %v960 = vadd.f32 0.0, %v959
        %v961 = vpop.f32.mrf.mxu0
        %v962 = vadd.f32 0.0, %v961
        %963 = vdwg.mxu0
        %964 = vmatprep.subr.mxu0 0.0
        %965 = vmatpush1.msra.mxu0 0.0
        %966 = vmatprep.subr.mxu0 0.0
        %967 = vmatpush1.msra.mxu0 0.0
        %968 = vmatprep.subr.mxu0 0.0
        %969 = vmatpush1.msra.mxu0 0.0
        %970 = vmatprep.subr.mxu0 0.0
        %971 = vmatpush1.msra.mxu0 0.0
        %972 = vmatprep.subr.mxu0 0.0
        %973 = vmatpush1.msra.mxu0 0.0
        %974 = vmatprep.subr.mxu0 0.0
        %975 = vmatpush1.msra.mxu0 0.0
        %976 = vmatprep.subr.mxu0 0.0
        %977 = vmatpush1.msra.mxu0 0.0
        %978 = vmatprep.subr.mxu0 0.0
        %979 = vmatpush1.msra.mxu0 0.0
        %980 = vmatprep.subr.mxu0 0.0
        %981 = vmatpush1.msra.mxu0 0.0
        %982 = vmatprep.subr.mxu0 0.0
        %983 = vmatpush1.msra.mxu0 0.0
        %984 = vmatprep.subr.mxu0 0.0
        %985 = vmatpush1.msra.mxu0 0.0
        %986 = vmatprep.subr.mxu0 0.0
        %987 = vmatpush1.msra.mxu0 0.0
        %988 = vmatprep.subr.mxu0 0.0
        %989 = vmatpush1.msra.mxu0 0.0
        %990 = vmatprep.subr.mxu0 0.0
        %991 = vmatpush1.msra.mxu0 0.0
        %992 = vmatprep.subr.mxu0 %v249
        %993 = vmatpush1.msra.mxu0 %v248
        %994 = vmatprep.subr.mxu0 %v217
        %995 = vmatpush1.msra.mxu0 %v216
        %996 = vmatprep.subr.mxu0 0.0
        %997 = vmatpush2.msra.mxu0 0.0
        %998 = vmatprep.subr.mxu0 0.0
        %999 = vmatpush2.msra.mxu0 0.0
        %1000 = vmatprep.subr.mxu0 0.0
        %1001 = vmatpush2.msra.mxu0 0.0
        %1002 = vmatprep.subr.mxu0 0.0
        %1003 = vmatpush2.msra.mxu0 0.0
        %1004 = vmatprep.subr.mxu0 0.0
        %1005 = vmatpush2.msra.mxu0 0.0
        %1006 = vmatprep.subr.mxu0 0.0
        %1007 = vmatpush2.msra.mxu0 0.0
        %1008 = vmatprep.subr.mxu0 0.0
        %1009 = vmatpush2.msra.mxu0 0.0
        %1010 = vmatprep.subr.mxu0 0.0
        %1011 = vmatpush2.msra.mxu0 0.0
        %1012 = vmatprep.subr.mxu0 0.0
        %1013 = vmatpush2.msra.mxu0 0.0
        %1014 = vmatprep.subr.mxu0 0.0
        %1015 = vmatpush2.msra.mxu0 0.0
        %1016 = vmatprep.subr.mxu0 0.0
        %1017 = vmatpush2.msra.mxu0 0.0
        %1018 = vmatprep.subr.mxu0 0.0
        %1019 = vmatpush2.msra.mxu0 0.0
        %1020 = vmatprep.subr.mxu0 0.0
        %1021 = vmatpush2.msra.mxu0 0.0
        %1022 = vmatprep.subr.mxu0 0.0
        %1023 = vmatpush2.msra.mxu0 0.0
        %1024 = vmatprep.subr.mxu0 0.0
        %1025 = vmatpush2.msra.mxu0 0.0
        %1026 = vmatprep.subr.mxu0 0.0
        %1027 = vmatpush2.msra.mxu0 0.0
        %1028 = vmatprep.mubr.f32.mxu0 0.0
        %1029 = vmatmul.mubr.f32.gmra.mxu0 %v266
        %v1030 = vpop.f32.mrf.mxu0
        %v1031 = vadd.f32 0.0, %v1030
        %v1032 = vpop.f32.mrf.mxu0
        %v1033 = vadd.f32 0.0, %v1032
        %1034 = vmatprep.mubr.f32.mxu0 0.0
        %1035 = vmatmul.mubr.f32.gmra.mxu0 %v269
        %v1036 = vpop.f32.mrf.mxu0
        %v1037 = vadd.f32 0.0, %v1036
        %v1038 = vpop.f32.mrf.mxu0
        %v1039 = vadd.f32 0.0, %v1038
        %1040 = vdwg.mxu0
        %1041 = vmatprep.subr.mxu0 0.0
        %1042 = vmatpush1.msra.mxu0 0.0
        %1043 = vmatprep.subr.mxu0 0.0
        %1044 = vmatpush1.msra.mxu0 0.0
        %1045 = vmatprep.subr.mxu0 0.0
        %1046 = vmatpush1.msra.mxu0 0.0
        %1047 = vmatprep.subr.mxu0 0.0
        %1048 = vmatpush1.msra.mxu0 0.0
        %1049 = vmatprep.subr.mxu0 0.0
        %1050 = vmatpush1.msra.mxu0 0.0
        %1051 = vmatprep.subr.mxu0 0.0
        %1052 = vmatpush1.msra.mxu0 0.0
        %1053 = vmatprep.subr.mxu0 0.0
        %1054 = vmatpush1.msra.mxu0 0.0
        %1055 = vmatprep.subr.mxu0 0.0
        %1056 = vmatpush1.msra.mxu0 0.0
        %1057 = vmatprep.subr.mxu0 0.0
        %1058 = vmatpush1.msra.mxu0 0.0
        %1059 = vmatprep.subr.mxu0 0.0
        %1060 = vmatpush1.msra.mxu0 0.0
        %1061 = vmatprep.subr.mxu0 0.0
        %1062 = vmatpush1.msra.mxu0 0.0
        %1063 = vmatprep.subr.mxu0 0.0
        %1064 = vmatpush1.msra.mxu0 0.0
        %1065 = vmatprep.subr.mxu0 0.0
        %1066 = vmatpush1.msra.mxu0 0.0
        %1067 = vmatprep.subr.mxu0 0.0
        %1068 = vmatpush1.msra.mxu0 0.0
        %1069 = vmatprep.subr.mxu0 %v251
        %1070 = vmatpush1.msra.mxu0 %v250
        %1071 = vmatprep.subr.mxu0 %v219
        %1072 = vmatpush1.msra.mxu0 %v218
        %1073 = vmatprep.subr.mxu0 0.0
        %1074 = vmatpush2.msra.mxu0 0.0
        %1075 = vmatprep.subr.mxu0 0.0
        %1076 = vmatpush2.msra.mxu0 0.0
        %1077 = vmatprep.subr.mxu0 0.0
        %1078 = vmatpush2.msra.mxu0 0.0
        %1079 = vmatprep.subr.mxu0 0.0
        %1080 = vmatpush2.msra.mxu0 0.0
        %1081 = vmatprep.subr.mxu0 0.0
        %1082 = vmatpush2.msra.mxu0 0.0
        %1083 = vmatprep.subr.mxu0 0.0
        %1084 = vmatpush2.msra.mxu0 0.0
        %1085 = vmatprep.subr.mxu0 0.0
        %1086 = vmatpush2.msra.mxu0 0.0
        %1087 = vmatprep.subr.mxu0 0.0
        %1088 = vmatpush2.msra.mxu0 0.0
        %1089 = vmatprep.subr.mxu0 0.0
        %1090 = vmatpush2.msra.mxu0 0.0
        %1091 = vmatprep.subr.mxu0 0.0
        %1092 = vmatpush2.msra.mxu0 0.0
        %1093 = vmatprep.subr.mxu0 0.0
        %1094 = vmatpush2.msra.mxu0 0.0
        %1095 = vmatprep.subr.mxu0 0.0
        %1096 = vmatpush2.msra.mxu0 0.0
        %1097 = vmatprep.subr.mxu0 0.0
        %1098 = vmatpush2.msra.mxu0 0.0
        %1099 = vmatprep.subr.mxu0 0.0
        %1100 = vmatpush2.msra.mxu0 0.0
        %1101 = vmatprep.subr.mxu0 0.0
        %1102 = vmatpush2.msra.mxu0 0.0
        %1103 = vmatprep.subr.mxu0 0.0
        %1104 = vmatpush2.msra.mxu0 0.0
        %1105 = vmatprep.mubr.f32.mxu0 0.0
        %1106 = vmatmul.mubr.f32.gmra.mxu0 %v266
        %v1107 = vpop.f32.mrf.mxu0
        %v1108 = vadd.f32 0.0, %v1107
        %v1109 = vpop.f32.mrf.mxu0
        %v1110 = vadd.f32 0.0, %v1109
        %1111 = vmatprep.mubr.f32.mxu0 0.0
        %1112 = vmatmul.mubr.f32.gmra.mxu0 %v269
        %v1113 = vpop.f32.mrf.mxu0
        %v1114 = vadd.f32 0.0, %v1113
        %v1115 = vpop.f32.mrf.mxu0
        %v1116 = vadd.f32 0.0, %v1115
        %1117 = vdwg.mxu0
        %1118 = vmatprep.subr.mxu0 0.0
        %1119 = vmatpush1.msra.mxu0 0.0
        %1120 = vmatprep.subr.mxu0 0.0
        %1121 = vmatpush1.msra.mxu0 0.0
        %1122 = vmatprep.subr.mxu0 0.0
        %1123 = vmatpush1.msra.mxu0 0.0
        %1124 = vmatprep.subr.mxu0 0.0
        %1125 = vmatpush1.msra.mxu0 0.0
        %1126 = vmatprep.subr.mxu0 0.0
        %1127 = vmatpush1.msra.mxu0 0.0
        %1128 = vmatprep.subr.mxu0 0.0
        %1129 = vmatpush1.msra.mxu0 0.0
        %1130 = vmatprep.subr.mxu0 0.0
        %1131 = vmatpush1.msra.mxu0 0.0
        %1132 = vmatprep.subr.mxu0 0.0
        %1133 = vmatpush1.msra.mxu0 0.0
        %1134 = vmatprep.subr.mxu0 0.0
        %1135 = vmatpush1.msra.mxu0 0.0
        %1136 = vmatprep.subr.mxu0 0.0
        %1137 = vmatpush1.msra.mxu0 0.0
        %1138 = vmatprep.subr.mxu0 0.0
        %1139 = vmatpush1.msra.mxu0 0.0
        %1140 = vmatprep.subr.mxu0 0.0
        %1141 = vmatpush1.msra.mxu0 0.0
        %1142 = vmatprep.subr.mxu0 0.0
        %1143 = vmatpush1.msra.mxu0 0.0
        %1144 = vmatprep.subr.mxu0 0.0
        %1145 = vmatpush1.msra.mxu0 0.0
        %1146 = vmatprep.subr.mxu0 %v253
        %1147 = vmatpush1.msra.mxu0 %v252
        %1148 = vmatprep.subr.mxu0 %v221
        %1149 = vmatpush1.msra.mxu0 %v220
        %1150 = vmatprep.subr.mxu0 0.0
        %1151 = vmatpush2.msra.mxu0 0.0
        %1152 = vmatprep.subr.mxu0 0.0
        %1153 = vmatpush2.msra.mxu0 0.0
        %1154 = vmatprep.subr.mxu0 0.0
        %1155 = vmatpush2.msra.mxu0 0.0
        %1156 = vmatprep.subr.mxu0 0.0
        %1157 = vmatpush2.msra.mxu0 0.0
        %1158 = vmatprep.subr.mxu0 0.0
        %1159 = vmatpush2.msra.mxu0 0.0
        %1160 = vmatprep.subr.mxu0 0.0
        %1161 = vmatpush2.msra.mxu0 0.0
        %1162 = vmatprep.subr.mxu0 0.0
        %1163 = vmatpush2.msra.mxu0 0.0
        %1164 = vmatprep.subr.mxu0 0.0
        %1165 = vmatpush2.msra.mxu0 0.0
        %1166 = vmatprep.subr.mxu0 0.0
        %1167 = vmatpush2.msra.mxu0 0.0
        %1168 = vmatprep.subr.mxu0 0.0
        %1169 = vmatpush2.msra.mxu0 0.0
        %1170 = vmatprep.subr.mxu0 0.0
        %1171 = vmatpush2.msra.mxu0 0.0
        %1172 = vmatprep.subr.mxu0 0.0
        %1173 = vmatpush2.msra.mxu0 0.0
        %1174 = vmatprep.subr.mxu0 0.0
        %1175 = vmatpush2.msra.mxu0 0.0
        %1176 = vmatprep.subr.mxu0 0.0
        %1177 = vmatpush2.msra.mxu0 0.0
        %1178 = vmatprep.subr.mxu0 0.0
        %1179 = vmatpush2.msra.mxu0 0.0
        %1180 = vmatprep.subr.mxu0 0.0
        %1181 = vmatpush2.msra.mxu0 0.0
        %1182 = vmatprep.mubr.f32.mxu0 0.0
        %1183 = vmatmul.mubr.f32.gmra.mxu0 %v266
        %v1184 = vpop.f32.mrf.mxu0
        %v1185 = vadd.f32 0.0, %v1184
        %v1186 = vpop.f32.mrf.mxu0
        %v1187 = vadd.f32 0.0, %v1186
        %1188 = vmatprep.mubr.f32.mxu0 0.0
        %1189 = vmatmul.mubr.f32.gmra.mxu0 %v269
        %v1190 = vpop.f32.mrf.mxu0
        %v1191 = vadd.f32 0.0, %v1190
        %v1192 = vpop.f32.mrf.mxu0
        %v1193 = vadd.f32 0.0, %v1192
        %1194 = vdwg.mxu0
        %1195 = vmatprep.subr.mxu0 0.0
        %1196 = vmatpush1.msra.mxu0 0.0
        %1197 = vmatprep.subr.mxu0 0.0
        %1198 = vmatpush1.msra.mxu0 0.0
        %1199 = vmatprep.subr.mxu0 0.0
        %1200 = vmatpush1.msra.mxu0 0.0
        %1201 = vmatprep.subr.mxu0 0.0
        %1202 = vmatpush1.msra.mxu0 0.0
        %1203 = vmatprep.subr.mxu0 0.0
        %1204 = vmatpush1.msra.mxu0 0.0
        %1205 = vmatprep.subr.mxu0 0.0
        %1206 = vmatpush1.msra.mxu0 0.0
        %1207 = vmatprep.subr.mxu0 0.0
        %1208 = vmatpush1.msra.mxu0 0.0
        %1209 = vmatprep.subr.mxu0 0.0
        %1210 = vmatpush1.msra.mxu0 0.0
        %1211 = vmatprep.subr.mxu0 0.0
        %1212 = vmatpush1.msra.mxu0 0.0
        %1213 = vmatprep.subr.mxu0 0.0
        %1214 = vmatpush1.msra.mxu0 0.0
        %1215 = vmatprep.subr.mxu0 0.0
        %1216 = vmatpush1.msra.mxu0 0.0
        %1217 = vmatprep.subr.mxu0 0.0
        %1218 = vmatpush1.msra.mxu0 0.0
        %1219 = vmatprep.subr.mxu0 0.0
        %1220 = vmatpush1.msra.mxu0 0.0
        %1221 = vmatprep.subr.mxu0 0.0
        %1222 = vmatpush1.msra.mxu0 0.0
        %1223 = vmatprep.subr.mxu0 %v255
        %1224 = vmatpush1.msra.mxu0 %v254
        %1225 = vmatprep.subr.mxu0 %v223
        %1226 = vmatpush1.msra.mxu0 %v222
        %1227 = vmatprep.subr.mxu0 0.0
        %1228 = vmatpush2.msra.mxu0 0.0
        %1229 = vmatprep.subr.mxu0 0.0
        %1230 = vmatpush2.msra.mxu0 0.0
        %1231 = vmatprep.subr.mxu0 0.0
        %1232 = vmatpush2.msra.mxu0 0.0
        %1233 = vmatprep.subr.mxu0 0.0
        %1234 = vmatpush2.msra.mxu0 0.0
        %1235 = vmatprep.subr.mxu0 0.0
        %1236 = vmatpush2.msra.mxu0 0.0
        %1237 = vmatprep.subr.mxu0 0.0
        %1238 = vmatpush2.msra.mxu0 0.0
        %1239 = vmatprep.subr.mxu0 0.0
        %1240 = vmatpush2.msra.mxu0 0.0
        %1241 = vmatprep.subr.mxu0 0.0
        %1242 = vmatpush2.msra.mxu0 0.0
        %1243 = vmatprep.subr.mxu0 0.0
        %1244 = vmatpush2.msra.mxu0 0.0
        %1245 = vmatprep.subr.mxu0 0.0
        %1246 = vmatpush2.msra.mxu0 0.0
        %1247 = vmatprep.subr.mxu0 0.0
        %1248 = vmatpush2.msra.mxu0 0.0
        %1249 = vmatprep.subr.mxu0 0.0
        %1250 = vmatpush2.msra.mxu0 0.0
        %1251 = vmatprep.subr.mxu0 0.0
        %1252 = vmatpush2.msra.mxu0 0.0
        %1253 = vmatprep.subr.mxu0 0.0
        %1254 = vmatpush2.msra.mxu0 0.0
        %1255 = vmatprep.subr.mxu0 0.0
        %1256 = vmatpush2.msra.mxu0 0.0
        %1257 = vmatprep.subr.mxu0 0.0
        %1258 = vmatpush2.msra.mxu0 0.0
        %1259 = vmatprep.mubr.f32.mxu0 0.0
        %1260 = vmatmul.mubr.f32.gmra.mxu0 %v266
        %v1261 = vpop.f32.mrf.mxu0
        %v1262 = vadd.f32 0.0, %v1261
        %v1263 = vpop.f32.mrf.mxu0
        %v1264 = vadd.f32 0.0, %v1263
        %1265 = vmatprep.mubr.f32.mxu0 0.0
        %1266 = vmatmul.mubr.f32.gmra.mxu0 %v269
        %v1267 = vpop.f32.mrf.mxu0
        %v1268 = vadd.f32 0.0, %v1267
        %v1269 = vpop.f32.mrf.mxu0
        %v1270 = vadd.f32 0.0, %v1269
        %1271 = vdwg.mxu0
        %1272 = vmatprep.subr.mxu0 0.0
        %1273 = vmatpush1.msra.mxu0 0.0
        %1274 = vmatprep.subr.mxu0 0.0
        %1275 = vmatpush1.msra.mxu0 0.0
        %1276 = vmatprep.subr.mxu0 0.0
        %1277 = vmatpush1.msra.mxu0 0.0
        %1278 = vmatprep.subr.mxu0 0.0
        %1279 = vmatpush1.msra.mxu0 0.0
        %1280 = vmatprep.subr.mxu0 0.0
        %1281 = vmatpush1.msra.mxu0 0.0
        %1282 = vmatprep.subr.mxu0 0.0
        %1283 = vmatpush1.msra.mxu0 0.0
        %1284 = vmatprep.subr.mxu0 0.0
        %1285 = vmatpush1.msra.mxu0 0.0
        %1286 = vmatprep.subr.mxu0 0.0
        %1287 = vmatpush1.msra.mxu0 0.0
        %1288 = vmatprep.subr.mxu0 0.0
        %1289 = vmatpush1.msra.mxu0 0.0
        %1290 = vmatprep.subr.mxu0 0.0
        %1291 = vmatpush1.msra.mxu0 0.0
        %1292 = vmatprep.subr.mxu0 0.0
        %1293 = vmatpush1.msra.mxu0 0.0
        %1294 = vmatprep.subr.mxu0 0.0
        %1295 = vmatpush1.msra.mxu0 0.0
        %1296 = vmatprep.subr.mxu0 0.0
        %1297 = vmatpush1.msra.mxu0 0.0
        %1298 = vmatprep.subr.mxu0 0.0
        %1299 = vmatpush1.msra.mxu0 0.0
        %1300 = vmatprep.subr.mxu0 %v257
        %1301 = vmatpush1.msra.mxu0 %v256
        %1302 = vmatprep.subr.mxu0 %v225
        %1303 = vmatpush1.msra.mxu0 %v224
        %1304 = vmatprep.subr.mxu0 0.0
        %1305 = vmatpush2.msra.mxu0 0.0
        %1306 = vmatprep.subr.mxu0 0.0
        %1307 = vmatpush2.msra.mxu0 0.0
        %1308 = vmatprep.subr.mxu0 0.0
        %1309 = vmatpush2.msra.mxu0 0.0
        %1310 = vmatprep.subr.mxu0 0.0
        %1311 = vmatpush2.msra.mxu0 0.0
        %1312 = vmatprep.subr.mxu0 0.0
        %1313 = vmatpush2.msra.mxu0 0.0
        %1314 = vmatprep.subr.mxu0 0.0
        %1315 = vmatpush2.msra.mxu0 0.0
        %1316 = vmatprep.subr.mxu0 0.0
        %1317 = vmatpush2.msra.mxu0 0.0
        %1318 = vmatprep.subr.mxu0 0.0
        %1319 = vmatpush2.msra.mxu0 0.0
        %1320 = vmatprep.subr.mxu0 0.0
        %1321 = vmatpush2.msra.mxu0 0.0
        %1322 = vmatprep.subr.mxu0 0.0
        %1323 = vmatpush2.msra.mxu0 0.0
        %1324 = vmatprep.subr.mxu0 0.0
        %1325 = vmatpush2.msra.mxu0 0.0
        %1326 = vmatprep.subr.mxu0 0.0
        %1327 = vmatpush2.msra.mxu0 0.0
        %1328 = vmatprep.subr.mxu0 0.0
        %1329 = vmatpush2.msra.mxu0 0.0
        %1330 = vmatprep.subr.mxu0 0.0
        %1331 = vmatpush2.msra.mxu0 0.0
        %1332 = vmatprep.subr.mxu0 0.0
        %1333 = vmatpush2.msra.mxu0 0.0
        %1334 = vmatprep.subr.mxu0 0.0
        %1335 = vmatpush2.msra.mxu0 0.0
        %1336 = vmatprep.mubr.f32.mxu0 0.0
        %1337 = vmatmul.mubr.f32.gmra.mxu0 %v266
        %v1338 = vpop.f32.mrf.mxu0
        %v1339 = vadd.f32 0.0, %v1338
        %v1340 = vpop.f32.mrf.mxu0
        %v1341 = vadd.f32 0.0, %v1340
        %1342 = vmatprep.mubr.f32.mxu0 0.0
        %1343 = vmatmul.mubr.f32.gmra.mxu0 %v269
        %v1344 = vpop.f32.mrf.mxu0
        %v1345 = vadd.f32 0.0, %v1344
        %v1346 = vpop.f32.mrf.mxu0
        %v1347 = vadd.f32 0.0, %v1346
        %1348 = vdwg.mxu0
        %1349 = vmatprep.subr.mxu0 0.0
        %1350 = vmatpush1.msra.mxu0 0.0
        %1351 = vmatprep.subr.mxu0 0.0
        %1352 = vmatpush1.msra.mxu0 0.0
        %1353 = vmatprep.subr.mxu0 0.0
        %1354 = vmatpush1.msra.mxu0 0.0
        %1355 = vmatprep.subr.mxu0 0.0
        %1356 = vmatpush1.msra.mxu0 0.0
        %1357 = vmatprep.subr.mxu0 0.0
        %1358 = vmatpush1.msra.mxu0 0.0
        %1359 = vmatprep.subr.mxu0 0.0
        %1360 = vmatpush1.msra.mxu0 0.0
        %1361 = vmatprep.subr.mxu0 0.0
        %1362 = vmatpush1.msra.mxu0 0.0
        %1363 = vmatprep.subr.mxu0 0.0
        %1364 = vmatpush1.msra.mxu0 0.0
        %1365 = vmatprep.subr.mxu0 0.0
        %1366 = vmatpush1.msra.mxu0 0.0
        %1367 = vmatprep.subr.mxu0 0.0
        %1368 = vmatpush1.msra.mxu0 0.0
        %1369 = vmatprep.subr.mxu0 0.0
        %1370 = vmatpush1.msra.mxu0 0.0
        %1371 = vmatprep.subr.mxu0 0.0
        %1372 = vmatpush1.msra.mxu0 0.0
        %1373 = vmatprep.subr.mxu0 0.0
        %1374 = vmatpush1.msra.mxu0 0.0
        %1375 = vmatprep.subr.mxu0 0.0
        %1376 = vmatpush1.msra.mxu0 0.0
        %1377 = vmatprep.subr.mxu0 %v259
        %1378 = vmatpush1.msra.mxu0 %v258
        %1379 = vmatprep.subr.mxu0 %v227
        %1380 = vmatpush1.msra.mxu0 %v226
        %1381 = vmatprep.subr.mxu0 0.0
        %1382 = vmatpush2.msra.mxu0 0.0
        %1383 = vmatprep.subr.mxu0 0.0
        %1384 = vmatpush2.msra.mxu0 0.0
        %1385 = vmatprep.subr.mxu0 0.0
        %1386 = vmatpush2.msra.mxu0 0.0
        %1387 = vmatprep.subr.mxu0 0.0
        %1388 = vmatpush2.msra.mxu0 0.0
        %1389 = vmatprep.subr.mxu0 0.0
        %1390 = vmatpush2.msra.mxu0 0.0
        %1391 = vmatprep.subr.mxu0 0.0
        %1392 = vmatpush2.msra.mxu0 0.0
        %1393 = vmatprep.subr.mxu0 0.0
        %1394 = vmatpush2.msra.mxu0 0.0
        %1395 = vmatprep.subr.mxu0 0.0
        %1396 = vmatpush2.msra.mxu0 0.0
        %1397 = vmatprep.subr.mxu0 0.0
        %1398 = vmatpush2.msra.mxu0 0.0
        %1399 = vmatprep.subr.mxu0 0.0
        %1400 = vmatpush2.msra.mxu0 0.0
        %1401 = vmatprep.subr.mxu0 0.0
        %1402 = vmatpush2.msra.mxu0 0.0
        %1403 = vmatprep.subr.mxu0 0.0
        %1404 = vmatpush2.msra.mxu0 0.0
        %1405 = vmatprep.subr.mxu0 0.0
        %1406 = vmatpush2.msra.mxu0 0.0
        %1407 = vmatprep.subr.mxu0 0.0
        %1408 = vmatpush2.msra.mxu0 0.0
        %1409 = vmatprep.subr.mxu0 0.0
        %1410 = vmatpush2.msra.mxu0 0.0
        %1411 = vmatprep.subr.mxu0 0.0
        %1412 = vmatpush2.msra.mxu0 0.0
        %1413 = vmatprep.mubr.f32.mxu0 0.0
        %1414 = vmatmul.mubr.f32.gmra.mxu0 %v266
        %v1415 = vpop.f32.mrf.mxu0
        %v1416 = vadd.f32 0.0, %v1415
        %v1417 = vpop.f32.mrf.mxu0
        %v1418 = vadd.f32 0.0, %v1417
        %1419 = vmatprep.mubr.f32.mxu0 0.0
        %1420 = vmatmul.mubr.f32.gmra.mxu0 %v269
        %v1421 = vpop.f32.mrf.mxu0
        %v1422 = vadd.f32 0.0, %v1421
        %v1423 = vpop.f32.mrf.mxu0
        %v1424 = vadd.f32 0.0, %v1423
        %1425 = vdwg.mxu0
        %1426 = vmatprep.subr.mxu0 0.0
        %1427 = vmatpush1.msra.mxu0 0.0
        %1428 = vmatprep.subr.mxu0 0.0
        %1429 = vmatpush1.msra.mxu0 0.0
        %1430 = vmatprep.subr.mxu0 0.0
        %1431 = vmatpush1.msra.mxu0 0.0
        %1432 = vmatprep.subr.mxu0 0.0
        %1433 = vmatpush1.msra.mxu0 0.0
        %1434 = vmatprep.subr.mxu0 0.0
        %1435 = vmatpush1.msra.mxu0 0.0
        %1436 = vmatprep.subr.mxu0 0.0
        %1437 = vmatpush1.msra.mxu0 0.0
        %1438 = vmatprep.subr.mxu0 0.0
        %1439 = vmatpush1.msra.mxu0 0.0
        %1440 = vmatprep.subr.mxu0 0.0
        %1441 = vmatpush1.msra.mxu0 0.0
        %1442 = vmatprep.subr.mxu0 0.0
        %1443 = vmatpush1.msra.mxu0 0.0
        %1444 = vmatprep.subr.mxu0 0.0
        %1445 = vmatpush1.msra.mxu0 0.0
        %1446 = vmatprep.subr.mxu0 0.0
        %1447 = vmatpush1.msra.mxu0 0.0
        %1448 = vmatprep.subr.mxu0 0.0
        %1449 = vmatpush1.msra.mxu0 0.0
        %1450 = vmatprep.subr.mxu0 0.0
        %1451 = vmatpush1.msra.mxu0 0.0
        %1452 = vmatprep.subr.mxu0 0.0
        %1453 = vmatpush1.msra.mxu0 0.0
        %1454 = vmatprep.subr.mxu0 %v261
        %1455 = vmatpush1.msra.mxu0 %v260
        %1456 = vmatprep.subr.mxu0 %v229
        %1457 = vmatpush1.msra.mxu0 %v228
        %1458 = vmatprep.subr.mxu0 0.0
        %1459 = vmatpush2.msra.mxu0 0.0
        %1460 = vmatprep.subr.mxu0 0.0
        %1461 = vmatpush2.msra.mxu0 0.0
        %1462 = vmatprep.subr.mxu0 0.0
        %1463 = vmatpush2.msra.mxu0 0.0
        %1464 = vmatprep.subr.mxu0 0.0
        %1465 = vmatpush2.msra.mxu0 0.0
        %1466 = vmatprep.subr.mxu0 0.0
        %1467 = vmatpush2.msra.mxu0 0.0
        %1468 = vmatprep.subr.mxu0 0.0
        %1469 = vmatpush2.msra.mxu0 0.0
        %1470 = vmatprep.subr.mxu0 0.0
        %1471 = vmatpush2.msra.mxu0 0.0
        %1472 = vmatprep.subr.mxu0 0.0
        %1473 = vmatpush2.msra.mxu0 0.0
        %1474 = vmatprep.subr.mxu0 0.0
        %1475 = vmatpush2.msra.mxu0 0.0
        %1476 = vmatprep.subr.mxu0 0.0
        %1477 = vmatpush2.msra.mxu0 0.0
        %1478 = vmatprep.subr.mxu0 0.0
        %1479 = vmatpush2.msra.mxu0 0.0
        %1480 = vmatprep.subr.mxu0 0.0
        %1481 = vmatpush2.msra.mxu0 0.0
        %1482 = vmatprep.subr.mxu0 0.0
        %1483 = vmatpush2.msra.mxu0 0.0
        %1484 = vmatprep.subr.mxu0 0.0
        %1485 = vmatpush2.msra.mxu0 0.0
        %1486 = vmatprep.subr.mxu0 0.0
        %1487 = vmatpush2.msra.mxu0 0.0
        %1488 = vmatprep.subr.mxu0 0.0
        %1489 = vmatpush2.msra.mxu0 0.0
        %1490 = vmatprep.mubr.f32.mxu0 0.0
        %1491 = vmatmul.mubr.f32.gmra.mxu0 %v266
        %v1492 = vpop.f32.mrf.mxu0
        %v1493 = vadd.f32 0.0, %v1492
        %v1494 = vpop.f32.mrf.mxu0
        %v1495 = vadd.f32 0.0, %v1494
        %1496 = vmatprep.mubr.f32.mxu0 0.0
        %1497 = vmatmul.mubr.f32.gmra.mxu0 %v269
        %v1498 = vpop.f32.mrf.mxu0
        %v1499 = vadd.f32 0.0, %v1498
        %v1500 = vpop.f32.mrf.mxu0
        %v1501 = vadd.f32 0.0, %v1500
        %1502 = vdwg.mxu0
        %v1503 = vmax.f32 %v338, %v646
        %v1504 = vmax.f32 %v340, %v648
        %v1505 = vmax.f32 %v415, %v723
        %v1506 = vmax.f32 %v417, %v725
        %v1507 = vmax.f32 %v492, %v800
        %v1508 = vmax.f32 %v494, %v802
        %v1509 = vmax.f32 %v569, %v877
        %v1510 = vmax.f32 %v571, %v879
        %v1511 = vmax.f32 %v344, %v652
        %v1512 = vmax.f32 %v346, %v654
        %v1513 = vmax.f32 %v421, %v729
        %v1514 = vmax.f32 %v423, %v731
        %v1515 = vmax.f32 %v498, %v806
        %v1516 = vmax.f32 %v500, %v808
        %v1517 = vmax.f32 %v575, %v883
        %v1518 = vmax.f32 %v577, %v885
        %v1519 = vmax.f32 %v954, %v1262
        %v1520 = vmax.f32 %v956, %v1264
        %v1521 = vmax.f32 %v1031, %v1339
        %v1522 = vmax.f32 %v1033, %v1341
        %v1523 = vmax.f32 %v1108, %v1416
        %v1524 = vmax.f32 %v1110, %v1418
        %v1525 = vmax.f32 %v1185, %v1493
        %v1526 = vmax.f32 %v1187, %v1495
        %v1527 = vmax.f32 %v960, %v1268
        %v1528 = vmax.f32 %v962, %v1270
        %v1529 = vmax.f32 %v1037, %v1345
        %v1530 = vmax.f32 %v1039, %v1347
        %v1531 = vmax.f32 %v1114, %v1422
        %v1532 = vmax.f32 %v1116, %v1424
        %v1533 = vmax.f32 %v1191, %v1499
        %v1534 = vmax.f32 %v1193, %v1501
        %v1535 = vmax.f32 %v1503, %v1519
        %v1536 = vmax.f32 %v1504, %v1520
        %v1537 = vmax.f32 %v1505, %v1521
        %v1538 = vmax.f32 %v1506, %v1522
        %v1539 = vmax.f32 %v1507, %v1523
        %v1540 = vmax.f32 %v1508, %v1524
        %v1541 = vmax.f32 %v1509, %v1525
        %v1542 = vmax.f32 %v1510, %v1526
        %v1543 = vmax.f32 %v1511, %v1527
        %v1544 = vmax.f32 %v1512, %v1528
        %v1545 = vmax.f32 %v1513, %v1529
        %v1546 = vmax.f32 %v1514, %v1530
        %v1547 = vmax.f32 %v1515, %v1531
        %v1548 = vmax.f32 %v1516, %v1532
        %v1549 = vmax.f32 %v1517, %v1533
        %v1550 = vmax.f32 %v1518, %v1534
        %v1551 = vld [vmem:[%s2] sm:$0xff]
        %v1552 = vld [vmem:[%s2 + $0x8] sm:$0xff]
        %1554 = vset.pattern.permute.xlu0 0
        %1555 = vperm.xlu0 %1554, %v1551
        %v1556 = vpop.permute.xlu0 %1555
        %1559 = vset.pattern.permute.xlu0 0
        %1560 = vperm.xlu0 %1559, %v1552
        %v1561 = vpop.permute.xlu0 %1560
        %v1563 = vadd.f32 %v1535, %v1556
        %v1564 = vadd.f32 %v1536, %v1556
        %v1565 = vadd.f32 %v1537, %v1556
        %v1566 = vadd.f32 %v1538, %v1556
        %v1567 = vadd.f32 %v1539, %v1556
        %v1568 = vadd.f32 %v1540, %v1556
        %v1569 = vadd.f32 %v1541, %v1556
        %v1570 = vadd.f32 %v1542, %v1556
        %v1571 = vadd.f32 %v1543, %v1561
        %v1572 = vadd.f32 %v1544, %v1561
        %v1573 = vadd.f32 %v1545, %v1561
        %v1574 = vadd.f32 %v1546, %v1561
        %v1575 = vadd.f32 %v1547, %v1561
        %v1576 = vadd.f32 %v1548, %v1561
        %v1577 = vadd.f32 %v1549, %v1561
        %v1578 = vadd.f32 %v1550, %v1561
        %v1579 = vmax.f32 %v1563, 0.0
        %v1580 = vmax.f32 %v1564, 0.0
        %v1581 = vmax.f32 %v1565, 0.0
        %v1582 = vmax.f32 %v1566, 0.0
        %v1583 = vmax.f32 %v1567, 0.0
        %v1584 = vmax.f32 %v1568, 0.0
        %v1585 = vmax.f32 %v1569, 0.0
        %v1586 = vmax.f32 %v1570, 0.0
        %v1587 = vmax.f32 %v1571, 0.0
        %v1588 = vmax.f32 %v1572, 0.0
        %v1589 = vmax.f32 %v1573, 0.0
        %v1590 = vmax.f32 %v1574, 0.0
        %v1591 = vmax.f32 %v1575, 0.0
        %v1592 = vmax.f32 %v1576, 0.0
        %v1593 = vmax.f32 %v1577, 0.0
        %v1594 = vmax.f32 %v1578, 0.0
        %v1595 = vpack.c.bf16 %v1587, %v1579
        %v1596 = vpack.c.bf16 %v1588, %v1580
        %v1597 = vpack.c.bf16 %v1589, %v1581
        %v1598 = vpack.c.bf16 %v1590, %v1582
        %v1599 = vpack.c.bf16 %v1591, %v1583
        %v1600 = vpack.c.bf16 %v1592, %v1584
        %v1601 = vpack.c.bf16 %v1593, %v1585
        %v1602 = vpack.c.bf16 %v1594, %v1586
        %v1611 = vunpack.c.l.b16 %v1595
        %v1612 = vunpack.c.l.b16 %v1596
        %v1613 = vunpack.c.l.b16 %v1597
        %v1614 = vunpack.c.l.b16 %v1598
        %v1615 = vunpack.c.l.b16 %v1599
        %v1616 = vunpack.c.l.b16 %v1600
        %v1617 = vunpack.c.l.b16 %v1601
        %v1618 = vunpack.c.l.b16 %v1602
        %v1619 = vunpack.c.h.b16 %v1595
        %v1620 = vunpack.c.h.b16 %v1596
        %v1621 = vunpack.c.h.b16 %v1597
        %v1622 = vunpack.c.h.b16 %v1598
        %v1623 = vunpack.c.h.b16 %v1599
        %v1624 = vunpack.c.h.b16 %v1600
        %v1625 = vunpack.c.h.b16 %v1601
        %v1626 = vunpack.c.h.b16 %v1602
        %v1627 = vpack.c.b16 %v1612, %v1611
        %v1628 = vpack.c.b16 %v1614, %v1613
        %v1629 = vpack.c.b16 %v1616, %v1615
        %v1630 = vpack.c.b16 %v1618, %v1617
        %v1631 = vpack.c.b16 %v1620, %v1619
        %v1632 = vpack.c.b16 %v1622, %v1621
        %v1633 = vpack.c.b16 %v1624, %v1623
        %v1634 = vpack.c.b16 %v1626, %v1625
        %1643 = vst [vmem:[%s159] sm:$0xff] %v1627
        %1644 = vst [vmem:[%s159 + $0x8] sm:$0xff] %v1628
        %1645 = vst [vmem:[%s159 + $0x10] sm:$0xff] %v1629
        %1646 = vst [vmem:[%s159 + $0x18] sm:$0xff] %v1630
        %1647 = vst [vmem:[%s159 + $0x20] sm:$0xff] %v1631
        %1648 = vst [vmem:[%s159 + $0x28] sm:$0xff] %v1632
        %1649 = vst [vmem:[%s159 + $0x30] sm:$0xff] %v1633
        %1650 = vst [vmem:[%s159 + $0x38] sm:$0xff] %v1634
        %s1651 = sand.u32 %s90, 1
        %s1652 = sand.u32 %s90, 1
        %s1653 = smul.addr %s1652, 64
        %s1654 = scalar_lea.vmem [#allocation2], %s1653
        // Predicated region
        $region33: #{scalo_cnn_forward.5} parent=31 // pred_check
          %p1655 = pneg %p100
        $region34: #{scalo_cnn_forward.5} parent=31 // pred_check_branch
          %1657 = sbr.rel (%p1655) target = $region36
        $region35: #{scalo_cnn_forward.5} parent=31 // pred_region
          %s1658 = smul.u32 8, %s14
          %s1659 = smul.addr %s1658, 4
          %s1660 = scalar_lea.vmem %s3, %s1659
          // Predicated region
          $region37: #{scalo_cnn_forward.5} parent=35 // pred_check
            _
          $region38: #{scalo_cnn_forward.5} parent=35 // pred_check_branch
            %1662 = sbr.rel (0) target = $region40
          $region39: #{scalo_cnn_forward.5} parent=35 // pred_region
            // Predicated region
            $region41: #{scalo_cnn_forward.5} parent=39 // pred_check
              _
            $region42: #{scalo_cnn_forward.5} parent=39 // pred_check_branch
              %1664 = sbr.rel (0) target = $region44
            $region43: #{scalo_cnn_forward.5} parent=39 // pred_region
              loop: start=0, step=1, limit=1
              $region45: #{scalo_cnn_forward.5} parent=43 // loop_pre_header
                _
              $region46: #{scalo_cnn_forward.5} parent=43 // loop_header
                %s1666 = sphi 0, %s1670
                %p1667 = scmp.ge.s32.totalorder %s1666, 1
                %s1671 = sphi %s1654, %s1654
                %s1672 = sphi %s1660, %s1660
              $region47: #{scalo_cnn_forward.5} parent=43 // loop_header_branch
                %1669 = sbr.rel (%p1667) target = $region51
              $region48: #{scalo_cnn_forward.5} parent=43 // loop_body
                %v1673 = vld [vmem:[%s1671] sm:$0xff]
                %1674 = vst [vmem:[%s1672] sm:$0xff] %v1673
                %v1675 = vld [vmem:[%s1671 + $0x8] sm:$0xff]
                %1676 = vst [vmem:[%s1672 + $0x8] sm:$0xff] %v1675
                %v1677 = vld [vmem:[%s1671 + $0x10] sm:$0xff]
                %1678 = vst [vmem:[%s1672 + $0x10] sm:$0xff] %v1677
                %v1679 = vld [vmem:[%s1671 + $0x18] sm:$0xff]
                %1680 = vst [vmem:[%s1672 + $0x18] sm:$0xff] %v1679
                %v1681 = vld [vmem:[%s1671 + $0x20] sm:$0xff]
                %1682 = vst [vmem:[%s1672 + $0x40] sm:$0xff] %v1681
                %v1683 = vld [vmem:[%s1671 + $0x28] sm:$0xff]
                %1684 = vst [vmem:[%s1672 + $0x48] sm:$0xff] %v1683
                %v1685 = vld [vmem:[%s1671 + $0x30] sm:$0xff]
                %1686 = vst [vmem:[%s1672 + $0x50] sm:$0xff] %v1685
                %v1687 = vld [vmem:[%s1671 + $0x38] sm:$0xff]
                %1688 = vst [vmem:[%s1672 + $0x58] sm:$0xff] %v1687
              $region49: #{scalo_cnn_forward.5} parent=43 // loop_footer
                %s1670 = sadd.s32 1, %s1666
              $region50: #{scalo_cnn_forward.5} parent=43 // loop_footer_branch
                %1665 = sbr.rel target = $region46
              $region51: #{scalo_cnn_forward.5} parent=43 // loop_exit
                _
            $region44: #{scalo_cnn_forward.5} parent=39 // pred_fallthru
              _
            // Predicated region
            $region52: #{scalo_cnn_forward.5} parent=39 // pred_check
              _
            $region53: #{scalo_cnn_forward.5} parent=39 // pred_check_branch
              %1690 = sbr.rel target = $region55
            $region54: #{scalo_cnn_forward.5} parent=39 // pred_region
              _
            $region55: #{scalo_cnn_forward.5} parent=39 // pred_fallthru
              _
          $region40: #{scalo_cnn_forward.5} parent=35 // pred_fallthru
            _
          %1691 = vnop
        $region36: #{scalo_cnn_forward.5} parent=31 // pred_fallthru
          _
      $region32: #{scalo_cnn_forward.5} parent=5 // pred_fallthru
        _
      %p1692 = scmp.le.s32.totalorder 2, %s9
      // Predicated region
      $region56: #{scalo_cnn_forward.5} parent=5 // pred_check
        %p1693 = pneg %p1692
      $region57: #{scalo_cnn_forward.5} parent=5 // pred_check_branch
        %1695 = sbr.rel (%p1693) target = $region59
      $region58: #{scalo_cnn_forward.5} parent=5 // pred_region
        %s1696 = ssub.s32 %s9, 2
        // Predicated region
        $region60: #{scalo_cnn_forward.5} parent=58 // pred_check
          %p1697 = pneg %p106
        $region61: #{scalo_cnn_forward.5} parent=58 // pred_check_branch
          %1699 = sbr.rel (%p1697) target = $region63
        $region62: #{scalo_cnn_forward.5} parent=58 // pred_region
          %s1700 = sand.u32 %s91, 1
          %s1701 = sand.u32 %s91, 1
          %s1702 = smul.addr %s1701, 64
          %s1703 = scalar_lea.vmem [#allocation2], %s1702
        $region63: #{scalo_cnn_forward.5} parent=58 // pred_fallthru
          _
      $region59: #{scalo_cnn_forward.5} parent=5 // pred_fallthru
        _
    $region6: #{scalo_cnn_forward.5} parent=1 // loop_footer
      %s13 = sadd.s32 1, %s9
    $region7: #{scalo_cnn_forward.5} parent=1 // loop_footer_branch
      %8 = sbr.rel target = $region3
    $region8: #{scalo_cnn_forward.5} parent=1 // loop_exit
      _

// kernel: scalo_cnn_forward.6
$region0: #{scalo_cnn_forward.6}
  #allocation0 [shape = 'u32[]', space=smem, size = 0x4, offset = 0x4, fixed_abs, tag = 'smem constant byte address 0x4 - core index']
  #allocation1 [shape = 'u32[144,128]{1,0:T(1,128)}', space=vmem, size = 0x12000, scoped, tag = 'internal scratch']
  %s0 = inlined_call_operand.vmem [shape: bf16[2,64,1024], index: 0, kind: input, shape index: {}]
  %s1 = inlined_call_operand.vmem [shape: f32[32,64], index: 1, kind: input, shape index: {}]
  %s2 = inlined_call_operand.vmem [shape: f32[32,1], index: 2, kind: input, shape index: {}]
  %s3 = inlined_call_operand.vmem [shape: bf16[32,512], index: 3, kind: output, shape index: {}]
  %s4 = sld [smem:[#allocation0]]
  $region79: #{scalo_cnn_forward.6} parent=0
    _
  %s6 = ssub.s32 1, %s4
  %s7 = scalar_select 0, %s6, %s4
  $region1: #{scalo_cnn_forward.6} parent=0
    #allocation2 [shape = 'u8[32768]{0}', space=vmem, size = 0x8000, scoped, tag = 'output window, operand 0']
    loop: start=0, step=1, limit=4
    $region2: #{scalo_cnn_forward.6} parent=1 // loop_pre_header
      _
    $region3: #{scalo_cnn_forward.6} parent=1 // loop_header
      %s9 = sphi 0, %s13
      %p10 = scmp.ge.s32.totalorder %s9, 4
      %s19 = sphi 0, %s21
      %s22 = sphi 0, %s19
      %s23 = sphi 0, %s22
      %s39 = sphi 0, %s23
      %s43 = sphi 0, %s43
      %s45 = sphi 0, %s43
      %s46 = sphi 0, %s45
      %s60 = sphi 0, %s46
      %s64 = sphi 0, %s64
      %s66 = sphi 0, %s64
      %s67 = sphi 0, %s66
      %s81 = sphi 0, %s67
      %s87 = sphi 0, %s89
      %s90 = sphi 0, %s87
      %s91 = sphi 0, %s90
      %s107 = sphi 0, %s91
    $region4: #{scalo_cnn_forward.6} parent=1 // loop_header_branch
      %12 = sbr.rel (%p10) target = $region8
    $region5: #{scalo_cnn_forward.6} parent=1 // loop_body
      %s14 = ssub.s32 %s9, 1
      %s15 = ssub.s32 %s9, 2
      %s16 = sadd.s32 %s9, 1
      %s17 = ssub.s32 %s9, %s16
      %p18 = scmp.eq.s32.totalorder %s17, 0
      %s20 = sadd.s32 %s19, 1
      %s21 = scalar_select %p18, %s19, %s20
      %p24 = pneg %p18
      %p25 = scmp.eq.s32.totalorder %s9, 1
      %p26 = por %p24, %p25
      %p27 = scmp.ne.s32.totalorder %s19, %s22
      %p28 = scmp.eq.s32.totalorder %s9, 0
      %p29 = por %p27, %p28
      %p30 = scmp.ne.s32.totalorder %s19, %s22
      %p31 = scmp.eq.s32.totalorder %s14, 1
      %p32 = por %p30, %p31
      %p33 = scmp.ne.s32.totalorder %s22, %s23
      %p34 = scmp.eq.s32.totalorder %s14, 0
      %p35 = por %p33, %p34
      %p36 = scmp.ne.s32.totalorder %s22, %s23
      %p37 = scmp.eq.s32.totalorder %s15, 1
      %p38 = por %p36, %p37
      %p40 = scmp.ne.s32.totalorder %s23, %s39
      %p41 = scmp.eq.s32.totalorder %s15, 0
      %p42 = por %p40, %p41
      %s44 = sadd.s32 %s43, 1
      %p47 = scmp.eq.s32.totalorder %s9, 1
      %p48 = scmp.ne.s32.totalorder %s43, %s45
      %p49 = scmp.eq.s32.totalorder %s9, 0
      %p50 = por %p48, %p49
      %p51 = scmp.ne.s32.totalorder %s43, %s45
      %p52 = scmp.eq.s32.totalorder %s14, 1
      %p53 = por %p51, %p52
      %p54 = scmp.ne.s32.totalorder %s45, %s46
      %p55 = scmp.eq.s32.totalorder %s14, 0
      %p56 = por %p54, %p55
      %p57 = scmp.ne.s32.totalorder %s45, %s46
      %p58 = scmp.eq.s32.totalorder %s15, 1
      %p59 = por %p57, %p58
      %p61 = scmp.ne.s32.totalorder %s46, %s60
      %p62 = scmp.eq.s32.totalorder %s15, 0
      %p63 = por %p61, %p62
      %s65 = sadd.s32 %s64, 1
      %p68 = scmp.eq.s32.totalorder %s9, 1
      %p69 = scmp.ne.s32.totalorder %s64, %s66
      %p70 = scmp.eq.s32.totalorder %s9, 0
      %p71 = por %p69, %p70
      %p72 = scmp.ne.s32.totalorder %s64, %s66
      %p73 = scmp.eq.s32.totalorder %s14, 1
      %p74 = por %p72, %p73
      %p75 = scmp.ne.s32.totalorder %s66, %s67
      %p76 = scmp.eq.s32.totalorder %s14, 0
      %p77 = por %p75, %p76
      %p78 = scmp.ne.s32.totalorder %s66, %s67
      %p79 = scmp.eq.s32.totalorder %s15, 1
      %p80 = por %p78, %p79
      %p82 = scmp.ne.s32.totalorder %s67, %s81
      %p83 = scmp.eq.s32.totalorder %s15, 0
      %p84 = por %p82, %p83
      %s85 = ssub.s32 %s9, %s16
      %p86 = scmp.eq.s32.totalorder %s85, 0
      %s88 = sadd.s32 %s87, 1
      %s89 = scalar_select %p86, %s87, %s88
      %p92 = pneg %p86
      %p93 = scmp.eq.s32.totalorder %s9, 1
      %p94 = por %p92, %p93
      %p95 = scmp.ne.s32.totalorder %s87, %s90
      %p96 = scmp.eq.s32.totalorder %s9, 0
      %p97 = por %p95, %p96
      %p98 = scmp.ne.s32.totalorder %s87, %s90
      %p99 = scmp.eq.s32.totalorder %s14, 1
      %p100 = por %p98, %p99
      %p101 = scmp.ne.s32.totalorder %s90, %s91
      %p102 = scmp.eq.s32.totalorder %s14, 0
      %p103 = por %p101, %p102
      %p104 = scmp.ne.s32.totalorder %s90, %s91
      %p105 = scmp.eq.s32.totalorder %s15, 1
      %p106 = por %p104, %p105
      %p108 = scmp.ne.s32.totalorder %s91, %s107
      %p109 = scmp.eq.s32.totalorder %s15, 0
      %p110 = por %p108, %p109
      %p111 = scmp.le.s32.totalorder 1, %s9
      %p112 = scmp.lt.s32.totalorder %s9, 3
      %p113 = pnand %p111, %p112
      %p114 = pneg %p113
      // Predicated region
      $region9: #{scalo_cnn_forward.6} parent=5 // pred_check
        _
      $region10: #{scalo_cnn_forward.6} parent=5 // pred_check_branch
        %116 = sbr.rel (%p113) target = $region12
      $region11: #{scalo_cnn_forward.6} parent=5 // pred_region
        %s117 = ssub.s32 %s9, 1
        // Predicated region
        $region13: #{scalo_cnn_forward.6} parent=11 // pred_check
          %p118 = pneg %p56
        $region14: #{scalo_cnn_forward.6} parent=11 // pred_check_branch
          %120 = sbr.rel (%p118) target = $region16
        $region15: #{scalo_cnn_forward.6} parent=11 // pred_region
          _
        $region16: #{scalo_cnn_forward.6} parent=11 // pred_fallthru
          _
        // Predicated region
        $region17: #{scalo_cnn_forward.6} parent=11 // pred_check
          %p121 = pneg %p77
        $region18: #{scalo_cnn_forward.6} parent=11 // pred_check_branch
          %123 = sbr.rel (%p121) target = $region20
        $region19: #{scalo_cnn_forward.6} parent=11 // pred_region
          _
        $region20: #{scalo_cnn_forward.6} parent=11 // pred_fallthru
          _
      $region12: #{scalo_cnn_forward.6} parent=5 // pred_fallthru
        _
      %p124 = scmp.lt.s32.totalorder %s9, 2
      // Predicated region
      $region21: #{scalo_cnn_forward.6} parent=5 // pred_check
        %p125 = pneg %p124
      $region22: #{scalo_cnn_forward.6} parent=5 // pred_check_branch
        %127 = sbr.rel (%p125) target = $region24
      $region23: #{scalo_cnn_forward.6} parent=5 // pred_region
        // Predicated region
        $region25: #{scalo_cnn_forward.6} parent=23 // pred_check
          %p128 = pneg %p29
        $region26: #{scalo_cnn_forward.6} parent=23 // pred_check_branch
          %130 = sbr.rel (%p128) target = $region28
        $region27: #{scalo_cnn_forward.6} parent=23 // pred_region
          %p131 = scmp.lt.s32.totalorder %s9, 1
          %s132 = scalar_select %p131, %s9, 1
          %s133 = smul.addr %s132, 64
          %s134 = smul.addr %s133, 4
          %s135 = scalar_lea.vmem %s0, %s134
        $region28: #{scalo_cnn_forward.6} parent=23 // pred_fallthru
          _
      $region24: #{scalo_cnn_forward.6} parent=5 // pred_fallthru
        _
      %p136 = scmp.le.s32.totalorder 1, %s9
      %p137 = scmp.lt.s32.totalorder %s9, 3
      %p138 = pnand %p136, %p137
      %p139 = pneg %p138
      // Predicated region
      $region29: #{scalo_cnn_forward.6} parent=5 // pred_check
        _
      $region30: #{scalo_cnn_forward.6} parent=5 // pred_check_branch
        %141 = sbr.rel (%p138) target = $region32
      $region31: #{scalo_cnn_forward.6} parent=5 // pred_region
        %s142 = ssub.s32 %s9, 1
        %p143 = scmp.lt.s32.totalorder %s14, 1
        %s144 = scalar_select %p143, %s14, 1
        %s145 = smul.addr %s144, 64
        %s146 = smul.addr %s145, 4
        %s147 = scalar_lea.vmem %s0, %s146
        %p148 = pneg %p35
        %p149 = pneg %p32
        %p150 = pneg %p56
        %p151 = pneg %p53
        %p152 = pneg %p77
        %p153 = pneg %p74
        %p154 = pneg %p103
        %p155 = pneg %p100
        %s156 = sand.u32 %s90, 1
        %s157 = sand.u32 %s90, 1
        %s158 = smul.addr %s157, 32
        %s159 = scalar_lea.vmem [#allocation2], %s158
        %p160 = scmp.lt.s32.totalorder %s14, 1
        %s161 = scalar_select %p160, %s14, 1
        %s162 = smul.addr %s161, 64
        %s163 = smul.addr %s162, 4
        %s164 = scalar_lea.vmem %s0, %s163
        %s165 = smul.u32 2, %s14
        %v166 = vld [vmem:[%s164] sm:$0xff]
        %v167 = vld [vmem:[%s164 + $0x8] sm:$0xff]
        %v168 = vld [vmem:[%s164 + $0x10] sm:$0xff]
        %v169 = vld [vmem:[%s164 + $0x18] sm:$0xff]
        %v170 = vld [vmem:[%s164 + $0x20] sm:$0xff]
        %v171 = vld [vmem:[%s164 + $0x28] sm:$0xff]
        %v172 = vld [vmem:[%s164 + $0x30] sm:$0xff]
        %v173 = vld [vmem:[%s164 + $0x38] sm:$0xff]
        %v174 = vld [vmem:[%s164 + $0x40] sm:$0xff]
        %v175 = vld [vmem:[%s164 + $0x48] sm:$0xff]
        %v176 = vld [vmem:[%s164 + $0x50] sm:$0xff]
        %v177 = vld [vmem:[%s164 + $0x58] sm:$0xff]
        %v178 = vld [vmem:[%s164 + $0x60] sm:$0xff]
        %v179 = vld [vmem:[%s164 + $0x68] sm:$0xff]
        %v180 = vld [vmem:[%s164 + $0x70] sm:$0xff]
        %v181 = vld [vmem:[%s164 + $0x78] sm:$0xff]
        %v182 = vld [vmem:[%s164 + $0x80] sm:$0xff]
        %v183 = vld [vmem:[%s164 + $0x88] sm:$0xff]
        %v184 = vld [vmem:[%s164 + $0x90] sm:$0xff]
        %v185 = vld [vmem:[%s164 + $0x98] sm:$0xff]
        %v186 = vld [vmem:[%s164 + $0xa0] sm:$0xff]
        %v187 = vld [vmem:[%s164 + $0xa8] sm:$0xff]
        %v188 = vld [vmem:[%s164 + $0xb0] sm:$0xff]
        %v189 = vld [vmem:[%s164 + $0xb8] sm:$0xff]
        %v190 = vld [vmem:[%s164 + $0xc0] sm:$0xff]
        %v191 = vld [vmem:[%s164 + $0xc8] sm:$0xff]
        %v192 = vld [vmem:[%s164 + $0xd0] sm:$0xff]
        %v193 = vld [vmem:[%s164 + $0xd8] sm:$0xff]
        %v194 = vld [vmem:[%s164 + $0xe0] sm:$0xff]
        %v195 = vld [vmem:[%s164 + $0xe8] sm:$0xff]
        %v196 = vld [vmem:[%s164 + $0xf0] sm:$0xff]
        %v197 = vld [vmem:[%s164 + $0xf8] sm:$0xff]
        %v198 = vunpack.c.l.bf16 %v166
        %v199 = vunpack.c.h.bf16 %v166
        %v200 = vunpack.c.l.bf16 %v167
        %v201 = vunpack.c.h.bf16 %v167
        %v202 = vunpack.c.l.bf16 %v168
        %v203 = vunpack.c.h.bf16 %v168
        %v204 = vunpack.c.l.bf16 %v169
        %v205 = vunpack.c.h.bf16 %v169
        %v206 = vunpack.c.l.bf16 %v170
        %v207 = vunpack.c.h.bf16 %v170
        %v208 = vunpack.c.l.bf16 %v171
        %v209 = vunpack.c.h.bf16 %v171
        %v210 = vunpack.c.l.bf16 %v172
        %v211 = vunpack.c.h.bf16 %v172
        %v212 = vunpack.c.l.bf16 %v173
        %v213 = vunpack.c.h.bf16 %v173
        %v214 = vunpack.c.l.bf16 %v174
        %v215 = vunpack.c.h.bf16 %v174
        %v216 = vunpack.c.l.bf16 %v175
        %v217 = vunpack.c.h.bf16 %v175
        %v218 = vunpack.c.l.bf16 %v176
        %v219 = vunpack.c.h.bf16 %v176
        %v220 = vunpack.c.l.bf16 %v177
        %v221 = vunpack.c.h.bf16 %v177
        %v222 = vunpack.c.l.bf16 %v178
        %v223 = vunpack.c.h.bf16 %v178
        %v224 = vunpack.c.l.bf16 %v179
        %v225 = vunpack.c.h.bf16 %v179
        %v226 = vunpack.c.l.bf16 %v180
        %v227 = vunpack.c.h.bf16 %v180
        %v228 = vunpack.c.l.bf16 %v181
        %v229 = vunpack.c.h.bf16 %v181
        %v230 = vunpack.c.l.bf16 %v182
        %v231 = vunpack.c.h.bf16 %v182
        %v232 = vunpack.c.l.bf16 %v183
        %v233 = vunpack.c.h.bf16 %v183
        %v234 = vunpack.c.l.bf16 %v184
        %v235 = vunpack.c.h.bf16 %v184
        %v236 = vunpack.c.l.bf16 %v185
        %v237 = vunpack.c.h.bf16 %v185
        %v238 = vunpack.c.l.bf16 %v186
        %v239 = vunpack.c.h.bf16 %v186
        %v240 = vunpack.c.l.bf16 %v187
        %v241 = vunpack.c.h.bf16 %v187
        %v242 = vunpack.c.l.bf16 %v188
        %v243 = vunpack.c.h.bf16 %v188
        %v244 = vunpack.c.l.bf16 %v189
        %v245 = vunpack.c.h.bf16 %v189
        %v246 = vunpack.c.l.bf16 %v190
        %v247 = vunpack.c.h.bf16 %v190
        %v248 = vunpack.c.l.bf16 %v191
        %v249 = vunpack.c.h.bf16 %v191
        %v250 = vunpack.c.l.bf16 %v192
        %v251 = vunpack.c.h.bf16 %v192
        %v252 = vunpack.c.l.bf16 %v193
        %v253 = vunpack.c.h.bf16 %v193
        %v254 = vunpack.c.l.bf16 %v194
        %v255 = vunpack.c.h.bf16 %v194
        %v256 = vunpack.c.l.bf16 %v195
        %v257 = vunpack.c.h.bf16 %v195
        %v258 = vunpack.c.l.bf16 %v196
        %v259 = vunpack.c.h.bf16 %v196
        %v260 = vunpack.c.l.bf16 %v197
        %v261 = vunpack.c.h.bf16 %v197
        %v262 = vld [vmem:[%s1] sm:$0xff]
        %v263 = vld [vmem:[%s1 + $0x8] sm:$0xff]
        %v264 = vld [vmem:[%s1 + $0x10] sm:$0xff]
        %v265 = vld [vmem:[%s1 + $0x18] sm:$0xff]
        %vm266 = vcmask 523264
        %v268 = vsel %vm266, %v262, 0
        %v271 = vsel %vm266, %v263, 0
        %v274 = vsel %vm266, %v264, 0
        %v277 = vsel %vm266, %v265, 0
        %279 = vmatprep.subr.mxu0 0.0
        %280 = vmatpush1.msra.mxu0 0.0
        %281 = vmatprep.subr.mxu0 0.0
        %282 = vmatpush1.msra.mxu0 0.0
        %283 = vmatprep.subr.mxu0 0.0
        %284 = vmatpush1.msra.mxu0 0.0
        %285 = vmatprep.subr.mxu0 0.0
        %286 = vmatpush1.msra.mxu0 0.0
        %287 = vmatprep.subr.mxu0 0.0
        %288 = vmatpush1.msra.mxu0 0.0
        %289 = vmatprep.subr.mxu0 0.0
        %290 = vmatpush1.msra.mxu0 0.0
        %291 = vmatprep.subr.mxu0 0.0
        %292 = vmatpush1.msra.mxu0 0.0
        %293 = vmatprep.subr.mxu0 0.0
        %294 = vmatpush1.msra.mxu0 0.0
        %295 = vmatprep.subr.mxu0 %v255
        %296 = vmatpush1.msra.mxu0 %v254
        %297 = vmatprep.subr.mxu0 %v247
        %298 = vmatpush1.msra.mxu0 %v246
        %299 = vmatprep.subr.mxu0 %v239
        %300 = vmatpush1.msra.mxu0 %v238
        %301 = vmatprep.subr.mxu0 %v231
        %302 = vmatpush1.msra.mxu0 %v230
        %303 = vmatprep.subr.mxu0 %v223
        %304 = vmatpush1.msra.mxu0 %v222
        %305 = vmatprep.subr.mxu0 %v215
        %306 = vmatpush1.msra.mxu0 %v214
        %307 = vmatprep.subr.mxu0 %v207
        %308 = vmatpush1.msra.mxu0 %v206
        %309 = vmatprep.subr.mxu0 %v199
        %310 = vmatpush1.msra.mxu0 %v198
        %311 = vmatprep.subr.mxu0 0.0
        %312 = vmatpush2.msra.mxu0 0.0
        %313 = vmatprep.subr.mxu0 0.0
        %314 = vmatpush2.msra.mxu0 0.0
        %315 = vmatprep.subr.mxu0 0.0
        %316 = vmatpush2.msra.mxu0 0.0
        %317 = vmatprep.subr.mxu0 0.0
        %318 = vmatpush2.msra.mxu0 0.0
        %319 = vmatprep.subr.mxu0 0.0
        %320 = vmatpush2.msra.mxu0 0.0
        %321 = vmatprep.subr.mxu0 0.0
        %322 = vmatpush2.msra.mxu0 0.0
        %323 = vmatprep.subr.mxu0 0.0
        %324 = vmatpush2.msra.mxu0 0.0
        %325 = vmatprep.subr.mxu0 0.0
        %326 = vmatpush2.msra.mxu0 0.0
        %327 = vmatprep.subr.mxu0 0.0
        %328 = vmatpush2.msra.mxu0 0.0
        %329 = vmatprep.subr.mxu0 0.0
        %330 = vmatpush2.msra.mxu0 0.0
        %331 = vmatprep.subr.mxu0 0.0
        %332 = vmatpush2.msra.mxu0 0.0
        %333 = vmatprep.subr.mxu0 0.0
        %334 = vmatpush2.msra.mxu0 0.0
        %335 = vmatprep.subr.mxu0 0.0
        %336 = vmatpush2.msra.mxu0 0.0
        %337 = vmatprep.subr.mxu0 0.0
        %338 = vmatpush2.msra.mxu0 0.0
        %339 = vmatprep.subr.mxu0 0.0
        %340 = vmatpush2.msra.mxu0 0.0
        %341 = vmatprep.subr.mxu0 0.0
        %342 = vmatpush2.msra.mxu0 0.0
        %343 = vmatprep.mubr.f32.mxu0 0.0
        %344 = vmatmul.mubr.f32.gmra.mxu0 %v268
        %v345 = vpop.f32.mrf.mxu0
        %v346 = vadd.f32 0.0, %v345
        %v347 = vpop.f32.mrf.mxu0
        %v348 = vadd.f32 0.0, %v347
        %349 = vmatprep.mubr.f32.mxu0 0.0
        %350 = vmatmul.mubr.f32.gmra.mxu0 %v271
        %v351 = vpop.f32.mrf.mxu0
        %v352 = vadd.f32 0.0, %v351
        %v353 = vpop.f32.mrf.mxu0
        %v354 = vadd.f32 0.0, %v353
        %355 = vmatprep.mubr.f32.mxu0 0.0
        %356 = vmatmul.mubr.f32.gmra.mxu0 %v274
        %v357 = vpop.f32.mrf.mxu0
        %v358 = vadd.f32 0.0, %v357
        %v359 = vpop.f32.mrf.mxu0
        %v360 = vadd.f32 0.0, %v359
        %361 = vmatprep.mubr.f32.mxu0 0.0
        %362 = vmatmul.mubr.f32.gmra.mxu0 %v277
        %v363 = vpop.f32.mrf.mxu0
        %v364 = vadd.f32 0.0, %v363
        %v365 = vpop.f32.mrf.mxu0
        %v366 = vadd.f32 0.0, %v365
        %367 = vdwg.mxu0
        %368 = vmatprep.subr.mxu0 0.0
        %369 = vmatpush1.msra.mxu0 0.0
        %370 = vmatprep.subr.mxu0 0.0
        %371 = vmatpush1.msra.mxu0 0.0
        %372 = vmatprep.subr.mxu0 0.0
        %373 = vmatpush1.msra.mxu0 0.0
        %374 = vmatprep.subr.mxu0 0.0
        %375 = vmatpush1.msra.mxu0 0.0
        %376 = vmatprep.subr.mxu0 0.0
        %377 = vmatpush1.msra.mxu0 0.0
        %378 = vmatprep.subr.mxu0 0.0
        %379 = vmatpush1.msra.mxu0 0.0
        %380 = vmatprep.subr.mxu0 0.0
        %381 = vmatpush1.msra.mxu0 0.0
        %382 = vmatprep.subr.mxu0 0.0
        %383 = vmatpush1.msra.mxu0 0.0
        %384 = vmatprep.subr.mxu0 %v257
        %385 = vmatpush1.msra.mxu0 %v256
        %386 = vmatprep.subr.mxu0 %v249
        %387 = vmatpush1.msra.mxu0 %v248
        %388 = vmatprep.subr.mxu0 %v241
        %389 = vmatpush1.msra.mxu0 %v240
        %390 = vmatprep.subr.mxu0 %v233
        %391 = vmatpush1.msra.mxu0 %v232
        %392 = vmatprep.subr.mxu0 %v225
        %393 = vmatpush1.msra.mxu0 %v224
        %394 = vmatprep.subr.mxu0 %v217
        %395 = vmatpush1.msra.mxu0 %v216
        %396 = vmatprep.subr.mxu0 %v209
        %397 = vmatpush1.msra.mxu0 %v208
        %398 = vmatprep.subr.mxu0 %v201
        %399 = vmatpush1.msra.mxu0 %v200
        %400 = vmatprep.subr.mxu0 0.0
        %401 = vmatpush2.msra.mxu0 0.0
        %402 = vmatprep.subr.mxu0 0.0
        %403 = vmatpush2.msra.mxu0 0.0
        %404 = vmatprep.subr.mxu0 0.0
        %405 = vmatpush2.msra.mxu0 0.0
        %406 = vmatprep.subr.mxu0 0.0
        %407 = vmatpush2.msra.mxu0 0.0
        %408 = vmatprep.subr.mxu0 0.0
        %409 = vmatpush2.msra.mxu0 0.0
        %410 = vmatprep.subr.mxu0 0.0
        %411 = vmatpush2.msra.mxu0 0.0
        %412 = vmatprep.subr.mxu0 0.0
        %413 = vmatpush2.msra.mxu0 0.0
        %414 = vmatprep.subr.mxu0 0.0
        %415 = vmatpush2.msra.mxu0 0.0
        %416 = vmatprep.subr.mxu0 0.0
        %417 = vmatpush2.msra.mxu0 0.0
        %418 = vmatprep.subr.mxu0 0.0
        %419 = vmatpush2.msra.mxu0 0.0
        %420 = vmatprep.subr.mxu0 0.0
        %421 = vmatpush2.msra.mxu0 0.0
        %422 = vmatprep.subr.mxu0 0.0
        %423 = vmatpush2.msra.mxu0 0.0
        %424 = vmatprep.subr.mxu0 0.0
        %425 = vmatpush2.msra.mxu0 0.0
        %426 = vmatprep.subr.mxu0 0.0
        %427 = vmatpush2.msra.mxu0 0.0
        %428 = vmatprep.subr.mxu0 0.0
        %429 = vmatpush2.msra.mxu0 0.0
        %430 = vmatprep.subr.mxu0 0.0
        %431 = vmatpush2.msra.mxu0 0.0
        %432 = vmatprep.mubr.f32.mxu0 0.0
        %433 = vmatmul.mubr.f32.gmra.mxu0 %v268
        %v434 = vpop.f32.mrf.mxu0
        %v435 = vadd.f32 0.0, %v434
        %v436 = vpop.f32.mrf.mxu0
        %v437 = vadd.f32 0.0, %v436
        %438 = vmatprep.mubr.f32.mxu0 0.0
        %439 = vmatmul.mubr.f32.gmra.mxu0 %v271
        %v440 = vpop.f32.mrf.mxu0
        %v441 = vadd.f32 0.0, %v440
        %v442 = vpop.f32.mrf.mxu0
        %v443 = vadd.f32 0.0, %v442
        %444 = vmatprep.mubr.f32.mxu0 0.0
        %445 = vmatmul.mubr.f32.gmra.mxu0 %v274
        %v446 = vpop.f32.mrf.mxu0
        %v447 = vadd.f32 0.0, %v446
        %v448 = vpop.f32.mrf.mxu0
        %v449 = vadd.f32 0.0, %v448
        %450 = vmatprep.mubr.f32.mxu0 0.0
        %451 = vmatmul.mubr.f32.gmra.mxu0 %v277
        %v452 = vpop.f32.mrf.mxu0
        %v453 = vadd.f32 0.0, %v452
        %v454 = vpop.f32.mrf.mxu0
        %v455 = vadd.f32 0.0, %v454
        %456 = vdwg.mxu0
        %457 = vmatprep.subr.mxu0 0.0
        %458 = vmatpush1.msra.mxu0 0.0
        %459 = vmatprep.subr.mxu0 0.0
        %460 = vmatpush1.msra.mxu0 0.0
        %461 = vmatprep.subr.mxu0 0.0
        %462 = vmatpush1.msra.mxu0 0.0
        %463 = vmatprep.subr.mxu0 0.0
        %464 = vmatpush1.msra.mxu0 0.0
        %465 = vmatprep.subr.mxu0 0.0
        %466 = vmatpush1.msra.mxu0 0.0
        %467 = vmatprep.subr.mxu0 0.0
        %468 = vmatpush1.msra.mxu0 0.0
        %469 = vmatprep.subr.mxu0 0.0
        %470 = vmatpush1.msra.mxu0 0.0
        %471 = vmatprep.subr.mxu0 0.0
        %472 = vmatpush1.msra.mxu0 0.0
        %473 = vmatprep.subr.mxu0 %v259
        %474 = vmatpush1.msra.mxu0 %v258
        %475 = vmatprep.subr.mxu0 %v251
        %476 = vmatpush1.msra.mxu0 %v250
        %477 = vmatprep.subr.mxu0 %v243
        %478 = vmatpush1.msra.mxu0 %v242
        %479 = vmatprep.subr.mxu0 %v235
        %480 = vmatpush1.msra.mxu0 %v234
        %481 = vmatprep.subr.mxu0 %v227
        %482 = vmatpush1.msra.mxu0 %v226
        %483 = vmatprep.subr.mxu0 %v219
        %484 = vmatpush1.msra.mxu0 %v218
        %485 = vmatprep.subr.mxu0 %v211
        %486 = vmatpush1.msra.mxu0 %v210
        %487 = vmatprep.subr.mxu0 %v203
        %488 = vmatpush1.msra.mxu0 %v202
        %489 = vmatprep.subr.mxu0 0.0
        %490 = vmatpush2.msra.mxu0 0.0
        %491 = vmatprep.subr.mxu0 0.0
        %492 = vmatpush2.msra.mxu0 0.0
        %493 = vmatprep.subr.mxu0 0.0
        %494 = vmatpush2.msra.mxu0 0.0
        %495 = vmatprep.subr.mxu0 0.0
        %496 = vmatpush2.msra.mxu0 0.0
        %497 = vmatprep.subr.mxu0 0.0
        %498 = vmatpush2.msra.mxu0 0.0
        %499 = vmatprep.subr.mxu0 0.0
        %500 = vmatpush2.msra.mxu0 0.0
        %501 = vmatprep.subr.mxu0 0.0
        %502 = vmatpush2.msra.mxu0 0.0
        %503 = vmatprep.subr.mxu0 0.0
        %504 = vmatpush2.msra.mxu0 0.0
        %505 = vmatprep.subr.mxu0 0.0
        %506 = vmatpush2.msra.mxu0 0.0
        %507 = vmatprep.subr.mxu0 0.0
        %508 = vmatpush2.msra.mxu0 0.0
        %509 = vmatprep.subr.mxu0 0.0
        %510 = vmatpush2.msra.mxu0 0.0
        %511 = vmatprep.subr.mxu0 0.0
        %512 = vmatpush2.msra.mxu0 0.0
        %513 = vmatprep.subr.mxu0 0.0
        %514 = vmatpush2.msra.mxu0 0.0
        %515 = vmatprep.subr.mxu0 0.0
        %516 = vmatpush2.msra.mxu0 0.0
        %517 = vmatprep.subr.mxu0 0.0
        %518 = vmatpush2.msra.mxu0 0.0
        %519 = vmatprep.subr.mxu0 0.0
        %520 = vmatpush2.msra.mxu0 0.0
        %521 = vmatprep.mubr.f32.mxu0 0.0
        %522 = vmatmul.mubr.f32.gmra.mxu0 %v268
        %v523 = vpop.f32.mrf.mxu0
        %v524 = vadd.f32 0.0, %v523
        %v525 = vpop.f32.mrf.mxu0
        %v526 = vadd.f32 0.0, %v525
        %527 = vmatprep.mubr.f32.mxu0 0.0
        %528 = vmatmul.mubr.f32.gmra.mxu0 %v271
        %v529 = vpop.f32.mrf.mxu0
        %v530 = vadd.f32 0.0, %v529
        %v531 = vpop.f32.mrf.mxu0
        %v532 = vadd.f32 0.0, %v531
        %533 = vmatprep.mubr.f32.mxu0 0.0
        %534 = vmatmul.mubr.f32.gmra.mxu0 %v274
        %v535 = vpop.f32.mrf.mxu0
        %v536 = vadd.f32 0.0, %v535
        %v537 = vpop.f32.mrf.mxu0
        %v538 = vadd.f32 0.0, %v537
        %539 = vmatprep.mubr.f32.mxu0 0.0
        %540 = vmatmul.mubr.f32.gmra.mxu0 %v277
        %v541 = vpop.f32.mrf.mxu0
        %v542 = vadd.f32 0.0, %v541
        %v543 = vpop.f32.mrf.mxu0
        %v544 = vadd.f32 0.0, %v543
        %545 = vdwg.mxu0
        %546 = vmatprep.subr.mxu0 0.0
        %547 = vmatpush1.msra.mxu0 0.0
        %548 = vmatprep.subr.mxu0 0.0
        %549 = vmatpush1.msra.mxu0 0.0
        %550 = vmatprep.subr.mxu0 0.0
        %551 = vmatpush1.msra.mxu0 0.0
        %552 = vmatprep.subr.mxu0 0.0
        %553 = vmatpush1.msra.mxu0 0.0
        %554 = vmatprep.subr.mxu0 0.0
        %555 = vmatpush1.msra.mxu0 0.0
        %556 = vmatprep.subr.mxu0 0.0
        %557 = vmatpush1.msra.mxu0 0.0
        %558 = vmatprep.subr.mxu0 0.0
        %559 = vmatpush1.msra.mxu0 0.0
        %560 = vmatprep.subr.mxu0 0.0
        %561 = vmatpush1.msra.mxu0 0.0
        %562 = vmatprep.subr.mxu0 %v261
        %563 = vmatpush1.msra.mxu0 %v260
        %564 = vmatprep.subr.mxu0 %v253
        %565 = vmatpush1.msra.mxu0 %v252
        %566 = vmatprep.subr.mxu0 %v245
        %567 = vmatpush1.msra.mxu0 %v244
        %568 = vmatprep.subr.mxu0 %v237
        %569 = vmatpush1.msra.mxu0 %v236
        %570 = vmatprep.subr.mxu0 %v229
        %571 = vmatpush1.msra.mxu0 %v228
        %572 = vmatprep.subr.mxu0 %v221
        %573 = vmatpush1.msra.mxu0 %v220
        %574 = vmatprep.subr.mxu0 %v213
        %575 = vmatpush1.msra.mxu0 %v212
        %576 = vmatprep.subr.mxu0 %v205
        %577 = vmatpush1.msra.mxu0 %v204
        %578 = vmatprep.subr.mxu0 0.0
        %579 = vmatpush2.msra.mxu0 0.0
        %580 = vmatprep.subr.mxu0 0.0
        %581 = vmatpush2.msra.mxu0 0.0
        %582 = vmatprep.subr.mxu0 0.0
        %583 = vmatpush2.msra.mxu0 0.0
        %584 = vmatprep.subr.mxu0 0.0
        %585 = vmatpush2.msra.mxu0 0.0
        %586 = vmatprep.subr.mxu0 0.0
        %587 = vmatpush2.msra.mxu0 0.0
        %588 = vmatprep.subr.mxu0 0.0
        %589 = vmatpush2.msra.mxu0 0.0
        %590 = vmatprep.subr.mxu0 0.0
        %591 = vmatpush2.msra.mxu0 0.0
        %592 = vmatprep.subr.mxu0 0.0
        %593 = vmatpush2.msra.mxu0 0.0
        %594 = vmatprep.subr.mxu0 0.0
        %595 = vmatpush2.msra.mxu0 0.0
        %596 = vmatprep.subr.mxu0 0.0
        %597 = vmatpush2.msra.mxu0 0.0
        %598 = vmatprep.subr.mxu0 0.0
        %599 = vmatpush2.msra.mxu0 0.0
        %600 = vmatprep.subr.mxu0 0.0
        %601 = vmatpush2.msra.mxu0 0.0
        %602 = vmatprep.subr.mxu0 0.0
        %603 = vmatpush2.msra.mxu0 0.0
        %604 = vmatprep.subr.mxu0 0.0
        %605 = vmatpush2.msra.mxu0 0.0
        %606 = vmatprep.subr.mxu0 0.0
        %607 = vmatpush2.msra.mxu0 0.0
        %608 = vmatprep.subr.mxu0 0.0
        %609 = vmatpush2.msra.mxu0 0.0
        %610 = vmatprep.mubr.f32.mxu0 0.0
        %611 = vmatmul.mubr.f32.gmra.mxu0 %v268
        %v612 = vpop.f32.mrf.mxu0
        %v613 = vadd.f32 0.0, %v612
        %v614 = vpop.f32.mrf.mxu0
        %v615 = vadd.f32 0.0, %v614
        %616 = vmatprep.mubr.f32.mxu0 0.0
        %617 = vmatmul.mubr.f32.gmra.mxu0 %v271
        %v618 = vpop.f32.mrf.mxu0
        %v619 = vadd.f32 0.0, %v618
        %v620 = vpop.f32.mrf.mxu0
        %v621 = vadd.f32 0.0, %v620
        %622 = vmatprep.mubr.f32.mxu0 0.0
        %623 = vmatmul.mubr.f32.gmra.mxu0 %v274
        %v624 = vpop.f32.mrf.mxu0
        %v625 = vadd.f32 0.0, %v624
        %v626 = vpop.f32.mrf.mxu0
        %v627 = vadd.f32 0.0, %v626
        %628 = vmatprep.mubr.f32.mxu0 0.0
        %629 = vmatmul.mubr.f32.gmra.mxu0 %v277
        %v630 = vpop.f32.mrf.mxu0
        %v631 = vadd.f32 0.0, %v630
        %v632 = vpop.f32.mrf.mxu0
        %v633 = vadd.f32 0.0, %v632
        %634 = vdwg.mxu0
        %v635 = vmax.f32 %v346, %v435
        %v636 = vmax.f32 %v348, %v437
        %v637 = vmax.f32 %v352, %v441
        %v638 = vmax.f32 %v354, %v443
        %v639 = vmax.f32 %v358, %v447
        %v640 = vmax.f32 %v360, %v449
        %v641 = vmax.f32 %v364, %v453
        %v642 = vmax.f32 %v366, %v455
        %v643 = vmax.f32 %v524, %v613
        %v644 = vmax.f32 %v526, %v615
        %v645 = vmax.f32 %v530, %v619
        %v646 = vmax.f32 %v532, %v621
        %v647 = vmax.f32 %v536, %v625
        %v648 = vmax.f32 %v538, %v627
        %v649 = vmax.f32 %v542, %v631
        %v650 = vmax.f32 %v544, %v633
        %v651 = vmax.f32 %v635, %v643
        %v652 = vmax.f32 %v636, %v644
        %v653 = vmax.f32 %v637, %v645
        %v654 = vmax.f32 %v638, %v646
        %v655 = vmax.f32 %v639, %v647
        %v656 = vmax.f32 %v640, %v648
        %v657 = vmax.f32 %v641, %v649
        %v658 = vmax.f32 %v642, %v650
        %v659 = vld [vmem:[%s2] sm:$0xff]
        %v660 = vld [vmem:[%s2 + $0x8] sm:$0xff]
        %v661 = vld [vmem:[%s2 + $0x10] sm:$0xff]
        %v662 = vld [vmem:[%s2 + $0x18] sm:$0xff]
        %664 = vset.pattern.permute.xlu0 0
        %665 = vperm.xlu0 %664, %v659
        %v666 = vpop.permute.xlu0 %665
        %669 = vset.pattern.permute.xlu0 0
        %670 = vperm.xlu0 %669, %v660
        %v671 = vpop.permute.xlu0 %670
        %674 = vset.pattern.permute.xlu0 0
        %675 = vperm.xlu0 %674, %v661
        %v676 = vpop.permute.xlu0 %675
        %679 = vset.pattern.permute.xlu0 0
        %680 = vperm.xlu0 %679, %v662
        %v681 = vpop.permute.xlu0 %680
        %v683 = vadd.f32 %v651, %v666
        %v684 = vadd.f32 %v652, %v666
        %v685 = vadd.f32 %v653, %v671
        %v686 = vadd.f32 %v654, %v671
        %v687 = vadd.f32 %v655, %v676
        %v688 = vadd.f32 %v656, %v676
        %v689 = vadd.f32 %v657, %v681
        %v690 = vadd.f32 %v658, %v681
        %v691 = vmax.f32 %v683, 0.0
        %v692 = vmax.f32 %v684, 0.0
        %v693 = vmax.f32 %v685, 0.0
        %v694 = vmax.f32 %v686, 0.0
        %v695 = vmax.f32 %v687, 0.0
        %v696 = vmax.f32 %v688, 0.0
        %v697 = vmax.f32 %v689, 0.0
        %v698 = vmax.f32 %v690, 0.0
        %v699 = vpack.c.bf16 %v693, %v691
        %v700 = vpack.c.bf16 %v694, %v692
        %v701 = vpack.c.bf16 %v697, %v695
        %v702 = vpack.c.bf16 %v698, %v696
        %v707 = vunpack.c.l.b16 %v699
        %v708 = vunpack.c.l.b16 %v700
        %v709 = vunpack.c.h.b16 %v699
        %v710 = vunpack.c.h.b16 %v700
        %v711 = vunpack.c.l.b16 %v701
        %v712 = vunpack.c.l.b16 %v702
        %v713 = vunpack.c.h.b16 %v701
        %v714 = vunpack.c.h.b16 %v702
        %v715 = vpack.c.b16 %v708, %v707
        %v716 = vpack.c.b16 %v710, %v709
        %v717 = vpack.c.b16 %v712, %v711
        %v718 = vpack.c.b16 %v714, %v713
        %723 = vst [vmem:[%s159] sm:$0xff] %v715
        %724 = vst [vmem:[%s159 + $0x8] sm:$0xff] %v716
        %725 = vst [vmem:[%s159 + $0x10] sm:$0xff] %v717
        %726 = vst [vmem:[%s159 + $0x18] sm:$0xff] %v718
        %s727 = sand.u32 %s90, 1
        %s728 = sand.u32 %s90, 1
        %s729 = smul.addr %s728, 32
        %s730 = scalar_lea.vmem [#allocation2], %s729
        // Predicated region
        $region33: #{scalo_cnn_forward.6} parent=31 // pred_check
          %p731 = pneg %p100
        $region34: #{scalo_cnn_forward.6} parent=31 // pred_check_branch
          %733 = sbr.rel (%p731) target = $region36
        $region35: #{scalo_cnn_forward.6} parent=31 // pred_region
          %s734 = smul.u32 2, %s14
          %s735 = smul.addr %s734, 4
          %s736 = scalar_lea.vmem %s3, %s735
          // Predicated region
          $region37: #{scalo_cnn_forward.6} parent=35 // pred_check
            _
          $region38: #{scalo_cnn_forward.6} parent=35 // pred_check_branch
            %738 = sbr.rel (0) target = $region40
          $region39: #{scalo_cnn_forward.6} parent=35 // pred_region
            // Predicated region
            $region41: #{scalo_cnn_forward.6} parent=39 // pred_check
              _
            $region42: #{scalo_cnn_forward.6} parent=39 // pred_check_branch
              %740 = sbr.rel (0) target = $region44
            $region43: #{scalo_cnn_forward.6} parent=39 // pred_region
              // Predicated region
              $region56: #{scalo_cnn_forward.6} parent=43 // pred_check
                _
              $region57: #{scalo_cnn_forward.6} parent=43 // pred_check_branch
                %762 = sbr.rel (0) target = $region59
              $region58: #{scalo_cnn_forward.6} parent=43 // pred_region
                loop: start=0, step=1, limit=1
                $region60: #{scalo_cnn_forward.6} parent=58 // loop_pre_header
                  _
                $region61: #{scalo_cnn_forward.6} parent=58 // loop_header
                  %s764 = sphi 0, %s768
                  %p765 = scmp.ge.s32.totalorder %s764, 1
                  %s769 = sphi %s730, %s730
                  %s770 = sphi %s736, %s736
                $region62: #{scalo_cnn_forward.6} parent=58 // loop_header_branch
                  %767 = sbr.rel (%p765) target = $region66
                $region63: #{scalo_cnn_forward.6} parent=58 // loop_body
                  %v771 = vld [vmem:[%s769] sm:$0xff]
                  %772 = vst [vmem:[%s770] sm:$0xff] %v771
                  %v773 = vld [vmem:[%s769 + $0x8] sm:$0xff]
                  %774 = vst [vmem:[%s770 + $0x10] sm:$0xff] %v773
                  %v775 = vld [vmem:[%s769 + $0x10] sm:$0xff]
                  %776 = vst [vmem:[%s770 + $0x20] sm:$0xff] %v775
                  %v777 = vld [vmem:[%s769 + $0x18] sm:$0xff]
                  %778 = vst [vmem:[%s770 + $0x30] sm:$0xff] %v777
                $region64: #{scalo_cnn_forward.6} parent=58 // loop_footer
                  %s768 = sadd.s32 1, %s764
                $region65: #{scalo_cnn_forward.6} parent=58 // loop_footer_branch
                  %763 = sbr.rel target = $region61
                $region66: #{scalo_cnn_forward.6} parent=58 // loop_exit
                  _
              $region59: #{scalo_cnn_forward.6} parent=43 // pred_fallthru
                _
              // Predicated region
              $region67: #{scalo_cnn_forward.6} parent=43 // pred_check
                _
              $region68: #{scalo_cnn_forward.6} parent=43 // pred_check_branch
                %780 = sbr.rel target = $region70
              $region69: #{scalo_cnn_forward.6} parent=43 // pred_region
                _
              $region70: #{scalo_cnn_forward.6} parent=43 // pred_fallthru
                _
            $region44: #{scalo_cnn_forward.6} parent=39 // pred_fallthru
              _
            // Predicated region
            $region45: #{scalo_cnn_forward.6} parent=39 // pred_check
              _
            $region46: #{scalo_cnn_forward.6} parent=39 // pred_check_branch
              %742 = sbr.rel target = $region48
            $region47: #{scalo_cnn_forward.6} parent=39 // pred_region
              %s744 = ssub.s32 256, 1
              loop: start=0, step=1, limit=1
              $region49: #{scalo_cnn_forward.6} parent=47 // loop_pre_header
                _
              $region50: #{scalo_cnn_forward.6} parent=47 // loop_header
                %s746 = sphi 0, %s750
                %p747 = scmp.ge.s32.totalorder %s746, 1
                %s751 = sphi %s730, %s730
                %s752 = sphi %s736, %s736
              $region51: #{scalo_cnn_forward.6} parent=47 // loop_header_branch
                %749 = sbr.rel (%p747) target = $region55
              $region52: #{scalo_cnn_forward.6} parent=47 // loop_body
                %v753 = vld [vmem:[%s751] sm:%s744]
                %754 = vst [vmem:[%s752] sm:%s744] %v753
                %v755 = vld [vmem:[%s751 + $0x8] sm:%s744]
                %756 = vst [vmem:[%s752 + $0x10] sm:%s744] %v755
                %v757 = vld [vmem:[%s751 + $0x10] sm:%s744]
                %758 = vst [vmem:[%s752 + $0x20] sm:%s744] %v757
                %v759 = vld [vmem:[%s751 + $0x18] sm:%s744]
                %760 = vst [vmem:[%s752 + $0x30] sm:%s744] %v759
              $region53: #{scalo_cnn_forward.6} parent=47 // loop_footer
                %s750 = sadd.s32 1, %s746
              $region54: #{scalo_cnn_forward.6} parent=47 // loop_footer_branch
                %745 = sbr.rel target = $region50
              $region55: #{scalo_cnn_forward.6} parent=47 // loop_exit
                _
            $region48: #{scalo_cnn_forward.6} parent=39 // pred_fallthru
              _
          $region40: #{scalo_cnn_forward.6} parent=35 // pred_fallthru
            _
          %781 = vnop
        $region36: #{scalo_cnn_forward.6} parent=31 // pred_fallthru
          _
      $region32: #{scalo_cnn_forward.6} parent=5 // pred_fallthru
        _
      %p782 = scmp.le.s32.totalorder 2, %s9
      // Predicated region
      $region71: #{scalo_cnn_forward.6} parent=5 // pred_check
        %p783 = pneg %p782
      $region72: #{scalo_cnn_forward.6} parent=5 // pred_check_branch
        %785 = sbr.rel (%p783) target = $region74
      $region73: #{scalo_cnn_forward.6} parent=5 // pred_region
        %s786 = ssub.s32 %s9, 2
        // Predicated region
        $region75: #{scalo_cnn_forward.6} parent=73 // pred_check
          %p787 = pneg %p106
        $region76: #{scalo_cnn_forward.6} parent=73 // pred_check_branch
          %789 = sbr.rel (%p787) target = $region78
        $region77: #{scalo_cnn_forward.6} parent=73 // pred_region
          %s790 = sand.u32 %s91, 1
          %s791 = sand.u32 %s91, 1
          %s792 = smul.addr %s791, 32
          %s793 = scalar_lea.vmem [#allocation2], %s792
        $region78: #{scalo_cnn_forward.6} parent=73 // pred_fallthru
          _
      $region74: #{scalo_cnn_forward.6} parent=5 // pred_fallthru
        _
    $region6: #{scalo_cnn_forward.6} parent=1 // loop_footer
      %s13 = sadd.s32 1, %s9
    $region7: #{scalo_cnn_forward.6} parent=1 // loop_footer_branch
      %8 = sbr.rel target = $region3
    $region8: #{scalo_cnn_forward.6} parent=1 // loop_exit
      _

// kernel: scalo_cnn_forward.7
$region0: #{scalo_cnn_forward.7}
  #allocation0 [shape = 'u32[]', space=smem, size = 0x4, offset = 0x4, fixed_abs, tag = 'smem constant byte address 0x4 - core index']
  #allocation1 [shape = 'u32[144,128]{1,0:T(1,128)}', space=vmem, size = 0x12000, scoped, tag = 'internal scratch']
  %s0 = inlined_call_operand.vmem [shape: bf16[1,128,512], index: 0, kind: input, shape index: {}]
  %s1 = inlined_call_operand.vmem [shape: f32[64,128], index: 1, kind: input, shape index: {}]
  %s2 = inlined_call_operand.vmem [shape: f32[64,1], index: 2, kind: input, shape index: {}]
  %s3 = inlined_call_operand.vmem [shape: bf16[64,128], index: 3, kind: output, shape index: {}]
  %s4 = sld [smem:[#allocation0]]
  $region22: #{scalo_cnn_forward.7} parent=0
    _
  %s6 = ssub.s32 1, %s4
  %s7 = scalar_select 0, %s6, %s4
  // Predicated region
  $region2: #{scalo_cnn_forward.7} parent=0 // pred_check
    _
  $region3: #{scalo_cnn_forward.7} parent=0 // pred_check_branch
    %9 = sbr.rel (0) target = $region5
  $region4: #{scalo_cnn_forward.7} parent=0 // pred_region
    _
  $region5: #{scalo_cnn_forward.7} parent=0 // pred_fallthru
    _
  // Predicated region
  $region6: #{scalo_cnn_forward.7} parent=0 // pred_check
    _
  $region7: #{scalo_cnn_forward.7} parent=0 // pred_check_branch
    %11 = sbr.rel (0) target = $region9
  $region8: #{scalo_cnn_forward.7} parent=0 // pred_region
    _
  $region9: #{scalo_cnn_forward.7} parent=0 // pred_fallthru
    _
  // Predicated region
  $region10: #{scalo_cnn_forward.7} parent=0 // pred_check
    _
  $region11: #{scalo_cnn_forward.7} parent=0 // pred_check_branch
    %13 = sbr.rel (0) target = $region13
  $region12: #{scalo_cnn_forward.7} parent=0 // pred_region
    _
  $region13: #{scalo_cnn_forward.7} parent=0 // pred_fallthru
    _
  %v14 = vld [vmem:[%s0] sm:$0xff]
  %v15 = vld [vmem:[%s0 + $0x8] sm:$0xff]
  %v16 = vld [vmem:[%s0 + $0x10] sm:$0xff]
  %v17 = vld [vmem:[%s0 + $0x18] sm:$0xff]
  %v18 = vld [vmem:[%s0 + $0x20] sm:$0xff]
  %v19 = vld [vmem:[%s0 + $0x28] sm:$0xff]
  %v20 = vld [vmem:[%s0 + $0x30] sm:$0xff]
  %v21 = vld [vmem:[%s0 + $0x38] sm:$0xff]
  %v22 = vld [vmem:[%s0 + $0x40] sm:$0xff]
  %v23 = vld [vmem:[%s0 + $0x48] sm:$0xff]
  %v24 = vld [vmem:[%s0 + $0x50] sm:$0xff]
  %v25 = vld [vmem:[%s0 + $0x58] sm:$0xff]
  %v26 = vld [vmem:[%s0 + $0x60] sm:$0xff]
  %v27 = vld [vmem:[%s0 + $0x68] sm:$0xff]
  %v28 = vld [vmem:[%s0 + $0x70] sm:$0xff]
  %v29 = vld [vmem:[%s0 + $0x78] sm:$0xff]
  %v30 = vld [vmem:[%s0 + $0x80] sm:$0xff]
  %v31 = vld [vmem:[%s0 + $0x88] sm:$0xff]
  %v32 = vld [vmem:[%s0 + $0x90] sm:$0xff]
  %v33 = vld [vmem:[%s0 + $0x98] sm:$0xff]
  %v34 = vld [vmem:[%s0 + $0xa0] sm:$0xff]
  %v35 = vld [vmem:[%s0 + $0xa8] sm:$0xff]
  %v36 = vld [vmem:[%s0 + $0xb0] sm:$0xff]
  %v37 = vld [vmem:[%s0 + $0xb8] sm:$0xff]
  %v38 = vld [vmem:[%s0 + $0xc0] sm:$0xff]
  %v39 = vld [vmem:[%s0 + $0xc8] sm:$0xff]
  %v40 = vld [vmem:[%s0 + $0xd0] sm:$0xff]
  %v41 = vld [vmem:[%s0 + $0xd8] sm:$0xff]
  %v42 = vld [vmem:[%s0 + $0xe0] sm:$0xff]
  %v43 = vld [vmem:[%s0 + $0xe8] sm:$0xff]
  %v44 = vld [vmem:[%s0 + $0xf0] sm:$0xff]
  %v45 = vld [vmem:[%s0 + $0xf8] sm:$0xff]
  %v46 = vunpack.c.l.bf16 %v14
  %v47 = vunpack.c.h.bf16 %v14
  %v48 = vunpack.c.l.bf16 %v15
  %v49 = vunpack.c.h.bf16 %v15
  %v50 = vunpack.c.l.bf16 %v16
  %v51 = vunpack.c.h.bf16 %v16
  %v52 = vunpack.c.l.bf16 %v17
  %v53 = vunpack.c.h.bf16 %v17
  %v54 = vunpack.c.l.bf16 %v18
  %v55 = vunpack.c.h.bf16 %v18
  %v56 = vunpack.c.l.bf16 %v19
  %v57 = vunpack.c.h.bf16 %v19
  %v58 = vunpack.c.l.bf16 %v20
  %v59 = vunpack.c.h.bf16 %v20
  %v60 = vunpack.c.l.bf16 %v21
  %v61 = vunpack.c.h.bf16 %v21
  %v62 = vunpack.c.l.bf16 %v22
  %v63 = vunpack.c.h.bf16 %v22
  %v64 = vunpack.c.l.bf16 %v23
  %v65 = vunpack.c.h.bf16 %v23
  %v66 = vunpack.c.l.bf16 %v24
  %v67 = vunpack.c.h.bf16 %v24
  %v68 = vunpack.c.l.bf16 %v25
  %v69 = vunpack.c.h.bf16 %v25
  %v70 = vunpack.c.l.bf16 %v26
  %v71 = vunpack.c.h.bf16 %v26
  %v72 = vunpack.c.l.bf16 %v27
  %v73 = vunpack.c.h.bf16 %v27
  %v74 = vunpack.c.l.bf16 %v28
  %v75 = vunpack.c.h.bf16 %v28
  %v76 = vunpack.c.l.bf16 %v29
  %v77 = vunpack.c.h.bf16 %v29
  %v78 = vunpack.c.l.bf16 %v30
  %v79 = vunpack.c.h.bf16 %v30
  %v80 = vunpack.c.l.bf16 %v31
  %v81 = vunpack.c.h.bf16 %v31
  %v82 = vunpack.c.l.bf16 %v32
  %v83 = vunpack.c.h.bf16 %v32
  %v84 = vunpack.c.l.bf16 %v33
  %v85 = vunpack.c.h.bf16 %v33
  %v86 = vunpack.c.l.bf16 %v34
  %v87 = vunpack.c.h.bf16 %v34
  %v88 = vunpack.c.l.bf16 %v35
  %v89 = vunpack.c.h.bf16 %v35
  %v90 = vunpack.c.l.bf16 %v36
  %v91 = vunpack.c.h.bf16 %v36
  %v92 = vunpack.c.l.bf16 %v37
  %v93 = vunpack.c.h.bf16 %v37
  %v94 = vunpack.c.l.bf16 %v38
  %v95 = vunpack.c.h.bf16 %v38
  %v96 = vunpack.c.l.bf16 %v39
  %v97 = vunpack.c.h.bf16 %v39
  %v98 = vunpack.c.l.bf16 %v40
  %v99 = vunpack.c.h.bf16 %v40
  %v100 = vunpack.c.l.bf16 %v41
  %v101 = vunpack.c.h.bf16 %v41
  %v102 = vunpack.c.l.bf16 %v42
  %v103 = vunpack.c.h.bf16 %v42
  %v104 = vunpack.c.l.bf16 %v43
  %v105 = vunpack.c.h.bf16 %v43
  %v106 = vunpack.c.l.bf16 %v44
  %v107 = vunpack.c.h.bf16 %v44
  %v108 = vunpack.c.l.bf16 %v45
  %v109 = vunpack.c.h.bf16 %v45
  %v110 = vld [vmem:[%s1] sm:$0xff]
  %v111 = vld [vmem:[%s1 + $0x8] sm:$0xff]
  %v112 = vld [vmem:[%s1 + $0x10] sm:$0xff]
  %v113 = vld [vmem:[%s1 + $0x18] sm:$0xff]
  %v114 = vld [vmem:[%s1 + $0x20] sm:$0xff]
  %v115 = vld [vmem:[%s1 + $0x28] sm:$0xff]
  %v116 = vld [vmem:[%s1 + $0x30] sm:$0xff]
  %v117 = vld [vmem:[%s1 + $0x38] sm:$0xff]
  %118 = vmatprep.subr.mxu0 %v107
  %119 = vmatpush1.msra.mxu0 %v106
  %120 = vmatprep.subr.mxu0 %v103
  %121 = vmatpush1.msra.mxu0 %v102
  %122 = vmatprep.subr.mxu0 %v99
  %123 = vmatpush1.msra.mxu0 %v98
  %124 = vmatprep.subr.mxu0 %v95
  %125 = vmatpush1.msra.mxu0 %v94
  %126 = vmatprep.subr.mxu0 %v91
  %127 = vmatpush1.msra.mxu0 %v90
  %128 = vmatprep.subr.mxu0 %v87
  %129 = vmatpush1.msra.mxu0 %v86
  %130 = vmatprep.subr.mxu0 %v83
  %131 = vmatpush1.msra.mxu0 %v82
  %132 = vmatprep.subr.mxu0 %v79
  %133 = vmatpush1.msra.mxu0 %v78
  %134 = vmatprep.subr.mxu0 %v75
  %135 = vmatpush1.msra.mxu0 %v74
  %136 = vmatprep.subr.mxu0 %v71
  %137 = vmatpush1.msra.mxu0 %v70
  %138 = vmatprep.subr.mxu0 %v67
  %139 = vmatpush1.msra.mxu0 %v66
  %140 = vmatprep.subr.mxu0 %v63
  %141 = vmatpush1.msra.mxu0 %v62
  %142 = vmatprep.subr.mxu0 %v59
  %143 = vmatpush1.msra.mxu0 %v58
  %144 = vmatprep.subr.mxu0 %v55
  %145 = vmatpush1.msra.mxu0 %v54
  %146 = vmatprep.subr.mxu0 %v51
  %147 = vmatpush1.msra.mxu0 %v50
  %148 = vmatprep.subr.mxu0 %v47
  %149 = vmatpush1.msra.mxu0 %v46
  %150 = vmatprep.subr.mxu0 0.0
  %151 = vmatpush2.msra.mxu0 0.0
  %152 = vmatprep.subr.mxu0 0.0
  %153 = vmatpush2.msra.mxu0 0.0
  %154 = vmatprep.subr.mxu0 0.0
  %155 = vmatpush2.msra.mxu0 0.0
  %156 = vmatprep.subr.mxu0 0.0
  %157 = vmatpush2.msra.mxu0 0.0
  %158 = vmatprep.subr.mxu0 0.0
  %159 = vmatpush2.msra.mxu0 0.0
  %160 = vmatprep.subr.mxu0 0.0
  %161 = vmatpush2.msra.mxu0 0.0
  %162 = vmatprep.subr.mxu0 0.0
  %163 = vmatpush2.msra.mxu0 0.0
  %164 = vmatprep.subr.mxu0 0.0
  %165 = vmatpush2.msra.mxu0 0.0
  %166 = vmatprep.subr.mxu0 0.0
  %167 = vmatpush2.msra.mxu0 0.0
  %168 = vmatprep.subr.mxu0 0.0
  %169 = vmatpush2.msra.mxu0 0.0
  %170 = vmatprep.subr.mxu0 0.0
  %171 = vmatpush2.msra.mxu0 0.0
  %172 = vmatprep.subr.mxu0 0.0
  %173 = vmatpush2.msra.mxu0 0.0
  %174 = vmatprep.subr.mxu0 0.0
  %175 = vmatpush2.msra.mxu0 0.0
  %176 = vmatprep.subr.mxu0 0.0
  %177 = vmatpush2.msra.mxu0 0.0
  %178 = vmatprep.subr.mxu0 0.0
  %179 = vmatpush2.msra.mxu0 0.0
  %180 = vmatprep.subr.mxu0 0.0
  %181 = vmatpush2.msra.mxu0 0.0
  %182 = vmatprep.mubr.f32.mxu0 0.0
  %183 = vmatmul.mubr.f32.gmra.mxu0 %v110
  %v184 = vpop.f32.mrf.mxu0
  %v185 = vadd.f32 0.0, %v184
  %v186 = vpop.f32.mrf.mxu0
  %v187 = vadd.f32 0.0, %v186
  %188 = vmatprep.mubr.f32.mxu0 0.0
  %189 = vmatmul.mubr.f32.gmra.mxu0 %v111
  %v190 = vpop.f32.mrf.mxu0
  %v191 = vadd.f32 0.0, %v190
  %v192 = vpop.f32.mrf.mxu0
  %v193 = vadd.f32 0.0, %v192
  %194 = vmatprep.mubr.f32.mxu0 0.0
  %195 = vmatmul.mubr.f32.gmra.mxu0 %v112
  %v196 = vpop.f32.mrf.mxu0
  %v197 = vadd.f32 0.0, %v196
  %v198 = vpop.f32.mrf.mxu0
  %v199 = vadd.f32 0.0, %v198
  %200 = vmatprep.mubr.f32.mxu0 0.0
  %201 = vmatmul.mubr.f32.gmra.mxu0 %v113
  %v202 = vpop.f32.mrf.mxu0
  %v203 = vadd.f32 0.0, %v202
  %v204 = vpop.f32.mrf.mxu0
  %v205 = vadd.f32 0.0, %v204
  %206 = vmatprep.mubr.f32.mxu0 0.0
  %207 = vmatmul.mubr.f32.gmra.mxu0 %v114
  %v208 = vpop.f32.mrf.mxu0
  %v209 = vadd.f32 0.0, %v208
  %v210 = vpop.f32.mrf.mxu0
  %v211 = vadd.f32 0.0, %v210
  %212 = vmatprep.mubr.f32.mxu0 0.0
  %213 = vmatmul.mubr.f32.gmra.mxu0 %v115
  %v214 = vpop.f32.mrf.mxu0
  %v215 = vadd.f32 0.0, %v214
  %v216 = vpop.f32.mrf.mxu0
  %v217 = vadd.f32 0.0, %v216
  %218 = vmatprep.mubr.f32.mxu0 0.0
  %219 = vmatmul.mubr.f32.gmra.mxu0 %v116
  %v220 = vpop.f32.mrf.mxu0
  %v221 = vadd.f32 0.0, %v220
  %v222 = vpop.f32.mrf.mxu0
  %v223 = vadd.f32 0.0, %v222
  %224 = vmatprep.mubr.f32.mxu0 0.0
  %225 = vmatmul.mubr.f32.gmra.mxu0 %v117
  %v226 = vpop.f32.mrf.mxu0
  %v227 = vadd.f32 0.0, %v226
  %v228 = vpop.f32.mrf.mxu0
  %v229 = vadd.f32 0.0, %v228
  %230 = vdwg.mxu0
  %231 = vmatprep.subr.mxu0 %v109
  %232 = vmatpush1.msra.mxu0 %v108
  %233 = vmatprep.subr.mxu0 %v105
  %234 = vmatpush1.msra.mxu0 %v104
  %235 = vmatprep.subr.mxu0 %v101
  %236 = vmatpush1.msra.mxu0 %v100
  %237 = vmatprep.subr.mxu0 %v97
  %238 = vmatpush1.msra.mxu0 %v96
  %239 = vmatprep.subr.mxu0 %v93
  %240 = vmatpush1.msra.mxu0 %v92
  %241 = vmatprep.subr.mxu0 %v89
  %242 = vmatpush1.msra.mxu0 %v88
  %243 = vmatprep.subr.mxu0 %v85
  %244 = vmatpush1.msra.mxu0 %v84
  %245 = vmatprep.subr.mxu0 %v81
  %246 = vmatpush1.msra.mxu0 %v80
  %247 = vmatprep.subr.mxu0 %v77
  %248 = vmatpush1.msra.mxu0 %v76
  %249 = vmatprep.subr.mxu0 %v73
  %250 = vmatpush1.msra.mxu0 %v72
  %251 = vmatprep.subr.mxu0 %v69
  %252 = vmatpush1.msra.mxu0 %v68
  %253 = vmatprep.subr.mxu0 %v65
  %254 = vmatpush1.msra.mxu0 %v64
  %255 = vmatprep.subr.mxu0 %v61
  %256 = vmatpush1.msra.mxu0 %v60
  %257 = vmatprep.subr.mxu0 %v57
  %258 = vmatpush1.msra.mxu0 %v56
  %259 = vmatprep.subr.mxu0 %v53
  %260 = vmatpush1.msra.mxu0 %v52
  %261 = vmatprep.subr.mxu0 %v49
  %262 = vmatpush1.msra.mxu0 %v48
  %263 = vmatprep.subr.mxu0 0.0
  %264 = vmatpush2.msra.mxu0 0.0
  %265 = vmatprep.subr.mxu0 0.0
  %266 = vmatpush2.msra.mxu0 0.0
  %267 = vmatprep.subr.mxu0 0.0
  %268 = vmatpush2.msra.mxu0 0.0
  %269 = vmatprep.subr.mxu0 0.0
  %270 = vmatpush2.msra.mxu0 0.0
  %271 = vmatprep.subr.mxu0 0.0
  %272 = vmatpush2.msra.mxu0 0.0
  %273 = vmatprep.subr.mxu0 0.0
  %274 = vmatpush2.msra.mxu0 0.0
  %275 = vmatprep.subr.mxu0 0.0
  %276 = vmatpush2.msra.mxu0 0.0
  %277 = vmatprep.subr.mxu0 0.0
  %278 = vmatpush2.msra.mxu0 0.0
  %279 = vmatprep.subr.mxu0 0.0
  %280 = vmatpush2.msra.mxu0 0.0
  %281 = vmatprep.subr.mxu0 0.0
  %282 = vmatpush2.msra.mxu0 0.0
  %283 = vmatprep.subr.mxu0 0.0
  %284 = vmatpush2.msra.mxu0 0.0
  %285 = vmatprep.subr.mxu0 0.0
  %286 = vmatpush2.msra.mxu0 0.0
  %287 = vmatprep.subr.mxu0 0.0
  %288 = vmatpush2.msra.mxu0 0.0
  %289 = vmatprep.subr.mxu0 0.0
  %290 = vmatpush2.msra.mxu0 0.0
  %291 = vmatprep.subr.mxu0 0.0
  %292 = vmatpush2.msra.mxu0 0.0
  %293 = vmatprep.subr.mxu0 0.0
  %294 = vmatpush2.msra.mxu0 0.0
  %295 = vmatprep.mubr.f32.mxu0 0.0
  %296 = vmatmul.mubr.f32.gmra.mxu0 %v110
  %v297 = vpop.f32.mrf.mxu0
  %v298 = vadd.f32 0.0, %v297
  %v299 = vpop.f32.mrf.mxu0
  %v300 = vadd.f32 0.0, %v299
  %301 = vmatprep.mubr.f32.mxu0 0.0
  %302 = vmatmul.mubr.f32.gmra.mxu0 %v111
  %v303 = vpop.f32.mrf.mxu0
  %v304 = vadd.f32 0.0, %v303
  %v305 = vpop.f32.mrf.mxu0
  %v306 = vadd.f32 0.0, %v305
  %307 = vmatprep.mubr.f32.mxu0 0.0
  %308 = vmatmul.mubr.f32.gmra.mxu0 %v112
  %v309 = vpop.f32.mrf.mxu0
  %v310 = vadd.f32 0.0, %v309
  %v311 = vpop.f32.mrf.mxu0
  %v312 = vadd.f32 0.0, %v311
  %313 = vmatprep.mubr.f32.mxu0 0.0
  %314 = vmatmul.mubr.f32.gmra.mxu0 %v113
  %v315 = vpop.f32.mrf.mxu0
  %v316 = vadd.f32 0.0, %v315
  %v317 = vpop.f32.mrf.mxu0
  %v318 = vadd.f32 0.0, %v317
  %319 = vmatprep.mubr.f32.mxu0 0.0
  %320 = vmatmul.mubr.f32.gmra.mxu0 %v114
  %v321 = vpop.f32.mrf.mxu0
  %v322 = vadd.f32 0.0, %v321
  %v323 = vpop.f32.mrf.mxu0
  %v324 = vadd.f32 0.0, %v323
  %325 = vmatprep.mubr.f32.mxu0 0.0
  %326 = vmatmul.mubr.f32.gmra.mxu0 %v115
  %v327 = vpop.f32.mrf.mxu0
  %v328 = vadd.f32 0.0, %v327
  %v329 = vpop.f32.mrf.mxu0
  %v330 = vadd.f32 0.0, %v329
  %331 = vmatprep.mubr.f32.mxu0 0.0
  %332 = vmatmul.mubr.f32.gmra.mxu0 %v116
  %v333 = vpop.f32.mrf.mxu0
  %v334 = vadd.f32 0.0, %v333
  %v335 = vpop.f32.mrf.mxu0
  %v336 = vadd.f32 0.0, %v335
  %337 = vmatprep.mubr.f32.mxu0 0.0
  %338 = vmatmul.mubr.f32.gmra.mxu0 %v117
  %v339 = vpop.f32.mrf.mxu0
  %v340 = vadd.f32 0.0, %v339
  %v341 = vpop.f32.mrf.mxu0
  %v342 = vadd.f32 0.0, %v341
  %343 = vdwg.mxu0
  %v344 = vmax.f32 %v185, %v187
  %v345 = vmax.f32 %v191, %v193
  %v346 = vmax.f32 %v197, %v199
  %v347 = vmax.f32 %v203, %v205
  %v348 = vmax.f32 %v209, %v211
  %v349 = vmax.f32 %v215, %v217
  %v350 = vmax.f32 %v221, %v223
  %v351 = vmax.f32 %v227, %v229
  %v352 = vmax.f32 %v298, %v300
  %v353 = vmax.f32 %v304, %v306
  %v354 = vmax.f32 %v310, %v312
  %v355 = vmax.f32 %v316, %v318
  %v356 = vmax.f32 %v322, %v324
  %v357 = vmax.f32 %v328, %v330
  %v358 = vmax.f32 %v334, %v336
  %v359 = vmax.f32 %v340, %v342
  %v360 = vmax.f32 %v344, %v352
  %v361 = vmax.f32 %v345, %v353
  %v362 = vmax.f32 %v346, %v354
  %v363 = vmax.f32 %v347, %v355
  %v364 = vmax.f32 %v348, %v356
  %v365 = vmax.f32 %v349, %v357
  %v366 = vmax.f32 %v350, %v358
  %v367 = vmax.f32 %v351, %v359
  %v368 = vld [vmem:[%s2] sm:$0xff]
  %v369 = vld [vmem:[%s2 + $0x8] sm:$0xff]
  %v370 = vld [vmem:[%s2 + $0x10] sm:$0xff]
  %v371 = vld [vmem:[%s2 + $0x18] sm:$0xff]
  %v372 = vld [vmem:[%s2 + $0x20] sm:$0xff]
  %v373 = vld [vmem:[%s2 + $0x28] sm:$0xff]
  %v374 = vld [vmem:[%s2 + $0x30] sm:$0xff]
  %v375 = vld [vmem:[%s2 + $0x38] sm:$0xff]
  %377 = vset.pattern.permute.xlu0 0
  %378 = vperm.xlu0 %377, %v368
  %v379 = vpop.permute.xlu0 %378
  %382 = vset.pattern.permute.xlu0 0
  %383 = vperm.xlu0 %382, %v369
  %v384 = vpop.permute.xlu0 %383
  %387 = vset.pattern.permute.xlu0 0
  %388 = vperm.xlu0 %387, %v370
  %v389 = vpop.permute.xlu0 %388
  %392 = vset.pattern.permute.xlu0 0
  %393 = vperm.xlu0 %392, %v371
  %v394 = vpop.permute.xlu0 %393
  %397 = vset.pattern.permute.xlu0 0
  %398 = vperm.xlu0 %397, %v372
  %v399 = vpop.permute.xlu0 %398
  %402 = vset.pattern.permute.xlu0 0
  %403 = vperm.xlu0 %402, %v373
  %v404 = vpop.permute.xlu0 %403
  %407 = vset.pattern.permute.xlu0 0
  %408 = vperm.xlu0 %407, %v374
  %v409 = vpop.permute.xlu0 %408
  %412 = vset.pattern.permute.xlu0 0
  %413 = vperm.xlu0 %412, %v375
  %v414 = vpop.permute.xlu0 %413
  %v416 = vadd.f32 %v360, %v379
  %v417 = vadd.f32 %v361, %v384
  %v418 = vadd.f32 %v362, %v389
  %v419 = vadd.f32 %v363, %v394
  %v420 = vadd.f32 %v364, %v399
  %v421 = vadd.f32 %v365, %v404
  %v422 = vadd.f32 %v366, %v409
  %v423 = vadd.f32 %v367, %v414
  %v424 = vmax.f32 %v416, 0.0
  %v425 = vmax.f32 %v417, 0.0
  %v426 = vmax.f32 %v418, 0.0
  %v427 = vmax.f32 %v419, 0.0
  %v428 = vmax.f32 %v420, 0.0
  %v429 = vmax.f32 %v421, 0.0
  %v430 = vmax.f32 %v422, 0.0
  %v431 = vmax.f32 %v423, 0.0
  %v432 = vpack.c.bf16 %v425, %v424
  %v433 = vpack.c.bf16 %v427, %v426
  %v434 = vpack.c.bf16 %v429, %v428
  %v435 = vpack.c.bf16 %v431, %v430
  %v440 = vunpack.c.l.b16 %v432
  %v441 = vunpack.c.h.b16 %v432
  %v442 = vunpack.c.l.b16 %v433
  %v443 = vunpack.c.h.b16 %v433
  %v444 = vunpack.c.l.b16 %v434
  %v445 = vunpack.c.h.b16 %v434
  %v446 = vunpack.c.l.b16 %v435
  %v447 = vunpack.c.h.b16 %v435
  %v448 = vpack.c.b16 %v440, %v440
  %v449 = vpack.c.b16 %v441, %v441
  %v450 = vpack.c.b16 %v442, %v442
  %v451 = vpack.c.b16 %v443, %v443
  %v452 = vpack.c.b16 %v444, %v444
  %v453 = vpack.c.b16 %v445, %v445
  %v454 = vpack.c.b16 %v446, %v446
  %v455 = vpack.c.b16 %v447, %v447
  %464 = vst [vmem:[%s3] sm:$0xf] %v448
  %465 = vst [vmem:[%s3 + $0x4] sm:$0xf] %v449
  %466 = vst [vmem:[%s3 + $0x8] sm:$0xf] %v450
  %467 = vst [vmem:[%s3 + $0xc] sm:$0xf] %v451
  %468 = vst [vmem:[%s3 + $0x10] sm:$0xf] %v452
  %469 = vst [vmem:[%s3 + $0x14] sm:$0xf] %v453
  %470 = vst [vmem:[%s3 + $0x18] sm:$0xf] %v454
  %471 = vst [vmem:[%s3 + $0x1c] sm:$0xf] %v455
  // Predicated region
  $region14: #{scalo_cnn_forward.7} parent=0 // pred_check
    _
  $region15: #{scalo_cnn_forward.7} parent=0 // pred_check_branch
    %473 = sbr.rel (0) target = $region17
  $region16: #{scalo_cnn_forward.7} parent=0 // pred_region
    _
  $region17: #{scalo_cnn_forward.7} parent=0 // pred_fallthru
    _
  // Predicated region
  $region18: #{scalo_cnn_forward.7} parent=0 // pred_check
    _
  $region19: #{scalo_cnn_forward.7} parent=0 // pred_check_branch
    %475 = sbr.rel (0) target = $region21
  $region20: #{scalo_cnn_forward.7} parent=0 // pred_region
    _
  $region21: #{scalo_cnn_forward.7} parent=0 // pred_fallthru
    _

// kernel: scalo_cnn_forward.8
$region0: #{scalo_cnn_forward.8}
  #allocation0 [shape = 'u32[]', space=smem, size = 0x4, offset = 0x4, fixed_abs, tag = 'smem constant byte address 0x4 - core index']
  #allocation1 [shape = 'u32[144,128]{1,0:T(1,128)}', space=vmem, size = 0x12000, scoped, tag = 'internal scratch']
  %s0 = inlined_call_operand.vmem [shape: bf16[1,256,512], index: 0, kind: input, shape index: {}]
  %s1 = inlined_call_operand.vmem [shape: f32[128,256], index: 1, kind: input, shape index: {}]
  %s2 = inlined_call_operand.vmem [shape: f32[128,1], index: 2, kind: input, shape index: {}]
  %s3 = inlined_call_operand.vmem [shape: bf16[128,128], index: 3, kind: output, shape index: {}]
  %s4 = sld [smem:[#allocation0]]
  $region22: #{scalo_cnn_forward.8} parent=0
    _
  %s6 = ssub.s32 1, %s4
  %s7 = scalar_select 0, %s6, %s4
  // Predicated region
  $region2: #{scalo_cnn_forward.8} parent=0 // pred_check
    _
  $region3: #{scalo_cnn_forward.8} parent=0 // pred_check_branch
    %9 = sbr.rel (0) target = $region5
  $region4: #{scalo_cnn_forward.8} parent=0 // pred_region
    _
  $region5: #{scalo_cnn_forward.8} parent=0 // pred_fallthru
    _
  // Predicated region
  $region6: #{scalo_cnn_forward.8} parent=0 // pred_check
    _
  $region7: #{scalo_cnn_forward.8} parent=0 // pred_check_branch
    %11 = sbr.rel (0) target = $region9
  $region8: #{scalo_cnn_forward.8} parent=0 // pred_region
    _
  $region9: #{scalo_cnn_forward.8} parent=0 // pred_fallthru
    _
  // Predicated region
  $region10: #{scalo_cnn_forward.8} parent=0 // pred_check
    _
  $region11: #{scalo_cnn_forward.8} parent=0 // pred_check_branch
    %13 = sbr.rel (0) target = $region13
  $region12: #{scalo_cnn_forward.8} parent=0 // pred_region
    _
  $region13: #{scalo_cnn_forward.8} parent=0 // pred_fallthru
    _
  %v14 = vld [vmem:[%s0] sm:$0xff]
  %v15 = vld [vmem:[%s0 + $0x8] sm:$0xff]
  %v16 = vld [vmem:[%s0 + $0x10] sm:$0xff]
  %v17 = vld [vmem:[%s0 + $0x18] sm:$0xff]
  %v18 = vld [vmem:[%s0 + $0x20] sm:$0xff]
  %v19 = vld [vmem:[%s0 + $0x28] sm:$0xff]
  %v20 = vld [vmem:[%s0 + $0x30] sm:$0xff]
  %v21 = vld [vmem:[%s0 + $0x38] sm:$0xff]
  %v22 = vld [vmem:[%s0 + $0x40] sm:$0xff]
  %v23 = vld [vmem:[%s0 + $0x48] sm:$0xff]
  %v24 = vld [vmem:[%s0 + $0x50] sm:$0xff]
  %v25 = vld [vmem:[%s0 + $0x58] sm:$0xff]
  %v26 = vld [vmem:[%s0 + $0x60] sm:$0xff]
  %v27 = vld [vmem:[%s0 + $0x68] sm:$0xff]
  %v28 = vld [vmem:[%s0 + $0x70] sm:$0xff]
  %v29 = vld [vmem:[%s0 + $0x78] sm:$0xff]
  %v30 = vld [vmem:[%s0 + $0x80] sm:$0xff]
  %v31 = vld [vmem:[%s0 + $0x88] sm:$0xff]
  %v32 = vld [vmem:[%s0 + $0x90] sm:$0xff]
  %v33 = vld [vmem:[%s0 + $0x98] sm:$0xff]
  %v34 = vld [vmem:[%s0 + $0xa0] sm:$0xff]
  %v35 = vld [vmem:[%s0 + $0xa8] sm:$0xff]
  %v36 = vld [vmem:[%s0 + $0xb0] sm:$0xff]
  %v37 = vld [vmem:[%s0 + $0xb8] sm:$0xff]
  %v38 = vld [vmem:[%s0 + $0xc0] sm:$0xff]
  %v39 = vld [vmem:[%s0 + $0xc8] sm:$0xff]
  %v40 = vld [vmem:[%s0 + $0xd0] sm:$0xff]
  %v41 = vld [vmem:[%s0 + $0xd8] sm:$0xff]
  %v42 = vld [vmem:[%s0 + $0xe0] sm:$0xff]
  %v43 = vld [vmem:[%s0 + $0xe8] sm:$0xff]
  %v44 = vld [vmem:[%s0 + $0xf0] sm:$0xff]
  %v45 = vld [vmem:[%s0 + $0xf8] sm:$0xff]
  %v46 = vld [vmem:[%s0 + $0x100] sm:$0xff]
  %v47 = vld [vmem:[%s0 + $0x108] sm:$0xff]
  %v48 = vld [vmem:[%s0 + $0x110] sm:$0xff]
  %v49 = vld [vmem:[%s0 + $0x118] sm:$0xff]
  %v50 = vld [vmem:[%s0 + $0x120] sm:$0xff]
  %v51 = vld [vmem:[%s0 + $0x128] sm:$0xff]
  %v52 = vld [vmem:[%s0 + $0x130] sm:$0xff]
  %v53 = vld [vmem:[%s0 + $0x138] sm:$0xff]
  %v54 = vld [vmem:[%s0 + $0x140] sm:$0xff]
  %v55 = vld [vmem:[%s0 + $0x148] sm:$0xff]
  %v56 = vld [vmem:[%s0 + $0x150] sm:$0xff]
  %v57 = vld [vmem:[%s0 + $0x158] sm:$0xff]
  %v58 = vld [vmem:[%s0 + $0x160] sm:$0xff]
  %v59 = vld [vmem:[%s0 + $0x168] sm:$0xff]
  %v60 = vld [vmem:[%s0 + $0x170] sm:$0xff]
  %v61 = vld [vmem:[%s0 + $0x178] sm:$0xff]
  %v62 = vld [vmem:[%s0 + $0x180] sm:$0xff]
  %v63 = vld [vmem:[%s0 + $0x188] sm:$0xff]
  %v64 = vld [vmem:[%s0 + $0x190] sm:$0xff]
  %v65 = vld [vmem:[%s0 + $0x198] sm:$0xff]
  %v66 = vld [vmem:[%s0 + $0x1a0] sm:$0xff]
  %v67 = vld [vmem:[%s0 + $0x1a8] sm:$0xff]
  %v68 = vld [vmem:[%s0 + $0x1b0] sm:$0xff]
  %v69 = vld [vmem:[%s0 + $0x1b8] sm:$0xff]
  %v70 = vld [vmem:[%s0 + $0x1c0] sm:$0xff]
  %v71 = vld [vmem:[%s0 + $0x1c8] sm:$0xff]
  %v72 = vld [vmem:[%s0 + $0x1d0] sm:$0xff]
  %v73 = vld [vmem:[%s0 + $0x1d8] sm:$0xff]
  %v74 = vld [vmem:[%s0 + $0x1e0] sm:$0xff]
  %v75 = vld [vmem:[%s0 + $0x1e8] sm:$0xff]
  %v76 = vld [vmem:[%s0 + $0x1f0] sm:$0xff]
  %v77 = vld [vmem:[%s0 + $0x1f8] sm:$0xff]
  %v78 = vunpack.c.l.bf16 %v14
  %v79 = vunpack.c.h.bf16 %v14
  %v80 = vunpack.c.l.bf16 %v15
  %v81 = vunpack.c.h.bf16 %v15
  %v82 = vunpack.c.l.bf16 %v16
  %v83 = vunpack.c.h.bf16 %v16
  %v84 = vunpack.c.l.bf16 %v17
  %v85 = vunpack.c.h.bf16 %v17
  %v86 = vunpack.c.l.bf16 %v18
  %v87 = vunpack.c.h.bf16 %v18
  %v88 = vunpack.c.l.bf16 %v19
  %v89 = vunpack.c.h.bf16 %v19
  %v90 = vunpack.c.l.bf16 %v20
  %v91 = vunpack.c.h.bf16 %v20
  %v92 = vunpack.c.l.bf16 %v21
  %v93 = vunpack.c.h.bf16 %v21
  %v94 = vunpack.c.l.bf16 %v22
  %v95 = vunpack.c.h.bf16 %v22
  %v96 = vunpack.c.l.bf16 %v23
  %v97 = vunpack.c.h.bf16 %v23
  %v98 = vunpack.c.l.bf16 %v24
  %v99 = vunpack.c.h.bf16 %v24
  %v100 = vunpack.c.l.bf16 %v25
  %v101 = vunpack.c.h.bf16 %v25
  %v102 = vunpack.c.l.bf16 %v26
  %v103 = vunpack.c.h.bf16 %v26
  %v104 = vunpack.c.l.bf16 %v27
  %v105 = vunpack.c.h.bf16 %v27
  %v106 = vunpack.c.l.bf16 %v28
  %v107 = vunpack.c.h.bf16 %v28
  %v108 = vunpack.c.l.bf16 %v29
  %v109 = vunpack.c.h.bf16 %v29
  %v110 = vunpack.c.l.bf16 %v30
  %v111 = vunpack.c.h.bf16 %v30
  %v112 = vunpack.c.l.bf16 %v31
  %v113 = vunpack.c.h.bf16 %v31
  %v114 = vunpack.c.l.bf16 %v32
  %v115 = vunpack.c.h.bf16 %v32
  %v116 = vunpack.c.l.bf16 %v33
  %v117 = vunpack.c.h.bf16 %v33
  %v118 = vunpack.c.l.bf16 %v34
  %v119 = vunpack.c.h.bf16 %v34
  %v120 = vunpack.c.l.bf16 %v35
  %v121 = vunpack.c.h.bf16 %v35
  %v122 = vunpack.c.l.bf16 %v36
  %v123 = vunpack.c.h.bf16 %v36
  %v124 = vunpack.c.l.bf16 %v37
  %v125 = vunpack.c.h.bf16 %v37
  %v126 = vunpack.c.l.bf16 %v38
  %v127 = vunpack.c.h.bf16 %v38
  %v128 = vunpack.c.l.bf16 %v39
  %v129 = vunpack.c.h.bf16 %v39
  %v130 = vunpack.c.l.bf16 %v40
  %v131 = vunpack.c.h.bf16 %v40
  %v132 = vunpack.c.l.bf16 %v41
  %v133 = vunpack.c.h.bf16 %v41
  %v134 = vunpack.c.l.bf16 %v42
  %v135 = vunpack.c.h.bf16 %v42
  %v136 = vunpack.c.l.bf16 %v43
  %v137 = vunpack.c.h.bf16 %v43
  %v138 = vunpack.c.l.bf16 %v44
  %v139 = vunpack.c.h.bf16 %v44
  %v140 = vunpack.c.l.bf16 %v45
  %v141 = vunpack.c.h.bf16 %v45
  %v142 = vunpack.c.l.bf16 %v46
  %v143 = vunpack.c.h.bf16 %v46
  %v144 = vunpack.c.l.bf16 %v47
  %v145 = vunpack.c.h.bf16 %v47
  %v146 = vunpack.c.l.bf16 %v48
  %v147 = vunpack.c.h.bf16 %v48
  %v148 = vunpack.c.l.bf16 %v49
  %v149 = vunpack.c.h.bf16 %v49
  %v150 = vunpack.c.l.bf16 %v50
  %v151 = vunpack.c.h.bf16 %v50
  %v152 = vunpack.c.l.bf16 %v51
  %v153 = vunpack.c.h.bf16 %v51
  %v154 = vunpack.c.l.bf16 %v52
  %v155 = vunpack.c.h.bf16 %v52
  %v156 = vunpack.c.l.bf16 %v53
  %v157 = vunpack.c.h.bf16 %v53
  %v158 = vunpack.c.l.bf16 %v54
  %v159 = vunpack.c.h.bf16 %v54
  %v160 = vunpack.c.l.bf16 %v55
  %v161 = vunpack.c.h.bf16 %v55
  %v162 = vunpack.c.l.bf16 %v56
  %v163 = vunpack.c.h.bf16 %v56
  %v164 = vunpack.c.l.bf16 %v57
  %v165 = vunpack.c.h.bf16 %v57
  %v166 = vunpack.c.l.bf16 %v58
  %v167 = vunpack.c.h.bf16 %v58
  %v168 = vunpack.c.l.bf16 %v59
  %v169 = vunpack.c.h.bf16 %v59
  %v170 = vunpack.c.l.bf16 %v60
  %v171 = vunpack.c.h.bf16 %v60
  %v172 = vunpack.c.l.bf16 %v61
  %v173 = vunpack.c.h.bf16 %v61
  %v174 = vunpack.c.l.bf16 %v62
  %v175 = vunpack.c.h.bf16 %v62
  %v176 = vunpack.c.l.bf16 %v63
  %v177 = vunpack.c.h.bf16 %v63
  %v178 = vunpack.c.l.bf16 %v64
  %v179 = vunpack.c.h.bf16 %v64
  %v180 = vunpack.c.l.bf16 %v65
  %v181 = vunpack.c.h.bf16 %v65
  %v182 = vunpack.c.l.bf16 %v66
  %v183 = vunpack.c.h.bf16 %v66
  %v184 = vunpack.c.l.bf16 %v67
  %v185 = vunpack.c.h.bf16 %v67
  %v186 = vunpack.c.l.bf16 %v68
  %v187 = vunpack.c.h.bf16 %v68
  %v188 = vunpack.c.l.bf16 %v69
  %v189 = vunpack.c.h.bf16 %v69
  %v190 = vunpack.c.l.bf16 %v70
  %v191 = vunpack.c.h.bf16 %v70
  %v192 = vunpack.c.l.bf16 %v71
  %v193 = vunpack.c.h.bf16 %v71
  %v194 = vunpack.c.l.bf16 %v72
  %v195 = vunpack.c.h.bf16 %v72
  %v196 = vunpack.c.l.bf16 %v73
  %v197 = vunpack.c.h.bf16 %v73
  %v198 = vunpack.c.l.bf16 %v74
  %v199 = vunpack.c.h.bf16 %v74
  %v200 = vunpack.c.l.bf16 %v75
  %v201 = vunpack.c.h.bf16 %v75
  %v202 = vunpack.c.l.bf16 %v76
  %v203 = vunpack.c.h.bf16 %v76
  %v204 = vunpack.c.l.bf16 %v77
  %v205 = vunpack.c.h.bf16 %v77
  %v206 = vld [vmem:[%s1] sm:$0xff]
  %v207 = vld [vmem:[%s1 + $0x8] sm:$0xff]
  %v208 = vld [vmem:[%s1 + $0x10] sm:$0xff]
  %v209 = vld [vmem:[%s1 + $0x18] sm:$0xff]
  %v210 = vld [vmem:[%s1 + $0x20] sm:$0xff]
  %v211 = vld [vmem:[%s1 + $0x28] sm:$0xff]
  %v212 = vld [vmem:[%s1 + $0x30] sm:$0xff]
  %v213 = vld [vmem:[%s1 + $0x38] sm:$0xff]
  %v214 = vld [vmem:[%s1 + $0x40] sm:$0xff]
  %v215 = vld [vmem:[%s1 + $0x48] sm:$0xff]
  %v216 = vld [vmem:[%s1 + $0x50] sm:$0xff]
  %v217 = vld [vmem:[%s1 + $0x58] sm:$0xff]
  %v218 = vld [vmem:[%s1 + $0x60] sm:$0xff]
  %v219 = vld [vmem:[%s1 + $0x68] sm:$0xff]
  %v220 = vld [vmem:[%s1 + $0x70] sm:$0xff]
  %v221 = vld [vmem:[%s1 + $0x78] sm:$0xff]
  %v222 = vld [vmem:[%s1 + $0x80] sm:$0xff]
  %v223 = vld [vmem:[%s1 + $0x88] sm:$0xff]
  %v224 = vld [vmem:[%s1 + $0x90] sm:$0xff]
  %v225 = vld [vmem:[%s1 + $0x98] sm:$0xff]
  %v226 = vld [vmem:[%s1 + $0xa0] sm:$0xff]
  %v227 = vld [vmem:[%s1 + $0xa8] sm:$0xff]
  %v228 = vld [vmem:[%s1 + $0xb0] sm:$0xff]
  %v229 = vld [vmem:[%s1 + $0xb8] sm:$0xff]
  %v230 = vld [vmem:[%s1 + $0xc0] sm:$0xff]
  %v231 = vld [vmem:[%s1 + $0xc8] sm:$0xff]
  %v232 = vld [vmem:[%s1 + $0xd0] sm:$0xff]
  %v233 = vld [vmem:[%s1 + $0xd8] sm:$0xff]
  %v234 = vld [vmem:[%s1 + $0xe0] sm:$0xff]
  %v235 = vld [vmem:[%s1 + $0xe8] sm:$0xff]
  %v236 = vld [vmem:[%s1 + $0xf0] sm:$0xff]
  %v237 = vld [vmem:[%s1 + $0xf8] sm:$0xff]
  %238 = vmatprep.subr.mxu0 %v139
  %239 = vmatpush1.msra.mxu0 %v138
  %240 = vmatprep.subr.mxu0 %v135
  %241 = vmatpush1.msra.mxu0 %v134
  %242 = vmatprep.subr.mxu0 %v131
  %243 = vmatpush1.msra.mxu0 %v130
  %244 = vmatprep.subr.mxu0 %v127
  %245 = vmatpush1.msra.mxu0 %v126
  %246 = vmatprep.subr.mxu0 %v123
  %247 = vmatpush1.msra.mxu0 %v122
  %248 = vmatprep.subr.mxu0 %v119
  %249 = vmatpush1.msra.mxu0 %v118
  %250 = vmatprep.subr.mxu0 %v115
  %251 = vmatpush1.msra.mxu0 %v114
  %252 = vmatprep.subr.mxu0 %v111
  %253 = vmatpush1.msra.mxu0 %v110
  %254 = vmatprep.subr.mxu0 %v107
  %255 = vmatpush1.msra.mxu0 %v106
  %256 = vmatprep.subr.mxu0 %v103
  %257 = vmatpush1.msra.mxu0 %v102
  %258 = vmatprep.subr.mxu0 %v99
  %259 = vmatpush1.msra.mxu0 %v98
  %260 = vmatprep.subr.mxu0 %v95
  %261 = vmatpush1.msra.mxu0 %v94
  %262 = vmatprep.subr.mxu0 %v91
  %263 = vmatpush1.msra.mxu0 %v90
  %264 = vmatprep.subr.mxu0 %v87
  %265 = vmatpush1.msra.mxu0 %v86
  %266 = vmatprep.subr.mxu0 %v83
  %267 = vmatpush1.msra.mxu0 %v82
  %268 = vmatprep.subr.mxu0 %v79
  %269 = vmatpush1.msra.mxu0 %v78
  %270 = vmatprep.subr.mxu0 %v203
  %271 = vmatpush2.msra.mxu0 %v202
  %272 = vmatprep.subr.mxu0 %v199
  %273 = vmatpush2.msra.mxu0 %v198
  %274 = vmatprep.subr.mxu0 %v195
  %275 = vmatpush2.msra.mxu0 %v194
  %276 = vmatprep.subr.mxu0 %v191
  %277 = vmatpush2.msra.mxu0 %v190
  %278 = vmatprep.subr.mxu0 %v187
  %279 = vmatpush2.msra.mxu0 %v186
  %280 = vmatprep.subr.mxu0 %v183
  %281 = vmatpush2.msra.mxu0 %v182
  %282 = vmatprep.subr.mxu0 %v179
  %283 = vmatpush2.msra.mxu0 %v178
  %284 = vmatprep.subr.mxu0 %v175
  %285 = vmatpush2.msra.mxu0 %v174
  %286 = vmatprep.subr.mxu0 %v171
  %287 = vmatpush2.msra.mxu0 %v170
  %288 = vmatprep.subr.mxu0 %v167
  %289 = vmatpush2.msra.mxu0 %v166
  %290 = vmatprep.subr.mxu0 %v163
  %291 = vmatpush2.msra.mxu0 %v162
  %292 = vmatprep.subr.mxu0 %v159
  %293 = vmatpush2.msra.mxu0 %v158
  %294 = vmatprep.subr.mxu0 %v155
  %295 = vmatpush2.msra.mxu0 %v154
  %296 = vmatprep.subr.mxu0 %v151
  %297 = vmatpush2.msra.mxu0 %v150
  %298 = vmatprep.subr.mxu0 %v147
  %299 = vmatpush2.msra.mxu0 %v146
  %300 = vmatprep.subr.mxu0 %v143
  %301 = vmatpush2.msra.mxu0 %v142
  %302 = vmatprep.mubr.f32.mxu0 %v207
  %303 = vmatmul.mubr.f32.gmra.mxu0 %v206
  %v304 = vpop.f32.mrf.mxu0
  %v305 = vadd.f32 0.0, %v304
  %v306 = vpop.f32.mrf.mxu0
  %v307 = vadd.f32 0.0, %v306
  %308 = vmatprep.mubr.f32.mxu0 %v209
  %309 = vmatmul.mubr.f32.gmra.mxu0 %v208
  %v310 = vpop.f32.mrf.mxu0
  %v311 = vadd.f32 0.0, %v310
  %v312 = vpop.f32.mrf.mxu0
  %v313 = vadd.f32 0.0, %v312
  %314 = vmatprep.mubr.f32.mxu0 %v211
  %315 = vmatmul.mubr.f32.gmra.mxu0 %v210
  %v316 = vpop.f32.mrf.mxu0
  %v317 = vadd.f32 0.0, %v316
  %v318 = vpop.f32.mrf.mxu0
  %v319 = vadd.f32 0.0, %v318
  %320 = vmatprep.mubr.f32.mxu0 %v213
  %321 = vmatmul.mubr.f32.gmra.mxu0 %v212
  %v322 = vpop.f32.mrf.mxu0
  %v323 = vadd.f32 0.0, %v322
  %v324 = vpop.f32.mrf.mxu0
  %v325 = vadd.f32 0.0, %v324
  %326 = vmatprep.mubr.f32.mxu0 %v215
  %327 = vmatmul.mubr.f32.gmra.mxu0 %v214
  %v328 = vpop.f32.mrf.mxu0
  %v329 = vadd.f32 0.0, %v328
  %v330 = vpop.f32.mrf.mxu0
  %v331 = vadd.f32 0.0, %v330
  %332 = vmatprep.mubr.f32.mxu0 %v217
  %333 = vmatmul.mubr.f32.gmra.mxu0 %v216
  %v334 = vpop.f32.mrf.mxu0
  %v335 = vadd.f32 0.0, %v334
  %v336 = vpop.f32.mrf.mxu0
  %v337 = vadd.f32 0.0, %v336
  %338 = vmatprep.mubr.f32.mxu0 %v219
  %339 = vmatmul.mubr.f32.gmra.mxu0 %v218
  %v340 = vpop.f32.mrf.mxu0
  %v341 = vadd.f32 0.0, %v340
  %v342 = vpop.f32.mrf.mxu0
  %v343 = vadd.f32 0.0, %v342
  %344 = vmatprep.mubr.f32.mxu0 %v221
  %345 = vmatmul.mubr.f32.gmra.mxu0 %v220
  %v346 = vpop.f32.mrf.mxu0
  %v347 = vadd.f32 0.0, %v346
  %v348 = vpop.f32.mrf.mxu0
  %v349 = vadd.f32 0.0, %v348
  %350 = vmatprep.mubr.f32.mxu0 %v223
  %351 = vmatmul.mubr.f32.gmra.mxu0 %v222
  %v352 = vpop.f32.mrf.mxu0
  %v353 = vadd.f32 0.0, %v352
  %v354 = vpop.f32.mrf.mxu0
  %v355 = vadd.f32 0.0, %v354
  %356 = vmatprep.mubr.f32.mxu0 %v225
  %357 = vmatmul.mubr.f32.gmra.mxu0 %v224
  %v358 = vpop.f32.mrf.mxu0
  %v359 = vadd.f32 0.0, %v358
  %v360 = vpop.f32.mrf.mxu0
  %v361 = vadd.f32 0.0, %v360
  %362 = vmatprep.mubr.f32.mxu0 %v227
  %363 = vmatmul.mubr.f32.gmra.mxu0 %v226
  %v364 = vpop.f32.mrf.mxu0
  %v365 = vadd.f32 0.0, %v364
  %v366 = vpop.f32.mrf.mxu0
  %v367 = vadd.f32 0.0, %v366
  %368 = vmatprep.mubr.f32.mxu0 %v229
  %369 = vmatmul.mubr.f32.gmra.mxu0 %v228
  %v370 = vpop.f32.mrf.mxu0
  %v371 = vadd.f32 0.0, %v370
  %v372 = vpop.f32.mrf.mxu0
  %v373 = vadd.f32 0.0, %v372
  %374 = vmatprep.mubr.f32.mxu0 %v231
  %375 = vmatmul.mubr.f32.gmra.mxu0 %v230
  %v376 = vpop.f32.mrf.mxu0
  %v377 = vadd.f32 0.0, %v376
  %v378 = vpop.f32.mrf.mxu0
  %v379 = vadd.f32 0.0, %v378
  %380 = vmatprep.mubr.f32.mxu0 %v233
  %381 = vmatmul.mubr.f32.gmra.mxu0 %v232
  %v382 = vpop.f32.mrf.mxu0
  %v383 = vadd.f32 0.0, %v382
  %v384 = vpop.f32.mrf.mxu0
  %v385 = vadd.f32 0.0, %v384
  %386 = vmatprep.mubr.f32.mxu0 %v235
  %387 = vmatmul.mubr.f32.gmra.mxu0 %v234
  %v388 = vpop.f32.mrf.mxu0
  %v389 = vadd.f32 0.0, %v388
  %v390 = vpop.f32.mrf.mxu0
  %v391 = vadd.f32 0.0, %v390
  %392 = vmatprep.mubr.f32.mxu0 %v237
  %393 = vmatmul.mubr.f32.gmra.mxu0 %v236
  %v394 = vpop.f32.mrf.mxu0
  %v395 = vadd.f32 0.0, %v394
  %v396 = vpop.f32.mrf.mxu0
  %v397 = vadd.f32 0.0, %v396
  %398 = vdwg.mxu0
  %399 = vmatprep.subr.mxu0 %v141
  %400 = vmatpush1.msra.mxu0 %v140
  %401 = vmatprep.subr.mxu0 %v137
  %402 = vmatpush1.msra.mxu0 %v136
  %403 = vmatprep.subr.mxu0 %v133
  %404 = vmatpush1.msra.mxu0 %v132
  %405 = vmatprep.subr.mxu0 %v129
  %406 = vmatpush1.msra.mxu0 %v128
  %407 = vmatprep.subr.mxu0 %v125
  %408 = vmatpush1.msra.mxu0 %v124
  %409 = vmatprep.subr.mxu0 %v121
  %410 = vmatpush1.msra.mxu0 %v120
  %411 = vmatprep.subr.mxu0 %v117
  %412 = vmatpush1.msra.mxu0 %v116
  %413 = vmatprep.subr.mxu0 %v113
  %414 = vmatpush1.msra.mxu0 %v112
  %415 = vmatprep.subr.mxu0 %v109
  %416 = vmatpush1.msra.mxu0 %v108
  %417 = vmatprep.subr.mxu0 %v105
  %418 = vmatpush1.msra.mxu0 %v104
  %419 = vmatprep.subr.mxu0 %v101
  %420 = vmatpush1.msra.mxu0 %v100
  %421 = vmatprep.subr.mxu0 %v97
  %422 = vmatpush1.msra.mxu0 %v96
  %423 = vmatprep.subr.mxu0 %v93
  %424 = vmatpush1.msra.mxu0 %v92
  %425 = vmatprep.subr.mxu0 %v89
  %426 = vmatpush1.msra.mxu0 %v88
  %427 = vmatprep.subr.mxu0 %v85
  %428 = vmatpush1.msra.mxu0 %v84
  %429 = vmatprep.subr.mxu0 %v81
  %430 = vmatpush1.msra.mxu0 %v80
  %431 = vmatprep.subr.mxu0 %v205
  %432 = vmatpush2.msra.mxu0 %v204
  %433 = vmatprep.subr.mxu0 %v201
  %434 = vmatpush2.msra.mxu0 %v200
  %435 = vmatprep.subr.mxu0 %v197
  %436 = vmatpush2.msra.mxu0 %v196
  %437 = vmatprep.subr.mxu0 %v193
  %438 = vmatpush2.msra.mxu0 %v192
  %439 = vmatprep.subr.mxu0 %v189
  %440 = vmatpush2.msra.mxu0 %v188
  %441 = vmatprep.subr.mxu0 %v185
  %442 = vmatpush2.msra.mxu0 %v184
  %443 = vmatprep.subr.mxu0 %v181
  %444 = vmatpush2.msra.mxu0 %v180
  %445 = vmatprep.subr.mxu0 %v177
  %446 = vmatpush2.msra.mxu0 %v176
  %447 = vmatprep.subr.mxu0 %v173
  %448 = vmatpush2.msra.mxu0 %v172
  %449 = vmatprep.subr.mxu0 %v169
  %450 = vmatpush2.msra.mxu0 %v168
  %451 = vmatprep.subr.mxu0 %v165
  %452 = vmatpush2.msra.mxu0 %v164
  %453 = vmatprep.subr.mxu0 %v161
  %454 = vmatpush2.msra.mxu0 %v160
  %455 = vmatprep.subr.mxu0 %v157
  %456 = vmatpush2.msra.mxu0 %v156
  %457 = vmatprep.subr.mxu0 %v153
  %458 = vmatpush2.msra.mxu0 %v152
  %459 = vmatprep.subr.mxu0 %v149
  %460 = vmatpush2.msra.mxu0 %v148
  %461 = vmatprep.subr.mxu0 %v145
  %462 = vmatpush2.msra.mxu0 %v144
  %463 = vmatprep.mubr.f32.mxu0 %v207
  %464 = vmatmul.mubr.f32.gmra.mxu0 %v206
  %v465 = vpop.f32.mrf.mxu0
  %v466 = vadd.f32 0.0, %v465
  %v467 = vpop.f32.mrf.mxu0
  %v468 = vadd.f32 0.0, %v467
  %469 = vmatprep.mubr.f32.mxu0 %v209
  %470 = vmatmul.mubr.f32.gmra.mxu0 %v208
  %v471 = vpop.f32.mrf.mxu0
  %v472 = vadd.f32 0.0, %v471
  %v473 = vpop.f32.mrf.mxu0
  %v474 = vadd.f32 0.0, %v473
  %475 = vmatprep.mubr.f32.mxu0 %v211
  %476 = vmatmul.mubr.f32.gmra.mxu0 %v210
  %v477 = vpop.f32.mrf.mxu0
  %v478 = vadd.f32 0.0, %v477
  %v479 = vpop.f32.mrf.mxu0
  %v480 = vadd.f32 0.0, %v479
  %481 = vmatprep.mubr.f32.mxu0 %v213
  %482 = vmatmul.mubr.f32.gmra.mxu0 %v212
  %v483 = vpop.f32.mrf.mxu0
  %v484 = vadd.f32 0.0, %v483
  %v485 = vpop.f32.mrf.mxu0
  %v486 = vadd.f32 0.0, %v485
  %487 = vmatprep.mubr.f32.mxu0 %v215
  %488 = vmatmul.mubr.f32.gmra.mxu0 %v214
  %v489 = vpop.f32.mrf.mxu0
  %v490 = vadd.f32 0.0, %v489
  %v491 = vpop.f32.mrf.mxu0
  %v492 = vadd.f32 0.0, %v491
  %493 = vmatprep.mubr.f32.mxu0 %v217
  %494 = vmatmul.mubr.f32.gmra.mxu0 %v216
  %v495 = vpop.f32.mrf.mxu0
  %v496 = vadd.f32 0.0, %v495
  %v497 = vpop.f32.mrf.mxu0
  %v498 = vadd.f32 0.0, %v497
  %499 = vmatprep.mubr.f32.mxu0 %v219
  %500 = vmatmul.mubr.f32.gmra.mxu0 %v218
  %v501 = vpop.f32.mrf.mxu0
  %v502 = vadd.f32 0.0, %v501
  %v503 = vpop.f32.mrf.mxu0
  %v504 = vadd.f32 0.0, %v503
  %505 = vmatprep.mubr.f32.mxu0 %v221
  %506 = vmatmul.mubr.f32.gmra.mxu0 %v220
  %v507 = vpop.f32.mrf.mxu0
  %v508 = vadd.f32 0.0, %v507
  %v509 = vpop.f32.mrf.mxu0
  %v510 = vadd.f32 0.0, %v509
  %511 = vmatprep.mubr.f32.mxu0 %v223
  %512 = vmatmul.mubr.f32.gmra.mxu0 %v222
  %v513 = vpop.f32.mrf.mxu0
  %v514 = vadd.f32 0.0, %v513
  %v515 = vpop.f32.mrf.mxu0
  %v516 = vadd.f32 0.0, %v515
  %517 = vmatprep.mubr.f32.mxu0 %v225
  %518 = vmatmul.mubr.f32.gmra.mxu0 %v224
  %v519 = vpop.f32.mrf.mxu0
  %v520 = vadd.f32 0.0, %v519
  %v521 = vpop.f32.mrf.mxu0
  %v522 = vadd.f32 0.0, %v521
  %523 = vmatprep.mubr.f32.mxu0 %v227
  %524 = vmatmul.mubr.f32.gmra.mxu0 %v226
  %v525 = vpop.f32.mrf.mxu0
  %v526 = vadd.f32 0.0, %v525
  %v527 = vpop.f32.mrf.mxu0
  %v528 = vadd.f32 0.0, %v527
  %529 = vmatprep.mubr.f32.mxu0 %v229
  %530 = vmatmul.mubr.f32.gmra.mxu0 %v228
  %v531 = vpop.f32.mrf.mxu0
  %v532 = vadd.f32 0.0, %v531
  %v533 = vpop.f32.mrf.mxu0
  %v534 = vadd.f32 0.0, %v533
  %535 = vmatprep.mubr.f32.mxu0 %v231
  %536 = vmatmul.mubr.f32.gmra.mxu0 %v230
  %v537 = vpop.f32.mrf.mxu0
  %v538 = vadd.f32 0.0, %v537
  %v539 = vpop.f32.mrf.mxu0
  %v540 = vadd.f32 0.0, %v539
  %541 = vmatprep.mubr.f32.mxu0 %v233
  %542 = vmatmul.mubr.f32.gmra.mxu0 %v232
  %v543 = vpop.f32.mrf.mxu0
  %v544 = vadd.f32 0.0, %v543
  %v545 = vpop.f32.mrf.mxu0
  %v546 = vadd.f32 0.0, %v545
  %547 = vmatprep.mubr.f32.mxu0 %v235
  %548 = vmatmul.mubr.f32.gmra.mxu0 %v234
  %v549 = vpop.f32.mrf.mxu0
  %v550 = vadd.f32 0.0, %v549
  %v551 = vpop.f32.mrf.mxu0
  %v552 = vadd.f32 0.0, %v551
  %553 = vmatprep.mubr.f32.mxu0 %v237
  %554 = vmatmul.mubr.f32.gmra.mxu0 %v236
  %v555 = vpop.f32.mrf.mxu0
  %v556 = vadd.f32 0.0, %v555
  %v557 = vpop.f32.mrf.mxu0
  %v558 = vadd.f32 0.0, %v557
  %559 = vdwg.mxu0
  %v560 = vmax.f32 %v305, %v307
  %v561 = vmax.f32 %v311, %v313
  %v562 = vmax.f32 %v317, %v319
  %v563 = vmax.f32 %v323, %v325
  %v564 = vmax.f32 %v329, %v331
  %v565 = vmax.f32 %v335, %v337
  %v566 = vmax.f32 %v341, %v343
  %v567 = vmax.f32 %v347, %v349
  %v568 = vmax.f32 %v353, %v355
  %v569 = vmax.f32 %v359, %v361
  %v570 = vmax.f32 %v365, %v367
  %v571 = vmax.f32 %v371, %v373
  %v572 = vmax.f32 %v377, %v379
  %v573 = vmax.f32 %v383, %v385
  %v574 = vmax.f32 %v389, %v391
  %v575 = vmax.f32 %v395, %v397
  %v576 = vmax.f32 %v466, %v468
  %v577 = vmax.f32 %v472, %v474
  %v578 = vmax.f32 %v478, %v480
  %v579 = vmax.f32 %v484, %v486
  %v580 = vmax.f32 %v490, %v492
  %v581 = vmax.f32 %v496, %v498
  %v582 = vmax.f32 %v502, %v504
  %v583 = vmax.f32 %v508, %v510
  %v584 = vmax.f32 %v514, %v516
  %v585 = vmax.f32 %v520, %v522
  %v586 = vmax.f32 %v526, %v528
  %v587 = vmax.f32 %v532, %v534
  %v588 = vmax.f32 %v538, %v540
  %v589 = vmax.f32 %v544, %v546
  %v590 = vmax.f32 %v550, %v552
  %v591 = vmax.f32 %v556, %v558
  %v592 = vmax.f32 %v560, %v576
  %v593 = vmax.f32 %v561, %v577
  %v594 = vmax.f32 %v562, %v578
  %v595 = vmax.f32 %v563, %v579
  %v596 = vmax.f32 %v564, %v580
  %v597 = vmax.f32 %v565, %v581
  %v598 = vmax.f32 %v566, %v582
  %v599 = vmax.f32 %v567, %v583
  %v600 = vmax.f32 %v568, %v584
  %v601 = vmax.f32 %v569, %v585
  %v602 = vmax.f32 %v570, %v586
  %v603 = vmax.f32 %v571, %v587
  %v604 = vmax.f32 %v572, %v588
  %v605 = vmax.f32 %v573, %v589
  %v606 = vmax.f32 %v574, %v590
  %v607 = vmax.f32 %v575, %v591
  %v608 = vld [vmem:[%s2] sm:$0xff]
  %v609 = vld [vmem:[%s2 + $0x8] sm:$0xff]
  %v610 = vld [vmem:[%s2 + $0x10] sm:$0xff]
  %v611 = vld [vmem:[%s2 + $0x18] sm:$0xff]
  %v612 = vld [vmem:[%s2 + $0x20] sm:$0xff]
  %v613 = vld [vmem:[%s2 + $0x28] sm:$0xff]
  %v614 = vld [vmem:[%s2 + $0x30] sm:$0xff]
  %v615 = vld [vmem:[%s2 + $0x38] sm:$0xff]
  %v616 = vld [vmem:[%s2 + $0x40] sm:$0xff]
  %v617 = vld [vmem:[%s2 + $0x48] sm:$0xff]
  %v618 = vld [vmem:[%s2 + $0x50] sm:$0xff]
  %v619 = vld [vmem:[%s2 + $0x58] sm:$0xff]
  %v620 = vld [vmem:[%s2 + $0x60] sm:$0xff]
  %v621 = vld [vmem:[%s2 + $0x68] sm:$0xff]
  %v622 = vld [vmem:[%s2 + $0x70] sm:$0xff]
  %v623 = vld [vmem:[%s2 + $0x78] sm:$0xff]
  %625 = vset.pattern.permute.xlu0 0
  %626 = vperm.xlu0 %625, %v608
  %v627 = vpop.permute.xlu0 %626
  %630 = vset.pattern.permute.xlu0 0
  %631 = vperm.xlu0 %630, %v609
  %v632 = vpop.permute.xlu0 %631
  %635 = vset.pattern.permute.xlu0 0
  %636 = vperm.xlu0 %635, %v610
  %v637 = vpop.permute.xlu0 %636
  %640 = vset.pattern.permute.xlu0 0
  %641 = vperm.xlu0 %640, %v611
  %v642 = vpop.permute.xlu0 %641
  %645 = vset.pattern.permute.xlu0 0
  %646 = vperm.xlu0 %645, %v612
  %v647 = vpop.permute.xlu0 %646
  %650 = vset.pattern.permute.xlu0 0
  %651 = vperm.xlu0 %650, %v613
  %v652 = vpop.permute.xlu0 %651
  %655 = vset.pattern.permute.xlu0 0
  %656 = vperm.xlu0 %655, %v614
  %v657 = vpop.permute.xlu0 %656
  %660 = vset.pattern.permute.xlu0 0
  %661 = vperm.xlu0 %660, %v615
  %v662 = vpop.permute.xlu0 %661
  %665 = vset.pattern.permute.xlu0 0
  %666 = vperm.xlu0 %665, %v616
  %v667 = vpop.permute.xlu0 %666
  %670 = vset.pattern.permute.xlu0 0
  %671 = vperm.xlu0 %670, %v617
  %v672 = vpop.permute.xlu0 %671
  %675 = vset.pattern.permute.xlu0 0
  %676 = vperm.xlu0 %675, %v618
  %v677 = vpop.permute.xlu0 %676
  %680 = vset.pattern.permute.xlu0 0
  %681 = vperm.xlu0 %680, %v619
  %v682 = vpop.permute.xlu0 %681
  %685 = vset.pattern.permute.xlu0 0
  %686 = vperm.xlu0 %685, %v620
  %v687 = vpop.permute.xlu0 %686
  %690 = vset.pattern.permute.xlu0 0
  %691 = vperm.xlu0 %690, %v621
  %v692 = vpop.permute.xlu0 %691
  %695 = vset.pattern.permute.xlu0 0
  %696 = vperm.xlu0 %695, %v622
  %v697 = vpop.permute.xlu0 %696
  %700 = vset.pattern.permute.xlu0 0
  %701 = vperm.xlu0 %700, %v623
  %v702 = vpop.permute.xlu0 %701
  %v704 = vadd.f32 %v592, %v627
  %v705 = vadd.f32 %v593, %v632
  %v706 = vadd.f32 %v594, %v637
  %v707 = vadd.f32 %v595, %v642
  %v708 = vadd.f32 %v596, %v647
  %v709 = vadd.f32 %v597, %v652
  %v710 = vadd.f32 %v598, %v657
  %v711 = vadd.f32 %v599, %v662
  %v712 = vadd.f32 %v600, %v667
  %v713 = vadd.f32 %v601, %v672
  %v714 = vadd.f32 %v602, %v677
  %v715 = vadd.f32 %v603, %v682
  %v716 = vadd.f32 %v604, %v687
  %v717 = vadd.f32 %v605, %v692
  %v718 = vadd.f32 %v606, %v697
  %v719 = vadd.f32 %v607, %v702
  %v720 = vmax.f32 %v704, 0.0
  %v721 = vmax.f32 %v705, 0.0
  %v722 = vmax.f32 %v706, 0.0
  %v723 = vmax.f32 %v707, 0.0
  %v724 = vmax.f32 %v708, 0.0
  %v725 = vmax.f32 %v709, 0.0
  %v726 = vmax.f32 %v710, 0.0
  %v727 = vmax.f32 %v711, 0.0
  %v728 = vmax.f32 %v712, 0.0
  %v729 = vmax.f32 %v713, 0.0
  %v730 = vmax.f32 %v714, 0.0
  %v731 = vmax.f32 %v715, 0.0
  %v732 = vmax.f32 %v716, 0.0
  %v733 = vmax.f32 %v717, 0.0
  %v734 = vmax.f32 %v718, 0.0
  %v735 = vmax.f32 %v719, 0.0
  %v736 = vpack.c.bf16 %v721, %v720
  %v737 = vpack.c.bf16 %v723, %v722
  %v738 = vpack.c.bf16 %v725, %v724
  %v739 = vpack.c.bf16 %v727, %v726
  %v740 = vpack.c.bf16 %v729, %v728
  %v741 = vpack.c.bf16 %v731, %v730
  %v742 = vpack.c.bf16 %v733, %v732
  %v743 = vpack.c.bf16 %v735, %v734
  %v752 = vunpack.c.l.b16 %v736
  %v753 = vunpack.c.h.b16 %v736
  %v754 = vunpack.c.l.b16 %v737
  %v755 = vunpack.c.h.b16 %v737
  %v756 = vunpack.c.l.b16 %v738
  %v757 = vunpack.c.h.b16 %v738
  %v758 = vunpack.c.l.b16 %v739
  %v759 = vunpack.c.h.b16 %v739
  %v760 = vunpack.c.l.b16 %v740
  %v761 = vunpack.c.h.b16 %v740
  %v762 = vunpack.c.l.b16 %v741
  %v763 = vunpack.c.h.b16 %v741
  %v764 = vunpack.c.l.b16 %v742
  %v765 = vunpack.c.h.b16 %v742
  %v766 = vunpack.c.l.b16 %v743
  %v767 = vunpack.c.h.b16 %v743
  %v768 = vpack.c.b16 %v752, %v752
  %v769 = vpack.c.b16 %v753, %v753
  %v770 = vpack.c.b16 %v754, %v754
  %v771 = vpack.c.b16 %v755, %v755
  %v772 = vpack.c.b16 %v756, %v756
  %v773 = vpack.c.b16 %v757, %v757
  %v774 = vpack.c.b16 %v758, %v758
  %v775 = vpack.c.b16 %v759, %v759
  %v776 = vpack.c.b16 %v760, %v760
  %v777 = vpack.c.b16 %v761, %v761
  %v778 = vpack.c.b16 %v762, %v762
  %v779 = vpack.c.b16 %v763, %v763
  %v780 = vpack.c.b16 %v764, %v764
  %v781 = vpack.c.b16 %v765, %v765
  %v782 = vpack.c.b16 %v766, %v766
  %v783 = vpack.c.b16 %v767, %v767
  %800 = vst [vmem:[%s3] sm:$0xf] %v768
  %801 = vst [vmem:[%s3 + $0x4] sm:$0xf] %v769
  %802 = vst [vmem:[%s3 + $0x8] sm:$0xf] %v770
  %803 = vst [vmem:[%s3 + $0xc] sm:$0xf] %v771
  %804 = vst [vmem:[%s3 + $0x10] sm:$0xf] %v772
  %805 = vst [vmem:[%s3 + $0x14] sm:$0xf] %v773
  %806 = vst [vmem:[%s3 + $0x18] sm:$0xf] %v774
  %807 = vst [vmem:[%s3 + $0x1c] sm:$0xf] %v775
  %808 = vst [vmem:[%s3 + $0x20] sm:$0xf] %v776
  %809 = vst [vmem:[%s3 + $0x24] sm:$0xf] %v777
  %810 = vst [vmem:[%s3 + $0x28] sm:$0xf] %v778
  %811 = vst [vmem:[%s3 + $0x2c] sm:$0xf] %v779
  %812 = vst [vmem:[%s3 + $0x30] sm:$0xf] %v780
  %813 = vst [vmem:[%s3 + $0x34] sm:$0xf] %v781
  %814 = vst [vmem:[%s3 + $0x38] sm:$0xf] %v782
  %815 = vst [vmem:[%s3 + $0x3c] sm:$0xf] %v783
  // Predicated region
  $region14: #{scalo_cnn_forward.8} parent=0 // pred_check
    _
  $region15: #{scalo_cnn_forward.8} parent=0 // pred_check_branch
    %817 = sbr.rel (0) target = $region17
  $region16: #{scalo_cnn_forward.8} parent=0 // pred_region
    _
  $region17: #{scalo_cnn_forward.8} parent=0 // pred_fallthru
    _
  // Predicated region
  $region18: #{scalo_cnn_forward.8} parent=0 // pred_check
    _
  $region19: #{scalo_cnn_forward.8} parent=0 // pred_check_branch
    %819 = sbr.rel (0) target = $region21
  $region20: #{scalo_cnn_forward.8} parent=0 // pred_region
    _
  $region21: #{scalo_cnn_forward.8} parent=0 // pred_fallthru
    _

// kernel: scalo_cnn_forward.9
$region0: #{scalo_cnn_forward.9}
  #allocation0 [shape = 'u32[]', space=smem, size = 0x4, offset = 0x4, fixed_abs, tag = 'smem constant byte address 0x4 - core index']
  #allocation1 [shape = 'u32[144,128]{1,0:T(1,128)}', space=vmem, size = 0x12000, scoped, tag = 'internal scratch']
  %s0 = inlined_call_operand.vmem [shape: bf16[1,512,512], index: 0, kind: input, shape index: {}]
  %s1 = inlined_call_operand.vmem [shape: f32[256,512], index: 1, kind: input, shape index: {}]
  %s2 = inlined_call_operand.vmem [shape: f32[256,1], index: 2, kind: input, shape index: {}]
  %s3 = inlined_call_operand.vmem [shape: f32[256,128], index: 3, kind: output, shape index: {}]
  %s4 = sld [smem:[#allocation0]]
  $region22: #{scalo_cnn_forward.9} parent=0
    _
  %s6 = ssub.s32 1, %s4
  %s7 = scalar_select 0, %s6, %s4
  // Predicated region
  $region2: #{scalo_cnn_forward.9} parent=0 // pred_check
    _
  $region3: #{scalo_cnn_forward.9} parent=0 // pred_check_branch
    %9 = sbr.rel (0) target = $region5
  $region4: #{scalo_cnn_forward.9} parent=0 // pred_region
    _
  $region5: #{scalo_cnn_forward.9} parent=0 // pred_fallthru
    _
  // Predicated region
  $region6: #{scalo_cnn_forward.9} parent=0 // pred_check
    _
  $region7: #{scalo_cnn_forward.9} parent=0 // pred_check_branch
    %11 = sbr.rel (0) target = $region9
  $region8: #{scalo_cnn_forward.9} parent=0 // pred_region
    _
  $region9: #{scalo_cnn_forward.9} parent=0 // pred_fallthru
    _
  // Predicated region
  $region10: #{scalo_cnn_forward.9} parent=0 // pred_check
    _
  $region11: #{scalo_cnn_forward.9} parent=0 // pred_check_branch
    %13 = sbr.rel (0) target = $region13
  $region12: #{scalo_cnn_forward.9} parent=0 // pred_region
    _
  $region13: #{scalo_cnn_forward.9} parent=0 // pred_fallthru
    _
  %v14 = vld [vmem:[%s0] sm:$0xff]
  %v15 = vld [vmem:[%s0 + $0x8] sm:$0xff]
  %v16 = vld [vmem:[%s0 + $0x10] sm:$0xff]
  %v17 = vld [vmem:[%s0 + $0x18] sm:$0xff]
  %v18 = vld [vmem:[%s0 + $0x20] sm:$0xff]
  %v19 = vld [vmem:[%s0 + $0x28] sm:$0xff]
  %v20 = vld [vmem:[%s0 + $0x30] sm:$0xff]
  %v21 = vld [vmem:[%s0 + $0x38] sm:$0xff]
  %v22 = vld [vmem:[%s0 + $0x40] sm:$0xff]
  %v23 = vld [vmem:[%s0 + $0x48] sm:$0xff]
  %v24 = vld [vmem:[%s0 + $0x50] sm:$0xff]
  %v25 = vld [vmem:[%s0 + $0x58] sm:$0xff]
  %v26 = vld [vmem:[%s0 + $0x60] sm:$0xff]
  %v27 = vld [vmem:[%s0 + $0x68] sm:$0xff]
  %v28 = vld [vmem:[%s0 + $0x70] sm:$0xff]
  %v29 = vld [vmem:[%s0 + $0x78] sm:$0xff]
  %v30 = vld [vmem:[%s0 + $0x80] sm:$0xff]
  %v31 = vld [vmem:[%s0 + $0x88] sm:$0xff]
  %v32 = vld [vmem:[%s0 + $0x90] sm:$0xff]
  %v33 = vld [vmem:[%s0 + $0x98] sm:$0xff]
  %v34 = vld [vmem:[%s0 + $0xa0] sm:$0xff]
  %v35 = vld [vmem:[%s0 + $0xa8] sm:$0xff]
  %v36 = vld [vmem:[%s0 + $0xb0] sm:$0xff]
  %v37 = vld [vmem:[%s0 + $0xb8] sm:$0xff]
  %v38 = vld [vmem:[%s0 + $0xc0] sm:$0xff]
  %v39 = vld [vmem:[%s0 + $0xc8] sm:$0xff]
  %v40 = vld [vmem:[%s0 + $0xd0] sm:$0xff]
  %v41 = vld [vmem:[%s0 + $0xd8] sm:$0xff]
  %v42 = vld [vmem:[%s0 + $0xe0] sm:$0xff]
  %v43 = vld [vmem:[%s0 + $0xe8] sm:$0xff]
  %v44 = vld [vmem:[%s0 + $0xf0] sm:$0xff]
  %v45 = vld [vmem:[%s0 + $0xf8] sm:$0xff]
  %v46 = vld [vmem:[%s0 + $0x100] sm:$0xff]
  %v47 = vld [vmem:[%s0 + $0x108] sm:$0xff]
  %v48 = vld [vmem:[%s0 + $0x110] sm:$0xff]
  %v49 = vld [vmem:[%s0 + $0x118] sm:$0xff]
  %v50 = vld [vmem:[%s0 + $0x120] sm:$0xff]
  %v51 = vld [vmem:[%s0 + $0x128] sm:$0xff]
  %v52 = vld [vmem:[%s0 + $0x130] sm:$0xff]
  %v53 = vld [vmem:[%s0 + $0x138] sm:$0xff]
  %v54 = vld [vmem:[%s0 + $0x140] sm:$0xff]
  %v55 = vld [vmem:[%s0 + $0x148] sm:$0xff]
  %v56 = vld [vmem:[%s0 + $0x150] sm:$0xff]
  %v57 = vld [vmem:[%s0 + $0x158] sm:$0xff]
  %v58 = vld [vmem:[%s0 + $0x160] sm:$0xff]
  %v59 = vld [vmem:[%s0 + $0x168] sm:$0xff]
  %v60 = vld [vmem:[%s0 + $0x170] sm:$0xff]
  %v61 = vld [vmem:[%s0 + $0x178] sm:$0xff]
  %v62 = vld [vmem:[%s0 + $0x180] sm:$0xff]
  %v63 = vld [vmem:[%s0 + $0x188] sm:$0xff]
  %v64 = vld [vmem:[%s0 + $0x190] sm:$0xff]
  %v65 = vld [vmem:[%s0 + $0x198] sm:$0xff]
  %v66 = vld [vmem:[%s0 + $0x1a0] sm:$0xff]
  %v67 = vld [vmem:[%s0 + $0x1a8] sm:$0xff]
  %v68 = vld [vmem:[%s0 + $0x1b0] sm:$0xff]
  %v69 = vld [vmem:[%s0 + $0x1b8] sm:$0xff]
  %v70 = vld [vmem:[%s0 + $0x1c0] sm:$0xff]
  %v71 = vld [vmem:[%s0 + $0x1c8] sm:$0xff]
  %v72 = vld [vmem:[%s0 + $0x1d0] sm:$0xff]
  %v73 = vld [vmem:[%s0 + $0x1d8] sm:$0xff]
  %v74 = vld [vmem:[%s0 + $0x1e0] sm:$0xff]
  %v75 = vld [vmem:[%s0 + $0x1e8] sm:$0xff]
  %v76 = vld [vmem:[%s0 + $0x1f0] sm:$0xff]
  %v77 = vld [vmem:[%s0 + $0x1f8] sm:$0xff]
  %v78 = vld [vmem:[%s0 + $0x200] sm:$0xff]
  %v79 = vld [vmem:[%s0 + $0x208] sm:$0xff]
  %v80 = vld [vmem:[%s0 + $0x210] sm:$0xff]
  %v81 = vld [vmem:[%s0 + $0x218] sm:$0xff]
  %v82 = vld [vmem:[%s0 + $0x220] sm:$0xff]
  %v83 = vld [vmem:[%s0 + $0x228] sm:$0xff]
  %v84 = vld [vmem:[%s0 + $0x230] sm:$0xff]
  %v85 = vld [vmem:[%s0 + $0x238] sm:$0xff]
  %v86 = vld [vmem:[%s0 + $0x240] sm:$0xff]
  %v87 = vld [vmem:[%s0 + $0x248] sm:$0xff]
  %v88 = vld [vmem:[%s0 + $0x250] sm:$0xff]
  %v89 = vld [vmem:[%s0 + $0x258] sm:$0xff]
  %v90 = vld [vmem:[%s0 + $0x260] sm:$0xff]
  %v91 = vld [vmem:[%s0 + $0x268] sm:$0xff]
  %v92 = vld [vmem:[%s0 + $0x270] sm:$0xff]
  %v93 = vld [vmem:[%s0 + $0x278] sm:$0xff]
  %v94 = vld [vmem:[%s0 + $0x280] sm:$0xff]
  %v95 = vld [vmem:[%s0 + $0x288] sm:$0xff]
  %v96 = vld [vmem:[%s0 + $0x290] sm:$0xff]
  %v97 = vld [vmem:[%s0 + $0x298] sm:$0xff]
  %v98 = vld [vmem:[%s0 + $0x2a0] sm:$0xff]
  %v99 = vld [vmem:[%s0 + $0x2a8] sm:$0xff]
  %v100 = vld [vmem:[%s0 + $0x2b0] sm:$0xff]
  %v101 = vld [vmem:[%s0 + $0x2b8] sm:$0xff]
  %v102 = vld [vmem:[%s0 + $0x2c0] sm:$0xff]
  %v103 = vld [vmem:[%s0 + $0x2c8] sm:$0xff]
  %v104 = vld [vmem:[%s0 + $0x2d0] sm:$0xff]
  %v105 = vld [vmem:[%s0 + $0x2d8] sm:$0xff]
  %v106 = vld [vmem:[%s0 + $0x2e0] sm:$0xff]
  %v107 = vld [vmem:[%s0 + $0x2e8] sm:$0xff]
  %v108 = vld [vmem:[%s0 + $0x2f0] sm:$0xff]
  %v109 = vld [vmem:[%s0 + $0x2f8] sm:$0xff]
  %v110 = vld [vmem:[%s0 + $0x300] sm:$0xff]
  %v111 = vld [vmem:[%s0 + $0x308] sm:$0xff]
  %v112 = vld [vmem:[%s0 + $0x310] sm:$0xff]
  %v113 = vld [vmem:[%s0 + $0x318] sm:$0xff]
  %v114 = vld [vmem:[%s0 + $0x320] sm:$0xff]
  %v115 = vld [vmem:[%s0 + $0x328] sm:$0xff]
  %v116 = vld [vmem:[%s0 + $0x330] sm:$0xff]
  %v117 = vld [vmem:[%s0 + $0x338] sm:$0xff]
  %v118 = vld [vmem:[%s0 + $0x340] sm:$0xff]
  %v119 = vld [vmem:[%s0 + $0x348] sm:$0xff]
  %v120 = vld [vmem:[%s0 + $0x350] sm:$0xff]
  %v121 = vld [vmem:[%s0 + $0x358] sm:$0xff]
  %v122 = vld [vmem:[%s0 + $0x360] sm:$0xff]
  %v123 = vld [vmem:[%s0 + $0x368] sm:$0xff]
  %v124 = vld [vmem:[%s0 + $0x370] sm:$0xff]
  %v125 = vld [vmem:[%s0 + $0x378] sm:$0xff]
  %v126 = vld [vmem:[%s0 + $0x380] sm:$0xff]
  %v127 = vld [vmem:[%s0 + $0x388] sm:$0xff]
  %v128 = vld [vmem:[%s0 + $0x390] sm:$0xff]
  %v129 = vld [vmem:[%s0 + $0x398] sm:$0xff]
  %v130 = vld [vmem:[%s0 + $0x3a0] sm:$0xff]
  %v131 = vld [vmem:[%s0 + $0x3a8] sm:$0xff]
  %v132 = vld [vmem:[%s0 + $0x3b0] sm:$0xff]
  %v133 = vld [vmem:[%s0 + $0x3b8] sm:$0xff]
  %v134 = vld [vmem:[%s0 + $0x3c0] sm:$0xff]
  %v135 = vld [vmem:[%s0 + $0x3c8] sm:$0xff]
  %v136 = vld [vmem:[%s0 + $0x3d0] sm:$0xff]
  %v137 = vld [vmem:[%s0 + $0x3d8] sm:$0xff]
  %v138 = vld [vmem:[%s0 + $0x3e0] sm:$0xff]
  %v139 = vld [vmem:[%s0 + $0x3e8] sm:$0xff]
  %v140 = vld [vmem:[%s0 + $0x3f0] sm:$0xff]
  %v141 = vld [vmem:[%s0 + $0x3f8] sm:$0xff]
  %v142 = vunpack.c.l.bf16 %v14
  %v143 = vunpack.c.h.bf16 %v14
  %v144 = vunpack.c.l.bf16 %v15
  %v145 = vunpack.c.h.bf16 %v15
  %v146 = vunpack.c.l.bf16 %v16
  %v147 = vunpack.c.h.bf16 %v16
  %v148 = vunpack.c.l.bf16 %v17
  %v149 = vunpack.c.h.bf16 %v17
  %v150 = vunpack.c.l.bf16 %v18
  %v151 = vunpack.c.h.bf16 %v18
  %v152 = vunpack.c.l.bf16 %v19
  %v153 = vunpack.c.h.bf16 %v19
  %v154 = vunpack.c.l.bf16 %v20
  %v155 = vunpack.c.h.bf16 %v20
  %v156 = vunpack.c.l.bf16 %v21
  %v157 = vunpack.c.h.bf16 %v21
  %v158 = vunpack.c.l.bf16 %v22
  %v159 = vunpack.c.h.bf16 %v22
  %v160 = vunpack.c.l.bf16 %v23
  %v161 = vunpack.c.h.bf16 %v23
  %v162 = vunpack.c.l.bf16 %v24
  %v163 = vunpack.c.h.bf16 %v24
  %v164 = vunpack.c.l.bf16 %v25
  %v165 = vunpack.c.h.bf16 %v25
  %v166 = vunpack.c.l.bf16 %v26
  %v167 = vunpack.c.h.bf16 %v26
  %v168 = vunpack.c.l.bf16 %v27
  %v169 = vunpack.c.h.bf16 %v27
  %v170 = vunpack.c.l.bf16 %v28
  %v171 = vunpack.c.h.bf16 %v28
  %v172 = vunpack.c.l.bf16 %v29
  %v173 = vunpack.c.h.bf16 %v29
  %v174 = vunpack.c.l.bf16 %v30
  %v175 = vunpack.c.h.bf16 %v30
  %v176 = vunpack.c.l.bf16 %v31
  %v177 = vunpack.c.h.bf16 %v31
  %v178 = vunpack.c.l.bf16 %v32
  %v179 = vunpack.c.h.bf16 %v32
  %v180 = vunpack.c.l.bf16 %v33
  %v181 = vunpack.c.h.bf16 %v33
  %v182 = vunpack.c.l.bf16 %v34
  %v183 = vunpack.c.h.bf16 %v34
  %v184 = vunpack.c.l.bf16 %v35
  %v185 = vunpack.c.h.bf16 %v35
  %v186 = vunpack.c.l.bf16 %v36
  %v187 = vunpack.c.h.bf16 %v36
  %v188 = vunpack.c.l.bf16 %v37
  %v189 = vunpack.c.h.bf16 %v37
  %v190 = vunpack.c.l.bf16 %v38
  %v191 = vunpack.c.h.bf16 %v38
  %v192 = vunpack.c.l.bf16 %v39
  %v193 = vunpack.c.h.bf16 %v39
  %v194 = vunpack.c.l.bf16 %v40
  %v195 = vunpack.c.h.bf16 %v40
  %v196 = vunpack.c.l.bf16 %v41
  %v197 = vunpack.c.h.bf16 %v41
  %v198 = vunpack.c.l.bf16 %v42
  %v199 = vunpack.c.h.bf16 %v42
  %v200 = vunpack.c.l.bf16 %v43
  %v201 = vunpack.c.h.bf16 %v43
  %v202 = vunpack.c.l.bf16 %v44
  %v203 = vunpack.c.h.bf16 %v44
  %v204 = vunpack.c.l.bf16 %v45
  %v205 = vunpack.c.h.bf16 %v45
  %v206 = vunpack.c.l.bf16 %v46
  %v207 = vunpack.c.h.bf16 %v46
  %v208 = vunpack.c.l.bf16 %v47
  %v209 = vunpack.c.h.bf16 %v47
  %v210 = vunpack.c.l.bf16 %v48
  %v211 = vunpack.c.h.bf16 %v48
  %v212 = vunpack.c.l.bf16 %v49
  %v213 = vunpack.c.h.bf16 %v49
  %v214 = vunpack.c.l.bf16 %v50
  %v215 = vunpack.c.h.bf16 %v50
  %v216 = vunpack.c.l.bf16 %v51
  %v217 = vunpack.c.h.bf16 %v51
  %v218 = vunpack.c.l.bf16 %v52
  %v219 = vunpack.c.h.bf16 %v52
  %v220 = vunpack.c.l.bf16 %v53
  %v221 = vunpack.c.h.bf16 %v53
  %v222 = vunpack.c.l.bf16 %v54
  %v223 = vunpack.c.h.bf16 %v54
  %v224 = vunpack.c.l.bf16 %v55
  %v225 = vunpack.c.h.bf16 %v55
  %v226 = vunpack.c.l.bf16 %v56
  %v227 = vunpack.c.h.bf16 %v56
  %v228 = vunpack.c.l.bf16 %v57
  %v229 = vunpack.c.h.bf16 %v57
  %v230 = vunpack.c.l.bf16 %v58
  %v231 = vunpack.c.h.bf16 %v58
  %v232 = vunpack.c.l.bf16 %v59
  %v233 = vunpack.c.h.bf16 %v59
  %v234 = vunpack.c.l.bf16 %v60
  %v235 = vunpack.c.h.bf16 %v60
  %v236 = vunpack.c.l.bf16 %v61
  %v237 = vunpack.c.h.bf16 %v61
  %v238 = vunpack.c.l.bf16 %v62
  %v239 = vunpack.c.h.bf16 %v62
  %v240 = vunpack.c.l.bf16 %v63
  %v241 = vunpack.c.h.bf16 %v63
  %v242 = vunpack.c.l.bf16 %v64
  %v243 = vunpack.c.h.bf16 %v64
  %v244 = vunpack.c.l.bf16 %v65
  %v245 = vunpack.c.h.bf16 %v65
  %v246 = vunpack.c.l.bf16 %v66
  %v247 = vunpack.c.h.bf16 %v66
  %v248 = vunpack.c.l.bf16 %v67
  %v249 = vunpack.c.h.bf16 %v67
  %v250 = vunpack.c.l.bf16 %v68
  %v251 = vunpack.c.h.bf16 %v68
  %v252 = vunpack.c.l.bf16 %v69
  %v253 = vunpack.c.h.bf16 %v69
  %v254 = vunpack.c.l.bf16 %v70
  %v255 = vunpack.c.h.bf16 %v70
  %v256 = vunpack.c.l.bf16 %v71
  %v257 = vunpack.c.h.bf16 %v71
  %v258 = vunpack.c.l.bf16 %v72
  %v259 = vunpack.c.h.bf16 %v72
  %v260 = vunpack.c.l.bf16 %v73
  %v261 = vunpack.c.h.bf16 %v73
  %v262 = vunpack.c.l.bf16 %v74
  %v263 = vunpack.c.h.bf16 %v74
  %v264 = vunpack.c.l.bf16 %v75
  %v265 = vunpack.c.h.bf16 %v75
  %v266 = vunpack.c.l.bf16 %v76
  %v267 = vunpack.c.h.bf16 %v76
  %v268 = vunpack.c.l.bf16 %v77
  %v269 = vunpack.c.h.bf16 %v77
  %v270 = vunpack.c.l.bf16 %v78
  %v271 = vunpack.c.h.bf16 %v78
  %v272 = vunpack.c.l.bf16 %v79
  %v273 = vunpack.c.h.bf16 %v79
  %v274 = vunpack.c.l.bf16 %v80
  %v275 = vunpack.c.h.bf16 %v80
  %v276 = vunpack.c.l.bf16 %v81
  %v277 = vunpack.c.h.bf16 %v81
  %v278 = vunpack.c.l.bf16 %v82
  %v279 = vunpack.c.h.bf16 %v82
  %v280 = vunpack.c.l.bf16 %v83
  %v281 = vunpack.c.h.bf16 %v83
  %v282 = vunpack.c.l.bf16 %v84
  %v283 = vunpack.c.h.bf16 %v84
  %v284 = vunpack.c.l.bf16 %v85
  %v285 = vunpack.c.h.bf16 %v85
  %v286 = vunpack.c.l.bf16 %v86
  %v287 = vunpack.c.h.bf16 %v86
  %v288 = vunpack.c.l.bf16 %v87
  %v289 = vunpack.c.h.bf16 %v87
  %v290 = vunpack.c.l.bf16 %v88
  %v291 = vunpack.c.h.bf16 %v88
  %v292 = vunpack.c.l.bf16 %v89
  %v293 = vunpack.c.h.bf16 %v89
  %v294 = vunpack.c.l.bf16 %v90
  %v295 = vunpack.c.h.bf16 %v90
  %v296 = vunpack.c.l.bf16 %v91
  %v297 = vunpack.c.h.bf16 %v91
  %v298 = vunpack.c.l.bf16 %v92
  %v299 = vunpack.c.h.bf16 %v92
  %v300 = vunpack.c.l.bf16 %v93
  %v301 = vunpack.c.h.bf16 %v93
  %v302 = vunpack.c.l.bf16 %v94
  %v303 = vunpack.c.h.bf16 %v94
  %v304 = vunpack.c.l.bf16 %v95
  %v305 = vunpack.c.h.bf16 %v95
  %v306 = vunpack.c.l.bf16 %v96
  %v307 = vunpack.c.h.bf16 %v96
  %v308 = vunpack.c.l.bf16 %v97
  %v309 = vunpack.c.h.bf16 %v97
  %v310 = vunpack.c.l.bf16 %v98
  %v311 = vunpack.c.h.bf16 %v98
  %v312 = vunpack.c.l.bf16 %v99
  %v313 = vunpack.c.h.bf16 %v99
  %v314 = vunpack.c.l.bf16 %v100
  %v315 = vunpack.c.h.bf16 %v100
  %v316 = vunpack.c.l.bf16 %v101
  %v317 = vunpack.c.h.bf16 %v101
  %v318 = vunpack.c.l.bf16 %v102
  %v319 = vunpack.c.h.bf16 %v102
  %v320 = vunpack.c.l.bf16 %v103
  %v321 = vunpack.c.h.bf16 %v103
  %v322 = vunpack.c.l.bf16 %v104
  %v323 = vunpack.c.h.bf16 %v104
  %v324 = vunpack.c.l.bf16 %v105
  %v325 = vunpack.c.h.bf16 %v105
  %v326 = vunpack.c.l.bf16 %v106
  %v327 = vunpack.c.h.bf16 %v106
  %v328 = vunpack.c.l.bf16 %v107
  %v329 = vunpack.c.h.bf16 %v107
  %v330 = vunpack.c.l.bf16 %v108
  %v331 = vunpack.c.h.bf16 %v108
  %v332 = vunpack.c.l.bf16 %v109
  %v333 = vunpack.c.h.bf16 %v109
  %v334 = vunpack.c.l.bf16 %v110
  %v335 = vunpack.c.h.bf16 %v110
  %v336 = vunpack.c.l.bf16 %v111
  %v337 = vunpack.c.h.bf16 %v111
  %v338 = vunpack.c.l.bf16 %v112
  %v339 = vunpack.c.h.bf16 %v112
  %v340 = vunpack.c.l.bf16 %v113
  %v341 = vunpack.c.h.bf16 %v113
  %v342 = vunpack.c.l.bf16 %v114
  %v343 = vunpack.c.h.bf16 %v114
  %v344 = vunpack.c.l.bf16 %v115
  %v345 = vunpack.c.h.bf16 %v115
  %v346 = vunpack.c.l.bf16 %v116
  %v347 = vunpack.c.h.bf16 %v116
  %v348 = vunpack.c.l.bf16 %v117
  %v349 = vunpack.c.h.bf16 %v117
  %v350 = vunpack.c.l.bf16 %v118
  %v351 = vunpack.c.h.bf16 %v118
  %v352 = vunpack.c.l.bf16 %v119
  %v353 = vunpack.c.h.bf16 %v119
  %v354 = vunpack.c.l.bf16 %v120
  %v355 = vunpack.c.h.bf16 %v120
  %v356 = vunpack.c.l.bf16 %v121
  %v357 = vunpack.c.h.bf16 %v121
  %v358 = vunpack.c.l.bf16 %v122
  %v359 = vunpack.c.h.bf16 %v122
  %v360 = vunpack.c.l.bf16 %v123
  %v361 = vunpack.c.h.bf16 %v123
  %v362 = vunpack.c.l.bf16 %v124
  %v363 = vunpack.c.h.bf16 %v124
  %v364 = vunpack.c.l.bf16 %v125
  %v365 = vunpack.c.h.bf16 %v125
  %v366 = vunpack.c.l.bf16 %v126
  %v367 = vunpack.c.h.bf16 %v126
  %v368 = vunpack.c.l.bf16 %v127
  %v369 = vunpack.c.h.bf16 %v127
  %v370 = vunpack.c.l.bf16 %v128
  %v371 = vunpack.c.h.bf16 %v128
  %v372 = vunpack.c.l.bf16 %v129
  %v373 = vunpack.c.h.bf16 %v129
  %v374 = vunpack.c.l.bf16 %v130
  %v375 = vunpack.c.h.bf16 %v130
  %v376 = vunpack.c.l.bf16 %v131
  %v377 = vunpack.c.h.bf16 %v131
  %v378 = vunpack.c.l.bf16 %v132
  %v379 = vunpack.c.h.bf16 %v132
  %v380 = vunpack.c.l.bf16 %v133
  %v381 = vunpack.c.h.bf16 %v133
  %v382 = vunpack.c.l.bf16 %v134
  %v383 = vunpack.c.h.bf16 %v134
  %v384 = vunpack.c.l.bf16 %v135
  %v385 = vunpack.c.h.bf16 %v135
  %v386 = vunpack.c.l.bf16 %v136
  %v387 = vunpack.c.h.bf16 %v136
  %v388 = vunpack.c.l.bf16 %v137
  %v389 = vunpack.c.h.bf16 %v137
  %v390 = vunpack.c.l.bf16 %v138
  %v391 = vunpack.c.h.bf16 %v138
  %v392 = vunpack.c.l.bf16 %v139
  %v393 = vunpack.c.h.bf16 %v139
  %v394 = vunpack.c.l.bf16 %v140
  %v395 = vunpack.c.h.bf16 %v140
  %v396 = vunpack.c.l.bf16 %v141
  %v397 = vunpack.c.h.bf16 %v141
  %v398 = vld [vmem:[%s1] sm:$0xff]
  %v399 = vld [vmem:[%s1 + $0x8] sm:$0xff]
  %v400 = vld [vmem:[%s1 + $0x10] sm:$0xff]
  %v401 = vld [vmem:[%s1 + $0x18] sm:$0xff]
  %v402 = vld [vmem:[%s1 + $0x20] sm:$0xff]
  %v403 = vld [vmem:[%s1 + $0x28] sm:$0xff]
  %v404 = vld [vmem:[%s1 + $0x30] sm:$0xff]
  %v405 = vld [vmem:[%s1 + $0x38] sm:$0xff]
  %v406 = vld [vmem:[%s1 + $0x40] sm:$0xff]
  %v407 = vld [vmem:[%s1 + $0x48] sm:$0xff]
  %v408 = vld [vmem:[%s1 + $0x50] sm:$0xff]
  %v409 = vld [vmem:[%s1 + $0x58] sm:$0xff]
  %v410 = vld [vmem:[%s1 + $0x60] sm:$0xff]
  %v411 = vld [vmem:[%s1 + $0x68] sm:$0xff]
  %v412 = vld [vmem:[%s1 + $0x70] sm:$0xff]
  %v413 = vld [vmem:[%s1 + $0x78] sm:$0xff]
  %v414 = vld [vmem:[%s1 + $0x80] sm:$0xff]
  %v415 = vld [vmem:[%s1 + $0x88] sm:$0xff]
  %v416 = vld [vmem:[%s1 + $0x90] sm:$0xff]
  %v417 = vld [vmem:[%s1 + $0x98] sm:$0xff]
  %v418 = vld [vmem:[%s1 + $0xa0] sm:$0xff]
  %v419 = vld [vmem:[%s1 + $0xa8] sm:$0xff]
  %v420 = vld [vmem:[%s1 + $0xb0] sm:$0xff]
  %v421 = vld [vmem:[%s1 + $0xb8] sm:$0xff]
  %v422 = vld [vmem:[%s1 + $0xc0] sm:$0xff]
  %v423 = vld [vmem:[%s1 + $0xc8] sm:$0xff]
  %v424 = vld [vmem:[%s1 + $0xd0] sm:$0xff]
  %v425 = vld [vmem:[%s1 + $0xd8] sm:$0xff]
  %v426 = vld [vmem:[%s1 + $0xe0] sm:$0xff]
  %v427 = vld [vmem:[%s1 + $0xe8] sm:$0xff]
  %v428 = vld [vmem:[%s1 + $0xf0] sm:$0xff]
  %v429 = vld [vmem:[%s1 + $0xf8] sm:$0xff]
  %v430 = vld [vmem:[%s1 + $0x100] sm:$0xff]
  %v431 = vld [vmem:[%s1 + $0x108] sm:$0xff]
  %v432 = vld [vmem:[%s1 + $0x110] sm:$0xff]
  %v433 = vld [vmem:[%s1 + $0x118] sm:$0xff]
  %v434 = vld [vmem:[%s1 + $0x120] sm:$0xff]
  %v435 = vld [vmem:[%s1 + $0x128] sm:$0xff]
  %v436 = vld [vmem:[%s1 + $0x130] sm:$0xff]
  %v437 = vld [vmem:[%s1 + $0x138] sm:$0xff]
  %v438 = vld [vmem:[%s1 + $0x140] sm:$0xff]
  %v439 = vld [vmem:[%s1 + $0x148] sm:$0xff]
  %v440 = vld [vmem:[%s1 + $0x150] sm:$0xff]
  %v441 = vld [vmem:[%s1 + $0x158] sm:$0xff]
  %v442 = vld [vmem:[%s1 + $0x160] sm:$0xff]
  %v443 = vld [vmem:[%s1 + $0x168] sm:$0xff]
  %v444 = vld [vmem:[%s1 + $0x170] sm:$0xff]
  %v445 = vld [vmem:[%s1 + $0x178] sm:$0xff]
  %v446 = vld [vmem:[%s1 + $0x180] sm:$0xff]
  %v447 = vld [vmem:[%s1 + $0x188] sm:$0xff]
  %v448 = vld [vmem:[%s1 + $0x190] sm:$0xff]
  %v449 = vld [vmem:[%s1 + $0x198] sm:$0xff]
  %v450 = vld [vmem:[%s1 + $0x1a0] sm:$0xff]
  %v451 = vld [vmem:[%s1 + $0x1a8] sm:$0xff]
  %v452 = vld [vmem:[%s1 + $0x1b0] sm:$0xff]
  %v453 = vld [vmem:[%s1 + $0x1b8] sm:$0xff]
  %v454 = vld [vmem:[%s1 + $0x1c0] sm:$0xff]
  %v455 = vld [vmem:[%s1 + $0x1c8] sm:$0xff]
  %v456 = vld [vmem:[%s1 + $0x1d0] sm:$0xff]
  %v457 = vld [vmem:[%s1 + $0x1d8] sm:$0xff]
  %v458 = vld [vmem:[%s1 + $0x1e0] sm:$0xff]
  %v459 = vld [vmem:[%s1 + $0x1e8] sm:$0xff]
  %v460 = vld [vmem:[%s1 + $0x1f0] sm:$0xff]
  %v461 = vld [vmem:[%s1 + $0x1f8] sm:$0xff]
  %v462 = vld [vmem:[%s1 + $0x200] sm:$0xff]
  %v463 = vld [vmem:[%s1 + $0x208] sm:$0xff]
  %v464 = vld [vmem:[%s1 + $0x210] sm:$0xff]
  %v465 = vld [vmem:[%s1 + $0x218] sm:$0xff]
  %v466 = vld [vmem:[%s1 + $0x220] sm:$0xff]
  %v467 = vld [vmem:[%s1 + $0x228] sm:$0xff]
  %v468 = vld [vmem:[%s1 + $0x230] sm:$0xff]
  %v469 = vld [vmem:[%s1 + $0x238] sm:$0xff]
  %v470 = vld [vmem:[%s1 + $0x240] sm:$0xff]
  %v471 = vld [vmem:[%s1 + $0x248] sm:$0xff]
  %v472 = vld [vmem:[%s1 + $0x250] sm:$0xff]
  %v473 = vld [vmem:[%s1 + $0x258] sm:$0xff]
  %v474 = vld [vmem:[%s1 + $0x260] sm:$0xff]
  %v475 = vld [vmem:[%s1 + $0x268] sm:$0xff]
  %v476 = vld [vmem:[%s1 + $0x270] sm:$0xff]
  %v477 = vld [vmem:[%s1 + $0x278] sm:$0xff]
  %v478 = vld [vmem:[%s1 + $0x280] sm:$0xff]
  %v479 = vld [vmem:[%s1 + $0x288] sm:$0xff]
  %v480 = vld [vmem:[%s1 + $0x290] sm:$0xff]
  %v481 = vld [vmem:[%s1 + $0x298] sm:$0xff]
  %v482 = vld [vmem:[%s1 + $0x2a0] sm:$0xff]
  %v483 = vld [vmem:[%s1 + $0x2a8] sm:$0xff]
  %v484 = vld [vmem:[%s1 + $0x2b0] sm:$0xff]
  %v485 = vld [vmem:[%s1 + $0x2b8] sm:$0xff]
  %v486 = vld [vmem:[%s1 + $0x2c0] sm:$0xff]
  %v487 = vld [vmem:[%s1 + $0x2c8] sm:$0xff]
  %v488 = vld [vmem:[%s1 + $0x2d0] sm:$0xff]
  %v489 = vld [vmem:[%s1 + $0x2d8] sm:$0xff]
  %v490 = vld [vmem:[%s1 + $0x2e0] sm:$0xff]
  %v491 = vld [vmem:[%s1 + $0x2e8] sm:$0xff]
  %v492 = vld [vmem:[%s1 + $0x2f0] sm:$0xff]
  %v493 = vld [vmem:[%s1 + $0x2f8] sm:$0xff]
  %v494 = vld [vmem:[%s1 + $0x300] sm:$0xff]
  %v495 = vld [vmem:[%s1 + $0x308] sm:$0xff]
  %v496 = vld [vmem:[%s1 + $0x310] sm:$0xff]
  %v497 = vld [vmem:[%s1 + $0x318] sm:$0xff]
  %v498 = vld [vmem:[%s1 + $0x320] sm:$0xff]
  %v499 = vld [vmem:[%s1 + $0x328] sm:$0xff]
  %v500 = vld [vmem:[%s1 + $0x330] sm:$0xff]
  %v501 = vld [vmem:[%s1 + $0x338] sm:$0xff]
  %v502 = vld [vmem:[%s1 + $0x340] sm:$0xff]
  %v503 = vld [vmem:[%s1 + $0x348] sm:$0xff]
  %v504 = vld [vmem:[%s1 + $0x350] sm:$0xff]
  %v505 = vld [vmem:[%s1 + $0x358] sm:$0xff]
  %v506 = vld [vmem:[%s1 + $0x360] sm:$0xff]
  %v507 = vld [vmem:[%s1 + $0x368] sm:$0xff]
  %v508 = vld [vmem:[%s1 + $0x370] sm:$0xff]
  %v509 = vld [vmem:[%s1 + $0x378] sm:$0xff]
  %v510 = vld [vmem:[%s1 + $0x380] sm:$0xff]
  %v511 = vld [vmem:[%s1 + $0x388] sm:$0xff]
  %v512 = vld [vmem:[%s1 + $0x390] sm:$0xff]
  %v513 = vld [vmem:[%s1 + $0x398] sm:$0xff]
  %v514 = vld [vmem:[%s1 + $0x3a0] sm:$0xff]
  %v515 = vld [vmem:[%s1 + $0x3a8] sm:$0xff]
  %v516 = vld [vmem:[%s1 + $0x3b0] sm:$0xff]
  %v517 = vld [vmem:[%s1 + $0x3b8] sm:$0xff]
  %v518 = vld [vmem:[%s1 + $0x3c0] sm:$0xff]
  %v519 = vld [vmem:[%s1 + $0x3c8] sm:$0xff]
  %v520 = vld [vmem:[%s1 + $0x3d0] sm:$0xff]
  %v521 = vld [vmem:[%s1 + $0x3d8] sm:$0xff]
  %v522 = vld [vmem:[%s1 + $0x3e0] sm:$0xff]
  %v523 = vld [vmem:[%s1 + $0x3e8] sm:$0xff]
  %v524 = vld [vmem:[%s1 + $0x3f0] sm:$0xff]
  %v525 = vld [vmem:[%s1 + $0x3f8] sm:$0xff]
  %526 = vmatprep.subr.mxu0 %v203
  %527 = vmatpush1.msra.mxu0 %v202
  %528 = vmatprep.subr.mxu0 %v199
  %529 = vmatpush1.msra.mxu0 %v198
  %530 = vmatprep.subr.mxu0 %v195
  %531 = vmatpush1.msra.mxu0 %v194
  %532 = vmatprep.subr.mxu0 %v191
  %533 = vmatpush1.msra.mxu0 %v190
  %534 = vmatprep.subr.mxu0 %v187
  %535 = vmatpush1.msra.mxu0 %v186
  %536 = vmatprep.subr.mxu0 %v183
  %537 = vmatpush1.msra.mxu0 %v182
  %538 = vmatprep.subr.mxu0 %v179
  %539 = vmatpush1.msra.mxu0 %v178
  %540 = vmatprep.subr.mxu0 %v175
  %541 = vmatpush1.msra.mxu0 %v174
  %542 = vmatprep.subr.mxu0 %v171
  %543 = vmatpush1.msra.mxu0 %v170
  %544 = vmatprep.subr.mxu0 %v167
  %545 = vmatpush1.msra.mxu0 %v166
  %546 = vmatprep.subr.mxu0 %v163
  %547 = vmatpush1.msra.mxu0 %v162
  %548 = vmatprep.subr.mxu0 %v159
  %549 = vmatpush1.msra.mxu0 %v158
  %550 = vmatprep.subr.mxu0 %v155
  %551 = vmatpush1.msra.mxu0 %v154
  %552 = vmatprep.subr.mxu0 %v151
  %553 = vmatpush1.msra.mxu0 %v150
  %554 = vmatprep.subr.mxu0 %v147
  %555 = vmatpush1.msra.mxu0 %v146
  %556 = vmatprep.subr.mxu0 %v143
  %557 = vmatpush1.msra.mxu0 %v142
  %558 = vmatprep.subr.mxu0 %v267
  %559 = vmatpush2.msra.mxu0 %v266
  %560 = vmatprep.subr.mxu0 %v263
  %561 = vmatpush2.msra.mxu0 %v262
  %562 = vmatprep.subr.mxu0 %v259
  %563 = vmatpush2.msra.mxu0 %v258
  %564 = vmatprep.subr.mxu0 %v255
  %565 = vmatpush2.msra.mxu0 %v254
  %566 = vmatprep.subr.mxu0 %v251
  %567 = vmatpush2.msra.mxu0 %v250
  %568 = vmatprep.subr.mxu0 %v247
  %569 = vmatpush2.msra.mxu0 %v246
  %570 = vmatprep.subr.mxu0 %v243
  %571 = vmatpush2.msra.mxu0 %v242
  %572 = vmatprep.subr.mxu0 %v239
  %573 = vmatpush2.msra.mxu0 %v238
  %574 = vmatprep.subr.mxu0 %v235
  %575 = vmatpush2.msra.mxu0 %v234
  %576 = vmatprep.subr.mxu0 %v231
  %577 = vmatpush2.msra.mxu0 %v230
  %578 = vmatprep.subr.mxu0 %v227
  %579 = vmatpush2.msra.mxu0 %v226
  %580 = vmatprep.subr.mxu0 %v223
  %581 = vmatpush2.msra.mxu0 %v222
  %582 = vmatprep.subr.mxu0 %v219
  %583 = vmatpush2.msra.mxu0 %v218
  %584 = vmatprep.subr.mxu0 %v215
  %585 = vmatpush2.msra.mxu0 %v214
  %586 = vmatprep.subr.mxu0 %v211
  %587 = vmatpush2.msra.mxu0 %v210
  %588 = vmatprep.subr.mxu0 %v207
  %589 = vmatpush2.msra.mxu0 %v206
  %590 = vmatprep.mubr.f32.mxu0 %v399
  %591 = vmatmul.mubr.f32.gmra.mxu0 %v398
  %v592 = vpop.f32.mrf.mxu0
  %v593 = vadd.f32 0.0, %v592
  %v594 = vpop.f32.mrf.mxu0
  %v595 = vadd.f32 0.0, %v594
  %596 = vmatprep.mubr.f32.mxu0 %v403
  %597 = vmatmul.mubr.f32.gmra.mxu0 %v402
  %v598 = vpop.f32.mrf.mxu0
  %v599 = vadd.f32 0.0, %v598
  %v600 = vpop.f32.mrf.mxu0
  %v601 = vadd.f32 0.0, %v600
  %602 = vmatprep.mubr.f32.mxu0 %v407
  %603 = vmatmul.mubr.f32.gmra.mxu0 %v406
  %v604 = vpop.f32.mrf.mxu0
  %v605 = vadd.f32 0.0, %v604
  %v606 = vpop.f32.mrf.mxu0
  %v607 = vadd.f32 0.0, %v606
  %608 = vmatprep.mubr.f32.mxu0 %v411
  %609 = vmatmul.mubr.f32.gmra.mxu0 %v410
  %v610 = vpop.f32.mrf.mxu0
  %v611 = vadd.f32 0.0, %v610
  %v612 = vpop.f32.mrf.mxu0
  %v613 = vadd.f32 0.0, %v612
  %614 = vmatprep.mubr.f32.mxu0 %v415
  %615 = vmatmul.mubr.f32.gmra.mxu0 %v414
  %v616 = vpop.f32.mrf.mxu0
  %v617 = vadd.f32 0.0, %v616
  %v618 = vpop.f32.mrf.mxu0
  %v619 = vadd.f32 0.0, %v618
  %620 = vmatprep.mubr.f32.mxu0 %v419
  %621 = vmatmul.mubr.f32.gmra.mxu0 %v418
  %v622 = vpop.f32.mrf.mxu0
  %v623 = vadd.f32 0.0, %v622
  %v624 = vpop.f32.mrf.mxu0
  %v625 = vadd.f32 0.0, %v624
  %626 = vmatprep.mubr.f32.mxu0 %v423
  %627 = vmatmul.mubr.f32.gmra.mxu0 %v422
  %v628 = vpop.f32.mrf.mxu0
  %v629 = vadd.f32 0.0, %v628
  %v630 = vpop.f32.mrf.mxu0
  %v631 = vadd.f32 0.0, %v630
  %632 = vmatprep.mubr.f32.mxu0 %v427
  %633 = vmatmul.mubr.f32.gmra.mxu0 %v426
  %v634 = vpop.f32.mrf.mxu0
  %v635 = vadd.f32 0.0, %v634
  %v636 = vpop.f32.mrf.mxu0
  %v637 = vadd.f32 0.0, %v636
  %638 = vmatprep.mubr.f32.mxu0 %v431
  %639 = vmatmul.mubr.f32.gmra.mxu0 %v430
  %v640 = vpop.f32.mrf.mxu0
  %v641 = vadd.f32 0.0, %v640
  %v642 = vpop.f32.mrf.mxu0
  %v643 = vadd.f32 0.0, %v642
  %644 = vmatprep.mubr.f32.mxu0 %v435
  %645 = vmatmul.mubr.f32.gmra.mxu0 %v434
  %v646 = vpop.f32.mrf.mxu0
  %v647 = vadd.f32 0.0, %v646
  %v648 = vpop.f32.mrf.mxu0
  %v649 = vadd.f32 0.0, %v648
  %650 = vmatprep.mubr.f32.mxu0 %v439
  %651 = vmatmul.mubr.f32.gmra.mxu0 %v438
  %v652 = vpop.f32.mrf.mxu0
  %v653 = vadd.f32 0.0, %v652
  %v654 = vpop.f32.mrf.mxu0
  %v655 = vadd.f32 0.0, %v654
  %656 = vmatprep.mubr.f32.mxu0 %v443
  %657 = vmatmul.mubr.f32.gmra.mxu0 %v442
  %v658 = vpop.f32.mrf.mxu0
  %v659 = vadd.f32 0.0, %v658
  %v660 = vpop.f32.mrf.mxu0
  %v661 = vadd.f32 0.0, %v660
  %662 = vmatprep.mubr.f32.mxu0 %v447
  %663 = vmatmul.mubr.f32.gmra.mxu0 %v446
  %v664 = vpop.f32.mrf.mxu0
  %v665 = vadd.f32 0.0, %v664
  %v666 = vpop.f32.mrf.mxu0
  %v667 = vadd.f32 0.0, %v666
  %668 = vmatprep.mubr.f32.mxu0 %v451
  %669 = vmatmul.mubr.f32.gmra.mxu0 %v450
  %v670 = vpop.f32.mrf.mxu0
  %v671 = vadd.f32 0.0, %v670
  %v672 = vpop.f32.mrf.mxu0
  %v673 = vadd.f32 0.0, %v672
  %674 = vmatprep.mubr.f32.mxu0 %v455
  %675 = vmatmul.mubr.f32.gmra.mxu0 %v454
  %v676 = vpop.f32.mrf.mxu0
  %v677 = vadd.f32 0.0, %v676
  %v678 = vpop.f32.mrf.mxu0
  %v679 = vadd.f32 0.0, %v678
  %680 = vmatprep.mubr.f32.mxu0 %v459
  %681 = vmatmul.mubr.f32.gmra.mxu0 %v458
  %v682 = vpop.f32.mrf.mxu0
  %v683 = vadd.f32 0.0, %v682
  %v684 = vpop.f32.mrf.mxu0
  %v685 = vadd.f32 0.0, %v684
  %686 = vmatprep.mubr.f32.mxu0 %v463
  %687 = vmatmul.mubr.f32.gmra.mxu0 %v462
  %v688 = vpop.f32.mrf.mxu0
  %v689 = vadd.f32 0.0, %v688
  %v690 = vpop.f32.mrf.mxu0
  %v691 = vadd.f32 0.0, %v690
  %692 = vmatprep.mubr.f32.mxu0 %v467
  %693 = vmatmul.mubr.f32.gmra.mxu0 %v466
  %v694 = vpop.f32.mrf.mxu0
  %v695 = vadd.f32 0.0, %v694
  %v696 = vpop.f32.mrf.mxu0
  %v697 = vadd.f32 0.0, %v696
  %698 = vmatprep.mubr.f32.mxu0 %v471
  %699 = vmatmul.mubr.f32.gmra.mxu0 %v470
  %v700 = vpop.f32.mrf.mxu0
  %v701 = vadd.f32 0.0, %v700
  %v702 = vpop.f32.mrf.mxu0
  %v703 = vadd.f32 0.0, %v702
  %704 = vmatprep.mubr.f32.mxu0 %v475
  %705 = vmatmul.mubr.f32.gmra.mxu0 %v474
  %v706 = vpop.f32.mrf.mxu0
  %v707 = vadd.f32 0.0, %v706
  %v708 = vpop.f32.mrf.mxu0
  %v709 = vadd.f32 0.0, %v708
  %710 = vmatprep.mubr.f32.mxu0 %v479
  %711 = vmatmul.mubr.f32.gmra.mxu0 %v478
  %v712 = vpop.f32.mrf.mxu0
  %v713 = vadd.f32 0.0, %v712
  %v714 = vpop.f32.mrf.mxu0
  %v715 = vadd.f32 0.0, %v714
  %716 = vmatprep.mubr.f32.mxu0 %v483
  %717 = vmatmul.mubr.f32.gmra.mxu0 %v482
  %v718 = vpop.f32.mrf.mxu0
  %v719 = vadd.f32 0.0, %v718
  %v720 = vpop.f32.mrf.mxu0
  %v721 = vadd.f32 0.0, %v720
  %722 = vmatprep.mubr.f32.mxu0 %v487
  %723 = vmatmul.mubr.f32.gmra.mxu0 %v486
  %v724 = vpop.f32.mrf.mxu0
  %v725 = vadd.f32 0.0, %v724
  %v726 = vpop.f32.mrf.mxu0
  %v727 = vadd.f32 0.0, %v726
  %728 = vmatprep.mubr.f32.mxu0 %v491
  %729 = vmatmul.mubr.f32.gmra.mxu0 %v490
  %v730 = vpop.f32.mrf.mxu0
  %v731 = vadd.f32 0.0, %v730
  %v732 = vpop.f32.mrf.mxu0
  %v733 = vadd.f32 0.0, %v732
  %734 = vmatprep.mubr.f32.mxu0 %v495
  %735 = vmatmul.mubr.f32.gmra.mxu0 %v494
  %v736 = vpop.f32.mrf.mxu0
  %v737 = vadd.f32 0.0, %v736
  %v738 = vpop.f32.mrf.mxu0
  %v739 = vadd.f32 0.0, %v738
  %740 = vmatprep.mubr.f32.mxu0 %v499
  %741 = vmatmul.mubr.f32.gmra.mxu0 %v498
  %v742 = vpop.f32.mrf.mxu0
  %v743 = vadd.f32 0.0, %v742
  %v744 = vpop.f32.mrf.mxu0
  %v745 = vadd.f32 0.0, %v744
  %746 = vmatprep.mubr.f32.mxu0 %v503
  %747 = vmatmul.mubr.f32.gmra.mxu0 %v502
  %v748 = vpop.f32.mrf.mxu0
  %v749 = vadd.f32 0.0, %v748
  %v750 = vpop.f32.mrf.mxu0
  %v751 = vadd.f32 0.0, %v750
  %752 = vmatprep.mubr.f32.mxu0 %v507
  %753 = vmatmul.mubr.f32.gmra.mxu0 %v506
  %v754 = vpop.f32.mrf.mxu0
  %v755 = vadd.f32 0.0, %v754
  %v756 = vpop.f32.mrf.mxu0
  %v757 = vadd.f32 0.0, %v756
  %758 = vmatprep.mubr.f32.mxu0 %v511
  %759 = vmatmul.mubr.f32.gmra.mxu0 %v510
  %v760 = vpop.f32.mrf.mxu0
  %v761 = vadd.f32 0.0, %v760
  %v762 = vpop.f32.mrf.mxu0
  %v763 = vadd.f32 0.0, %v762
  %764 = vmatprep.mubr.f32.mxu0 %v515
  %765 = vmatmul.mubr.f32.gmra.mxu0 %v514
  %v766 = vpop.f32.mrf.mxu0
  %v767 = vadd.f32 0.0, %v766
  %v768 = vpop.f32.mrf.mxu0
  %v769 = vadd.f32 0.0, %v768
  %770 = vmatprep.mubr.f32.mxu0 %v519
  %771 = vmatmul.mubr.f32.gmra.mxu0 %v518
  %v772 = vpop.f32.mrf.mxu0
  %v773 = vadd.f32 0.0, %v772
  %v774 = vpop.f32.mrf.mxu0
  %v775 = vadd.f32 0.0, %v774
  %776 = vmatprep.mubr.f32.mxu0 %v523
  %777 = vmatmul.mubr.f32.gmra.mxu0 %v522
  %v778 = vpop.f32.mrf.mxu0
  %v779 = vadd.f32 0.0, %v778
  %v780 = vpop.f32.mrf.mxu0
  %v781 = vadd.f32 0.0, %v780
  %782 = vdwg.mxu0
  %783 = vmatprep.subr.mxu0 %v331
  %784 = vmatpush1.msra.mxu0 %v330
  %785 = vmatprep.subr.mxu0 %v327
  %786 = vmatpush1.msra.mxu0 %v326
  %787 = vmatprep.subr.mxu0 %v323
  %788 = vmatpush1.msra.mxu0 %v322
  %789 = vmatprep.subr.mxu0 %v319
  %790 = vmatpush1.msra.mxu0 %v318
  %791 = vmatprep.subr.mxu0 %v315
  %792 = vmatpush1.msra.mxu0 %v314
  %793 = vmatprep.subr.mxu0 %v311
  %794 = vmatpush1.msra.mxu0 %v310
  %795 = vmatprep.subr.mxu0 %v307
  %796 = vmatpush1.msra.mxu0 %v306
  %797 = vmatprep.subr.mxu0 %v303
  %798 = vmatpush1.msra.mxu0 %v302
  %799 = vmatprep.subr.mxu0 %v299
  %800 = vmatpush1.msra.mxu0 %v298
  %801 = vmatprep.subr.mxu0 %v295
  %802 = vmatpush1.msra.mxu0 %v294
  %803 = vmatprep.subr.mxu0 %v291
  %804 = vmatpush1.msra.mxu0 %v290
  %805 = vmatprep.subr.mxu0 %v287
  %806 = vmatpush1.msra.mxu0 %v286
  %807 = vmatprep.subr.mxu0 %v283
  %808 = vmatpush1.msra.mxu0 %v282
  %809 = vmatprep.subr.mxu0 %v279
  %810 = vmatpush1.msra.mxu0 %v278
  %811 = vmatprep.subr.mxu0 %v275
  %812 = vmatpush1.msra.mxu0 %v274
  %813 = vmatprep.subr.mxu0 %v271
  %814 = vmatpush1.msra.mxu0 %v270
  %815 = vmatprep.subr.mxu0 %v395
  %816 = vmatpush2.msra.mxu0 %v394
  %817 = vmatprep.subr.mxu0 %v391
  %818 = vmatpush2.msra.mxu0 %v390
  %819 = vmatprep.subr.mxu0 %v387
  %820 = vmatpush2.msra.mxu0 %v386
  %821 = vmatprep.subr.mxu0 %v383
  %822 = vmatpush2.msra.mxu0 %v382
  %823 = vmatprep.subr.mxu0 %v379
  %824 = vmatpush2.msra.mxu0 %v378
  %825 = vmatprep.subr.mxu0 %v375
  %826 = vmatpush2.msra.mxu0 %v374
  %827 = vmatprep.subr.mxu0 %v371
  %828 = vmatpush2.msra.mxu0 %v370
  %829 = vmatprep.subr.mxu0 %v367
  %830 = vmatpush2.msra.mxu0 %v366
  %831 = vmatprep.subr.mxu0 %v363
  %832 = vmatpush2.msra.mxu0 %v362
  %833 = vmatprep.subr.mxu0 %v359
  %834 = vmatpush2.msra.mxu0 %v358
  %835 = vmatprep.subr.mxu0 %v355
  %836 = vmatpush2.msra.mxu0 %v354
  %837 = vmatprep.subr.mxu0 %v351
  %838 = vmatpush2.msra.mxu0 %v350
  %839 = vmatprep.subr.mxu0 %v347
  %840 = vmatpush2.msra.mxu0 %v346
  %841 = vmatprep.subr.mxu0 %v343
  %842 = vmatpush2.msra.mxu0 %v342
  %843 = vmatprep.subr.mxu0 %v339
  %844 = vmatpush2.msra.mxu0 %v338
  %845 = vmatprep.subr.mxu0 %v335
  %846 = vmatpush2.msra.mxu0 %v334
  %847 = vmatprep.mubr.f32.mxu0 %v401
  %848 = vmatmul.mubr.f32.gmra.mxu0 %v400
  %v849 = vpop.f32.mrf.mxu0
  %v850 = vadd.f32 %v593, %v849
  %v851 = vpop.f32.mrf.mxu0
  %v852 = vadd.f32 %v595, %v851
  %853 = vmatprep.mubr.f32.mxu0 %v405
  %854 = vmatmul.mubr.f32.gmra.mxu0 %v404
  %v855 = vpop.f32.mrf.mxu0
  %v856 = vadd.f32 %v599, %v855
  %v857 = vpop.f32.mrf.mxu0
  %v858 = vadd.f32 %v601, %v857
  %859 = vmatprep.mubr.f32.mxu0 %v409
  %860 = vmatmul.mubr.f32.gmra.mxu0 %v408
  %v861 = vpop.f32.mrf.mxu0
  %v862 = vadd.f32 %v605, %v861
  %v863 = vpop.f32.mrf.mxu0
  %v864 = vadd.f32 %v607, %v863
  %865 = vmatprep.mubr.f32.mxu0 %v413
  %866 = vmatmul.mubr.f32.gmra.mxu0 %v412
  %v867 = vpop.f32.mrf.mxu0
  %v868 = vadd.f32 %v611, %v867
  %v869 = vpop.f32.mrf.mxu0
  %v870 = vadd.f32 %v613, %v869
  %871 = vmatprep.mubr.f32.mxu0 %v417
  %872 = vmatmul.mubr.f32.gmra.mxu0 %v416
  %v873 = vpop.f32.mrf.mxu0
  %v874 = vadd.f32 %v617, %v873
  %v875 = vpop.f32.mrf.mxu0
  %v876 = vadd.f32 %v619, %v875
  %877 = vmatprep.mubr.f32.mxu0 %v421
  %878 = vmatmul.mubr.f32.gmra.mxu0 %v420
  %v879 = vpop.f32.mrf.mxu0
  %v880 = vadd.f32 %v623, %v879
  %v881 = vpop.f32.mrf.mxu0
  %v882 = vadd.f32 %v625, %v881
  %883 = vmatprep.mubr.f32.mxu0 %v425
  %884 = vmatmul.mubr.f32.gmra.mxu0 %v424
  %v885 = vpop.f32.mrf.mxu0
  %v886 = vadd.f32 %v629, %v885
  %v887 = vpop.f32.mrf.mxu0
  %v888 = vadd.f32 %v631, %v887
  %889 = vmatprep.mubr.f32.mxu0 %v429
  %890 = vmatmul.mubr.f32.gmra.mxu0 %v428
  %v891 = vpop.f32.mrf.mxu0
  %v892 = vadd.f32 %v635, %v891
  %v893 = vpop.f32.mrf.mxu0
  %v894 = vadd.f32 %v637, %v893
  %895 = vmatprep.mubr.f32.mxu0 %v433
  %896 = vmatmul.mubr.f32.gmra.mxu0 %v432
  %v897 = vpop.f32.mrf.mxu0
  %v898 = vadd.f32 %v641, %v897
  %v899 = vpop.f32.mrf.mxu0
  %v900 = vadd.f32 %v643, %v899
  %901 = vmatprep.mubr.f32.mxu0 %v437
  %902 = vmatmul.mubr.f32.gmra.mxu0 %v436
  %v903 = vpop.f32.mrf.mxu0
  %v904 = vadd.f32 %v647, %v903
  %v905 = vpop.f32.mrf.mxu0
  %v906 = vadd.f32 %v649, %v905
  %907 = vmatprep.mubr.f32.mxu0 %v441
  %908 = vmatmul.mubr.f32.gmra.mxu0 %v440
  %v909 = vpop.f32.mrf.mxu0
  %v910 = vadd.f32 %v653, %v909
  %v911 = vpop.f32.mrf.mxu0
  %v912 = vadd.f32 %v655, %v911
  %913 = vmatprep.mubr.f32.mxu0 %v445
  %914 = vmatmul.mubr.f32.gmra.mxu0 %v444
  %v915 = vpop.f32.mrf.mxu0
  %v916 = vadd.f32 %v659, %v915
  %v917 = vpop.f32.mrf.mxu0
  %v918 = vadd.f32 %v661, %v917
  %919 = vmatprep.mubr.f32.mxu0 %v449
  %920 = vmatmul.mubr.f32.gmra.mxu0 %v448
  %v921 = vpop.f32.mrf.mxu0
  %v922 = vadd.f32 %v665, %v921
  %v923 = vpop.f32.mrf.mxu0
  %v924 = vadd.f32 %v667, %v923
  %925 = vmatprep.mubr.f32.mxu0 %v453
  %926 = vmatmul.mubr.f32.gmra.mxu0 %v452
  %v927 = vpop.f32.mrf.mxu0
  %v928 = vadd.f32 %v671, %v927
  %v929 = vpop.f32.mrf.mxu0
  %v930 = vadd.f32 %v673, %v929
  %931 = vmatprep.mubr.f32.mxu0 %v457
  %932 = vmatmul.mubr.f32.gmra.mxu0 %v456
  %v933 = vpop.f32.mrf.mxu0
  %v934 = vadd.f32 %v677, %v933
  %v935 = vpop.f32.mrf.mxu0
  %v936 = vadd.f32 %v679, %v935
  %937 = vmatprep.mubr.f32.mxu0 %v461
  %938 = vmatmul.mubr.f32.gmra.mxu0 %v460
  %v939 = vpop.f32.mrf.mxu0
  %v940 = vadd.f32 %v683, %v939
  %v941 = vpop.f32.mrf.mxu0
  %v942 = vadd.f32 %v685, %v941
  %943 = vmatprep.mubr.f32.mxu0 %v465
  %944 = vmatmul.mubr.f32.gmra.mxu0 %v464
  %v945 = vpop.f32.mrf.mxu0
  %v946 = vadd.f32 %v689, %v945
  %v947 = vpop.f32.mrf.mxu0
  %v948 = vadd.f32 %v691, %v947
  %949 = vmatprep.mubr.f32.mxu0 %v469
  %950 = vmatmul.mubr.f32.gmra.mxu0 %v468
  %v951 = vpop.f32.mrf.mxu0
  %v952 = vadd.f32 %v695, %v951
  %v953 = vpop.f32.mrf.mxu0
  %v954 = vadd.f32 %v697, %v953
  %955 = vmatprep.mubr.f32.mxu0 %v473
  %956 = vmatmul.mubr.f32.gmra.mxu0 %v472
  %v957 = vpop.f32.mrf.mxu0
  %v958 = vadd.f32 %v701, %v957
  %v959 = vpop.f32.mrf.mxu0
  %v960 = vadd.f32 %v703, %v959
  %961 = vmatprep.mubr.f32.mxu0 %v477
  %962 = vmatmul.mubr.f32.gmra.mxu0 %v476
  %v963 = vpop.f32.mrf.mxu0
  %v964 = vadd.f32 %v707, %v963
  %v965 = vpop.f32.mrf.mxu0
  %v966 = vadd.f32 %v709, %v965
  %967 = vmatprep.mubr.f32.mxu0 %v481
  %968 = vmatmul.mubr.f32.gmra.mxu0 %v480
  %v969 = vpop.f32.mrf.mxu0
  %v970 = vadd.f32 %v713, %v969
  %v971 = vpop.f32.mrf.mxu0
  %v972 = vadd.f32 %v715, %v971
  %973 = vmatprep.mubr.f32.mxu0 %v485
  %974 = vmatmul.mubr.f32.gmra.mxu0 %v484
  %v975 = vpop.f32.mrf.mxu0
  %v976 = vadd.f32 %v719, %v975
  %v977 = vpop.f32.mrf.mxu0
  %v978 = vadd.f32 %v721, %v977
  %979 = vmatprep.mubr.f32.mxu0 %v489
  %980 = vmatmul.mubr.f32.gmra.mxu0 %v488
  %v981 = vpop.f32.mrf.mxu0
  %v982 = vadd.f32 %v725, %v981
  %v983 = vpop.f32.mrf.mxu0
  %v984 = vadd.f32 %v727, %v983
  %985 = vmatprep.mubr.f32.mxu0 %v493
  %986 = vmatmul.mubr.f32.gmra.mxu0 %v492
  %v987 = vpop.f32.mrf.mxu0
  %v988 = vadd.f32 %v731, %v987
  %v989 = vpop.f32.mrf.mxu0
  %v990 = vadd.f32 %v733, %v989
  %991 = vmatprep.mubr.f32.mxu0 %v497
  %992 = vmatmul.mubr.f32.gmra.mxu0 %v496
  %v993 = vpop.f32.mrf.mxu0
  %v994 = vadd.f32 %v737, %v993
  %v995 = vpop.f32.mrf.mxu0
  %v996 = vadd.f32 %v739, %v995
  %997 = vmatprep.mubr.f32.mxu0 %v501
  %998 = vmatmul.mubr.f32.gmra.mxu0 %v500
  %v999 = vpop.f32.mrf.mxu0
  %v1000 = vadd.f32 %v743, %v999
  %v1001 = vpop.f32.mrf.mxu0
  %v1002 = vadd.f32 %v745, %v1001
  %1003 = vmatprep.mubr.f32.mxu0 %v505
  %1004 = vmatmul.mubr.f32.gmra.mxu0 %v504
  %v1005 = vpop.f32.mrf.mxu0
  %v1006 = vadd.f32 %v749, %v1005
  %v1007 = vpop.f32.mrf.mxu0
  %v1008 = vadd.f32 %v751, %v1007
  %1009 = vmatprep.mubr.f32.mxu0 %v509
  %1010 = vmatmul.mubr.f32.gmra.mxu0 %v508
  %v1011 = vpop.f32.mrf.mxu0
  %v1012 = vadd.f32 %v755, %v1011
  %v1013 = vpop.f32.mrf.mxu0
  %v1014 = vadd.f32 %v757, %v1013
  %1015 = vmatprep.mubr.f32.mxu0 %v513
  %1016 = vmatmul.mubr.f32.gmra.mxu0 %v512
  %v1017 = vpop.f32.mrf.mxu0
  %v1018 = vadd.f32 %v761, %v1017
  %v1019 = vpop.f32.mrf.mxu0
  %v1020 = vadd.f32 %v763, %v1019
  %1021 = vmatprep.mubr.f32.mxu0 %v517
  %1022 = vmatmul.mubr.f32.gmra.mxu0 %v516
  %v1023 = vpop.f32.mrf.mxu0
  %v1024 = vadd.f32 %v767, %v1023
  %v1025 = vpop.f32.mrf.mxu0
  %v1026 = vadd.f32 %v769, %v1025
  %1027 = vmatprep.mubr.f32.mxu0 %v521
  %1028 = vmatmul.mubr.f32.gmra.mxu0 %v520
  %v1029 = vpop.f32.mrf.mxu0
  %v1030 = vadd.f32 %v773, %v1029
  %v1031 = vpop.f32.mrf.mxu0
  %v1032 = vadd.f32 %v775, %v1031
  %1033 = vmatprep.mubr.f32.mxu0 %v525
  %1034 = vmatmul.mubr.f32.gmra.mxu0 %v524
  %v1035 = vpop.f32.mrf.mxu0
  %v1036 = vadd.f32 %v779, %v1035
  %v1037 = vpop.f32.mrf.mxu0
  %v1038 = vadd.f32 %v781, %v1037
  %1039 = vdwg.mxu0
  %1040 = vmatprep.subr.mxu0 %v205
  %1041 = vmatpush1.msra.mxu0 %v204
  %1042 = vmatprep.subr.mxu0 %v201
  %1043 = vmatpush1.msra.mxu0 %v200
  %1044 = vmatprep.subr.mxu0 %v197
  %1045 = vmatpush1.msra.mxu0 %v196
  %1046 = vmatprep.subr.mxu0 %v193
  %1047 = vmatpush1.msra.mxu0 %v192
  %1048 = vmatprep.subr.mxu0 %v189
  %1049 = vmatpush1.msra.mxu0 %v188
  %1050 = vmatprep.subr.mxu0 %v185
  %1051 = vmatpush1.msra.mxu0 %v184
  %1052 = vmatprep.subr.mxu0 %v181
  %1053 = vmatpush1.msra.mxu0 %v180
  %1054 = vmatprep.subr.mxu0 %v177
  %1055 = vmatpush1.msra.mxu0 %v176
  %1056 = vmatprep.subr.mxu0 %v173
  %1057 = vmatpush1.msra.mxu0 %v172
  %1058 = vmatprep.subr.mxu0 %v169
  %1059 = vmatpush1.msra.mxu0 %v168
  %1060 = vmatprep.subr.mxu0 %v165
  %1061 = vmatpush1.msra.mxu0 %v164
  %1062 = vmatprep.subr.mxu0 %v161
  %1063 = vmatpush1.msra.mxu0 %v160
  %1064 = vmatprep.subr.mxu0 %v157
  %1065 = vmatpush1.msra.mxu0 %v156
  %1066 = vmatprep.subr.mxu0 %v153
  %1067 = vmatpush1.msra.mxu0 %v152
  %1068 = vmatprep.subr.mxu0 %v149
  %1069 = vmatpush1.msra.mxu0 %v148
  %1070 = vmatprep.subr.mxu0 %v145
  %1071 = vmatpush1.msra.mxu0 %v144
  %1072 = vmatprep.subr.mxu0 %v269
  %1073 = vmatpush2.msra.mxu0 %v268
  %1074 = vmatprep.subr.mxu0 %v265
  %1075 = vmatpush2.msra.mxu0 %v264
  %1076 = vmatprep.subr.mxu0 %v261
  %1077 = vmatpush2.msra.mxu0 %v260
  %1078 = vmatprep.subr.mxu0 %v257
  %1079 = vmatpush2.msra.mxu0 %v256
  %1080 = vmatprep.subr.mxu0 %v253
  %1081 = vmatpush2.msra.mxu0 %v252
  %1082 = vmatprep.subr.mxu0 %v249
  %1083 = vmatpush2.msra.mxu0 %v248
  %1084 = vmatprep.subr.mxu0 %v245
  %1085 = vmatpush2.msra.mxu0 %v244
  %1086 = vmatprep.subr.mxu0 %v241
  %1087 = vmatpush2.msra.mxu0 %v240
  %1088 = vmatprep.subr.mxu0 %v237
  %1089 = vmatpush2.msra.mxu0 %v236
  %1090 = vmatprep.subr.mxu0 %v233
  %1091 = vmatpush2.msra.mxu0 %v232
  %1092 = vmatprep.subr.mxu0 %v229
  %1093 = vmatpush2.msra.mxu0 %v228
  %1094 = vmatprep.subr.mxu0 %v225
  %1095 = vmatpush2.msra.mxu0 %v224
  %1096 = vmatprep.subr.mxu0 %v221
  %1097 = vmatpush2.msra.mxu0 %v220
  %1098 = vmatprep.subr.mxu0 %v217
  %1099 = vmatpush2.msra.mxu0 %v216
  %1100 = vmatprep.subr.mxu0 %v213
  %1101 = vmatpush2.msra.mxu0 %v212
  %1102 = vmatprep.subr.mxu0 %v209
  %1103 = vmatpush2.msra.mxu0 %v208
  %1104 = vmatprep.mubr.f32.mxu0 %v399
  %1105 = vmatmul.mubr.f32.gmra.mxu0 %v398
  %v1106 = vpop.f32.mrf.mxu0
  %v1107 = vadd.f32 0.0, %v1106
  %v1108 = vpop.f32.mrf.mxu0
  %v1109 = vadd.f32 0.0, %v1108
  %1110 = vmatprep.mubr.f32.mxu0 %v403
  %1111 = vmatmul.mubr.f32.gmra.mxu0 %v402
  %v1112 = vpop.f32.mrf.mxu0
  %v1113 = vadd.f32 0.0, %v1112
  %v1114 = vpop.f32.mrf.mxu0
  %v1115 = vadd.f32 0.0, %v1114
  %1116 = vmatprep.mubr.f32.mxu0 %v407
  %1117 = vmatmul.mubr.f32.gmra.mxu0 %v406
  %v1118 = vpop.f32.mrf.mxu0
  %v1119 = vadd.f32 0.0, %v1118
  %v1120 = vpop.f32.mrf.mxu0
  %v1121 = vadd.f32 0.0, %v1120
  %1122 = vmatprep.mubr.f32.mxu0 %v411
  %1123 = vmatmul.mubr.f32.gmra.mxu0 %v410
  %v1124 = vpop.f32.mrf.mxu0
  %v1125 = vadd.f32 0.0, %v1124
  %v1126 = vpop.f32.mrf.mxu0
  %v1127 = vadd.f32 0.0, %v1126
  %1128 = vmatprep.mubr.f32.mxu0 %v415
  %1129 = vmatmul.mubr.f32.gmra.mxu0 %v414
  %v1130 = vpop.f32.mrf.mxu0
  %v1131 = vadd.f32 0.0, %v1130
  %v1132 = vpop.f32.mrf.mxu0
  %v1133 = vadd.f32 0.0, %v1132
  %1134 = vmatprep.mubr.f32.mxu0 %v419
  %1135 = vmatmul.mubr.f32.gmra.mxu0 %v418
  %v1136 = vpop.f32.mrf.mxu0
  %v1137 = vadd.f32 0.0, %v1136
  %v1138 = vpop.f32.mrf.mxu0
  %v1139 = vadd.f32 0.0, %v1138
  %1140 = vmatprep.mubr.f32.mxu0 %v423
  %1141 = vmatmul.mubr.f32.gmra.mxu0 %v422
  %v1142 = vpop.f32.mrf.mxu0
  %v1143 = vadd.f32 0.0, %v1142
  %v1144 = vpop.f32.mrf.mxu0
  %v1145 = vadd.f32 0.0, %v1144
  %1146 = vmatprep.mubr.f32.mxu0 %v427
  %1147 = vmatmul.mubr.f32.gmra.mxu0 %v426
  %v1148 = vpop.f32.mrf.mxu0
  %v1149 = vadd.f32 0.0, %v1148
  %v1150 = vpop.f32.mrf.mxu0
  %v1151 = vadd.f32 0.0, %v1150
  %1152 = vmatprep.mubr.f32.mxu0 %v431
  %1153 = vmatmul.mubr.f32.gmra.mxu0 %v430
  %v1154 = vpop.f32.mrf.mxu0
  %v1155 = vadd.f32 0.0, %v1154
  %v1156 = vpop.f32.mrf.mxu0
  %v1157 = vadd.f32 0.0, %v1156
  %1158 = vmatprep.mubr.f32.mxu0 %v435
  %1159 = vmatmul.mubr.f32.gmra.mxu0 %v434
  %v1160 = vpop.f32.mrf.mxu0
  %v1161 = vadd.f32 0.0, %v1160
  %v1162 = vpop.f32.mrf.mxu0
  %v1163 = vadd.f32 0.0, %v1162
  %1164 = vmatprep.mubr.f32.mxu0 %v439
  %1165 = vmatmul.mubr.f32.gmra.mxu0 %v438
  %v1166 = vpop.f32.mrf.mxu0
  %v1167 = vadd.f32 0.0, %v1166
  %v1168 = vpop.f32.mrf.mxu0
  %v1169 = vadd.f32 0.0, %v1168
  %1170 = vmatprep.mubr.f32.mxu0 %v443
  %1171 = vmatmul.mubr.f32.gmra.mxu0 %v442
  %v1172 = vpop.f32.mrf.mxu0
  %v1173 = vadd.f32 0.0, %v1172
  %v1174 = vpop.f32.mrf.mxu0
  %v1175 = vadd.f32 0.0, %v1174
  %1176 = vmatprep.mubr.f32.mxu0 %v447
  %1177 = vmatmul.mubr.f32.gmra.mxu0 %v446
  %v1178 = vpop.f32.mrf.mxu0
  %v1179 = vadd.f32 0.0, %v1178
  %v1180 = vpop.f32.mrf.mxu0
  %v1181 = vadd.f32 0.0, %v1180
  %1182 = vmatprep.mubr.f32.mxu0 %v451
  %1183 = vmatmul.mubr.f32.gmra.mxu0 %v450
  %v1184 = vpop.f32.mrf.mxu0
  %v1185 = vadd.f32 0.0, %v1184
  %v1186 = vpop.f32.mrf.mxu0
  %v1187 = vadd.f32 0.0, %v1186
  %1188 = vmatprep.mubr.f32.mxu0 %v455
  %1189 = vmatmul.mubr.f32.gmra.mxu0 %v454
  %v1190 = vpop.f32.mrf.mxu0
  %v1191 = vadd.f32 0.0, %v1190
  %v1192 = vpop.f32.mrf.mxu0
  %v1193 = vadd.f32 0.0, %v1192
  %1194 = vmatprep.mubr.f32.mxu0 %v459
  %1195 = vmatmul.mubr.f32.gmra.mxu0 %v458
  %v1196 = vpop.f32.mrf.mxu0
  %v1197 = vadd.f32 0.0, %v1196
  %v1198 = vpop.f32.mrf.mxu0
  %v1199 = vadd.f32 0.0, %v1198
  %1200 = vmatprep.mubr.f32.mxu0 %v463
  %1201 = vmatmul.mubr.f32.gmra.mxu0 %v462
  %v1202 = vpop.f32.mrf.mxu0
  %v1203 = vadd.f32 0.0, %v1202
  %v1204 = vpop.f32.mrf.mxu0
  %v1205 = vadd.f32 0.0, %v1204
  %1206 = vmatprep.mubr.f32.mxu0 %v467
  %1207 = vmatmul.mubr.f32.gmra.mxu0 %v466
  %v1208 = vpop.f32.mrf.mxu0
  %v1209 = vadd.f32 0.0, %v1208
  %v1210 = vpop.f32.mrf.mxu0
  %v1211 = vadd.f32 0.0, %v1210
  %1212 = vmatprep.mubr.f32.mxu0 %v471
  %1213 = vmatmul.mubr.f32.gmra.mxu0 %v470
  %v1214 = vpop.f32.mrf.mxu0
  %v1215 = vadd.f32 0.0, %v1214
  %v1216 = vpop.f32.mrf.mxu0
  %v1217 = vadd.f32 0.0, %v1216
  %1218 = vmatprep.mubr.f32.mxu0 %v475
  %1219 = vmatmul.mubr.f32.gmra.mxu0 %v474
  %v1220 = vpop.f32.mrf.mxu0
  %v1221 = vadd.f32 0.0, %v1220
  %v1222 = vpop.f32.mrf.mxu0
  %v1223 = vadd.f32 0.0, %v1222
  %1224 = vmatprep.mubr.f32.mxu0 %v479
  %1225 = vmatmul.mubr.f32.gmra.mxu0 %v478
  %v1226 = vpop.f32.mrf.mxu0
  %v1227 = vadd.f32 0.0, %v1226
  %v1228 = vpop.f32.mrf.mxu0
  %v1229 = vadd.f32 0.0, %v1228
  %1230 = vmatprep.mubr.f32.mxu0 %v483
  %1231 = vmatmul.mubr.f32.gmra.mxu0 %v482
  %v1232 = vpop.f32.mrf.mxu0
  %v1233 = vadd.f32 0.0, %v1232
  %v1234 = vpop.f32.mrf.mxu0
  %v1235 = vadd.f32 0.0, %v1234
  %1236 = vmatprep.mubr.f32.mxu0 %v487
  %1237 = vmatmul.mubr.f32.gmra.mxu0 %v486
  %v1238 = vpop.f32.mrf.mxu0
  %v1239 = vadd.f32 0.0, %v1238
  %v1240 = vpop.f32.mrf.mxu0
  %v1241 = vadd.f32 0.0, %v1240
  %1242 = vmatprep.mubr.f32.mxu0 %v491
  %1243 = vmatmul.mubr.f32.gmra.mxu0 %v490
  %v1244 = vpop.f32.mrf.mxu0
  %v1245 = vadd.f32 0.0, %v1244
  %v1246 = vpop.f32.mrf.mxu0
  %v1247 = vadd.f32 0.0, %v1246
  %1248 = vmatprep.mubr.f32.mxu0 %v495
  %1249 = vmatmul.mubr.f32.gmra.mxu0 %v494
  %v1250 = vpop.f32.mrf.mxu0
  %v1251 = vadd.f32 0.0, %v1250
  %v1252 = vpop.f32.mrf.mxu0
  %v1253 = vadd.f32 0.0, %v1252
  %1254 = vmatprep.mubr.f32.mxu0 %v499
  %1255 = vmatmul.mubr.f32.gmra.mxu0 %v498
  %v1256 = vpop.f32.mrf.mxu0
  %v1257 = vadd.f32 0.0, %v1256
  %v1258 = vpop.f32.mrf.mxu0
  %v1259 = vadd.f32 0.0, %v1258
  %1260 = vmatprep.mubr.f32.mxu0 %v503
  %1261 = vmatmul.mubr.f32.gmra.mxu0 %v502
  %v1262 = vpop.f32.mrf.mxu0
  %v1263 = vadd.f32 0.0, %v1262
  %v1264 = vpop.f32.mrf.mxu0
  %v1265 = vadd.f32 0.0, %v1264
  %1266 = vmatprep.mubr.f32.mxu0 %v507
  %1267 = vmatmul.mubr.f32.gmra.mxu0 %v506
  %v1268 = vpop.f32.mrf.mxu0
  %v1269 = vadd.f32 0.0, %v1268
  %v1270 = vpop.f32.mrf.mxu0
  %v1271 = vadd.f32 0.0, %v1270
  %1272 = vmatprep.mubr.f32.mxu0 %v511
  %1273 = vmatmul.mubr.f32.gmra.mxu0 %v510
  %v1274 = vpop.f32.mrf.mxu0
  %v1275 = vadd.f32 0.0, %v1274
  %v1276 = vpop.f32.mrf.mxu0
  %v1277 = vadd.f32 0.0, %v1276
  %1278 = vmatprep.mubr.f32.mxu0 %v515
  %1279 = vmatmul.mubr.f32.gmra.mxu0 %v514
  %v1280 = vpop.f32.mrf.mxu0
  %v1281 = vadd.f32 0.0, %v1280
  %v1282 = vpop.f32.mrf.mxu0
  %v1283 = vadd.f32 0.0, %v1282
  %1284 = vmatprep.mubr.f32.mxu0 %v519
  %1285 = vmatmul.mubr.f32.gmra.mxu0 %v518
  %v1286 = vpop.f32.mrf.mxu0
  %v1287 = vadd.f32 0.0, %v1286
  %v1288 = vpop.f32.mrf.mxu0
  %v1289 = vadd.f32 0.0, %v1288
  %1290 = vmatprep.mubr.f32.mxu0 %v523
  %1291 = vmatmul.mubr.f32.gmra.mxu0 %v522
  %v1292 = vpop.f32.mrf.mxu0
  %v1293 = vadd.f32 0.0, %v1292
  %v1294 = vpop.f32.mrf.mxu0
  %v1295 = vadd.f32 0.0, %v1294
  %1296 = vdwg.mxu0
  %1297 = vmatprep.subr.mxu0 %v333
  %1298 = vmatpush1.msra.mxu0 %v332
  %1299 = vmatprep.subr.mxu0 %v329
  %1300 = vmatpush1.msra.mxu0 %v328
  %1301 = vmatprep.subr.mxu0 %v325
  %1302 = vmatpush1.msra.mxu0 %v324
  %1303 = vmatprep.subr.mxu0 %v321
  %1304 = vmatpush1.msra.mxu0 %v320
  %1305 = vmatprep.subr.mxu0 %v317
  %1306 = vmatpush1.msra.mxu0 %v316
  %1307 = vmatprep.subr.mxu0 %v313
  %1308 = vmatpush1.msra.mxu0 %v312
  %1309 = vmatprep.subr.mxu0 %v309
  %1310 = vmatpush1.msra.mxu0 %v308
  %1311 = vmatprep.subr.mxu0 %v305
  %1312 = vmatpush1.msra.mxu0 %v304
  %1313 = vmatprep.subr.mxu0 %v301
  %1314 = vmatpush1.msra.mxu0 %v300
  %1315 = vmatprep.subr.mxu0 %v297
  %1316 = vmatpush1.msra.mxu0 %v296
  %1317 = vmatprep.subr.mxu0 %v293
  %1318 = vmatpush1.msra.mxu0 %v292
  %1319 = vmatprep.subr.mxu0 %v289
  %1320 = vmatpush1.msra.mxu0 %v288
  %1321 = vmatprep.subr.mxu0 %v285
  %1322 = vmatpush1.msra.mxu0 %v284
  %1323 = vmatprep.subr.mxu0 %v281
  %1324 = vmatpush1.msra.mxu0 %v280
  %1325 = vmatprep.subr.mxu0 %v277
  %1326 = vmatpush1.msra.mxu0 %v276
  %1327 = vmatprep.subr.mxu0 %v273
  %1328 = vmatpush1.msra.mxu0 %v272
  %1329 = vmatprep.subr.mxu0 %v397
  %1330 = vmatpush2.msra.mxu0 %v396
  %1331 = vmatprep.subr.mxu0 %v393
  %1332 = vmatpush2.msra.mxu0 %v392
  %1333 = vmatprep.subr.mxu0 %v389
  %1334 = vmatpush2.msra.mxu0 %v388
  %1335 = vmatprep.subr.mxu0 %v385
  %1336 = vmatpush2.msra.mxu0 %v384
  %1337 = vmatprep.subr.mxu0 %v381
  %1338 = vmatpush2.msra.mxu0 %v380
  %1339 = vmatprep.subr.mxu0 %v377
  %1340 = vmatpush2.msra.mxu0 %v376
  %1341 = vmatprep.subr.mxu0 %v373
  %1342 = vmatpush2.msra.mxu0 %v372
  %1343 = vmatprep.subr.mxu0 %v369
  %1344 = vmatpush2.msra.mxu0 %v368
  %1345 = vmatprep.subr.mxu0 %v365
  %1346 = vmatpush2.msra.mxu0 %v364
  %1347 = vmatprep.subr.mxu0 %v361
  %1348 = vmatpush2.msra.mxu0 %v360
  %1349 = vmatprep.subr.mxu0 %v357
  %1350 = vmatpush2.msra.mxu0 %v356
  %1351 = vmatprep.subr.mxu0 %v353
  %1352 = vmatpush2.msra.mxu0 %v352
  %1353 = vmatprep.subr.mxu0 %v349
  %1354 = vmatpush2.msra.mxu0 %v348
  %1355 = vmatprep.subr.mxu0 %v345
  %1356 = vmatpush2.msra.mxu0 %v344
  %1357 = vmatprep.subr.mxu0 %v341
  %1358 = vmatpush2.msra.mxu0 %v340
  %1359 = vmatprep.subr.mxu0 %v337
  %1360 = vmatpush2.msra.mxu0 %v336
  %1361 = vmatprep.mubr.f32.mxu0 %v401
  %1362 = vmatmul.mubr.f32.gmra.mxu0 %v400
  %v1363 = vpop.f32.mrf.mxu0
  %v1364 = vadd.f32 %v1107, %v1363
  %v1365 = vpop.f32.mrf.mxu0
  %v1366 = vadd.f32 %v1109, %v1365
  %1367 = vmatprep.mubr.f32.mxu0 %v405
  %1368 = vmatmul.mubr.f32.gmra.mxu0 %v404
  %v1369 = vpop.f32.mrf.mxu0
  %v1370 = vadd.f32 %v1113, %v1369
  %v1371 = vpop.f32.mrf.mxu0
  %v1372 = vadd.f32 %v1115, %v1371
  %1373 = vmatprep.mubr.f32.mxu0 %v409
  %1374 = vmatmul.mubr.f32.gmra.mxu0 %v408
  %v1375 = vpop.f32.mrf.mxu0
  %v1376 = vadd.f32 %v1119, %v1375
  %v1377 = vpop.f32.mrf.mxu0
  %v1378 = vadd.f32 %v1121, %v1377
  %1379 = vmatprep.mubr.f32.mxu0 %v413
  %1380 = vmatmul.mubr.f32.gmra.mxu0 %v412
  %v1381 = vpop.f32.mrf.mxu0
  %v1382 = vadd.f32 %v1125, %v1381
  %v1383 = vpop.f32.mrf.mxu0
  %v1384 = vadd.f32 %v1127, %v1383
  %1385 = vmatprep.mubr.f32.mxu0 %v417
  %1386 = vmatmul.mubr.f32.gmra.mxu0 %v416
  %v1387 = vpop.f32.mrf.mxu0
  %v1388 = vadd.f32 %v1131, %v1387
  %v1389 = vpop.f32.mrf.mxu0
  %v1390 = vadd.f32 %v1133, %v1389
  %1391 = vmatprep.mubr.f32.mxu0 %v421
  %1392 = vmatmul.mubr.f32.gmra.mxu0 %v420
  %v1393 = vpop.f32.mrf.mxu0
  %v1394 = vadd.f32 %v1137, %v1393
  %v1395 = vpop.f32.mrf.mxu0
  %v1396 = vadd.f32 %v1139, %v1395
  %1397 = vmatprep.mubr.f32.mxu0 %v425
  %1398 = vmatmul.mubr.f32.gmra.mxu0 %v424
  %v1399 = vpop.f32.mrf.mxu0
  %v1400 = vadd.f32 %v1143, %v1399
  %v1401 = vpop.f32.mrf.mxu0
  %v1402 = vadd.f32 %v1145, %v1401
  %1403 = vmatprep.mubr.f32.mxu0 %v429
  %1404 = vmatmul.mubr.f32.gmra.mxu0 %v428
  %v1405 = vpop.f32.mrf.mxu0
  %v1406 = vadd.f32 %v1149, %v1405
  %v1407 = vpop.f32.mrf.mxu0
  %v1408 = vadd.f32 %v1151, %v1407
  %1409 = vmatprep.mubr.f32.mxu0 %v433
  %1410 = vmatmul.mubr.f32.gmra.mxu0 %v432
  %v1411 = vpop.f32.mrf.mxu0
  %v1412 = vadd.f32 %v1155, %v1411
  %v1413 = vpop.f32.mrf.mxu0
  %v1414 = vadd.f32 %v1157, %v1413
  %1415 = vmatprep.mubr.f32.mxu0 %v437
  %1416 = vmatmul.mubr.f32.gmra.mxu0 %v436
  %v1417 = vpop.f32.mrf.mxu0
  %v1418 = vadd.f32 %v1161, %v1417
  %v1419 = vpop.f32.mrf.mxu0
  %v1420 = vadd.f32 %v1163, %v1419
  %1421 = vmatprep.mubr.f32.mxu0 %v441
  %1422 = vmatmul.mubr.f32.gmra.mxu0 %v440
  %v1423 = vpop.f32.mrf.mxu0
  %v1424 = vadd.f32 %v1167, %v1423
  %v1425 = vpop.f32.mrf.mxu0
  %v1426 = vadd.f32 %v1169, %v1425
  %1427 = vmatprep.mubr.f32.mxu0 %v445
  %1428 = vmatmul.mubr.f32.gmra.mxu0 %v444
  %v1429 = vpop.f32.mrf.mxu0
  %v1430 = vadd.f32 %v1173, %v1429
  %v1431 = vpop.f32.mrf.mxu0
  %v1432 = vadd.f32 %v1175, %v1431
  %1433 = vmatprep.mubr.f32.mxu0 %v449
  %1434 = vmatmul.mubr.f32.gmra.mxu0 %v448
  %v1435 = vpop.f32.mrf.mxu0
  %v1436 = vadd.f32 %v1179, %v1435
  %v1437 = vpop.f32.mrf.mxu0
  %v1438 = vadd.f32 %v1181, %v1437
  %1439 = vmatprep.mubr.f32.mxu0 %v453
  %1440 = vmatmul.mubr.f32.gmra.mxu0 %v452
  %v1441 = vpop.f32.mrf.mxu0
  %v1442 = vadd.f32 %v1185, %v1441
  %v1443 = vpop.f32.mrf.mxu0
  %v1444 = vadd.f32 %v1187, %v1443
  %1445 = vmatprep.mubr.f32.mxu0 %v457
  %1446 = vmatmul.mubr.f32.gmra.mxu0 %v456
  %v1447 = vpop.f32.mrf.mxu0
  %v1448 = vadd.f32 %v1191, %v1447
  %v1449 = vpop.f32.mrf.mxu0
  %v1450 = vadd.f32 %v1193, %v1449
  %1451 = vmatprep.mubr.f32.mxu0 %v461
  %1452 = vmatmul.mubr.f32.gmra.mxu0 %v460
  %v1453 = vpop.f32.mrf.mxu0
  %v1454 = vadd.f32 %v1197, %v1453
  %v1455 = vpop.f32.mrf.mxu0
  %v1456 = vadd.f32 %v1199, %v1455
  %1457 = vmatprep.mubr.f32.mxu0 %v465
  %1458 = vmatmul.mubr.f32.gmra.mxu0 %v464
  %v1459 = vpop.f32.mrf.mxu0
  %v1460 = vadd.f32 %v1203, %v1459
  %v1461 = vpop.f32.mrf.mxu0
  %v1462 = vadd.f32 %v1205, %v1461
  %1463 = vmatprep.mubr.f32.mxu0 %v469
  %1464 = vmatmul.mubr.f32.gmra.mxu0 %v468
  %v1465 = vpop.f32.mrf.mxu0
  %v1466 = vadd.f32 %v1209, %v1465
  %v1467 = vpop.f32.mrf.mxu0
  %v1468 = vadd.f32 %v1211, %v1467
  %1469 = vmatprep.mubr.f32.mxu0 %v473
  %1470 = vmatmul.mubr.f32.gmra.mxu0 %v472
  %v1471 = vpop.f32.mrf.mxu0
  %v1472 = vadd.f32 %v1215, %v1471
  %v1473 = vpop.f32.mrf.mxu0
  %v1474 = vadd.f32 %v1217, %v1473
  %1475 = vmatprep.mubr.f32.mxu0 %v477
  %1476 = vmatmul.mubr.f32.gmra.mxu0 %v476
  %v1477 = vpop.f32.mrf.mxu0
  %v1478 = vadd.f32 %v1221, %v1477
  %v1479 = vpop.f32.mrf.mxu0
  %v1480 = vadd.f32 %v1223, %v1479
  %1481 = vmatprep.mubr.f32.mxu0 %v481
  %1482 = vmatmul.mubr.f32.gmra.mxu0 %v480
  %v1483 = vpop.f32.mrf.mxu0
  %v1484 = vadd.f32 %v1227, %v1483
  %v1485 = vpop.f32.mrf.mxu0
  %v1486 = vadd.f32 %v1229, %v1485
  %1487 = vmatprep.mubr.f32.mxu0 %v485
  %1488 = vmatmul.mubr.f32.gmra.mxu0 %v484
  %v1489 = vpop.f32.mrf.mxu0
  %v1490 = vadd.f32 %v1233, %v1489
  %v1491 = vpop.f32.mrf.mxu0
  %v1492 = vadd.f32 %v1235, %v1491
  %1493 = vmatprep.mubr.f32.mxu0 %v489
  %1494 = vmatmul.mubr.f32.gmra.mxu0 %v488
  %v1495 = vpop.f32.mrf.mxu0
  %v1496 = vadd.f32 %v1239, %v1495
  %v1497 = vpop.f32.mrf.mxu0
  %v1498 = vadd.f32 %v1241, %v1497
  %1499 = vmatprep.mubr.f32.mxu0 %v493
  %1500 = vmatmul.mubr.f32.gmra.mxu0 %v492
  %v1501 = vpop.f32.mrf.mxu0
  %v1502 = vadd.f32 %v1245, %v1501
  %v1503 = vpop.f32.mrf.mxu0
  %v1504 = vadd.f32 %v1247, %v1503
  %1505 = vmatprep.mubr.f32.mxu0 %v497
  %1506 = vmatmul.mubr.f32.gmra.mxu0 %v496
  %v1507 = vpop.f32.mrf.mxu0
  %v1508 = vadd.f32 %v1251, %v1507
  %v1509 = vpop.f32.mrf.mxu0
  %v1510 = vadd.f32 %v1253, %v1509
  %1511 = vmatprep.mubr.f32.mxu0 %v501
  %1512 = vmatmul.mubr.f32.gmra.mxu0 %v500
  %v1513 = vpop.f32.mrf.mxu0
  %v1514 = vadd.f32 %v1257, %v1513
  %v1515 = vpop.f32.mrf.mxu0
  %v1516 = vadd.f32 %v1259, %v1515
  %1517 = vmatprep.mubr.f32.mxu0 %v505
  %1518 = vmatmul.mubr.f32.gmra.mxu0 %v504
  %v1519 = vpop.f32.mrf.mxu0
  %v1520 = vadd.f32 %v1263, %v1519
  %v1521 = vpop.f32.mrf.mxu0
  %v1522 = vadd.f32 %v1265, %v1521
  %1523 = vmatprep.mubr.f32.mxu0 %v509
  %1524 = vmatmul.mubr.f32.gmra.mxu0 %v508
  %v1525 = vpop.f32.mrf.mxu0
  %v1526 = vadd.f32 %v1269, %v1525
  %v1527 = vpop.f32.mrf.mxu0
  %v1528 = vadd.f32 %v1271, %v1527
  %1529 = vmatprep.mubr.f32.mxu0 %v513
  %1530 = vmatmul.mubr.f32.gmra.mxu0 %v512
  %v1531 = vpop.f32.mrf.mxu0
  %v1532 = vadd.f32 %v1275, %v1531
  %v1533 = vpop.f32.mrf.mxu0
  %v1534 = vadd.f32 %v1277, %v1533
  %1535 = vmatprep.mubr.f32.mxu0 %v517
  %1536 = vmatmul.mubr.f32.gmra.mxu0 %v516
  %v1537 = vpop.f32.mrf.mxu0
  %v1538 = vadd.f32 %v1281, %v1537
  %v1539 = vpop.f32.mrf.mxu0
  %v1540 = vadd.f32 %v1283, %v1539
  %1541 = vmatprep.mubr.f32.mxu0 %v521
  %1542 = vmatmul.mubr.f32.gmra.mxu0 %v520
  %v1543 = vpop.f32.mrf.mxu0
  %v1544 = vadd.f32 %v1287, %v1543
  %v1545 = vpop.f32.mrf.mxu0
  %v1546 = vadd.f32 %v1289, %v1545
  %1547 = vmatprep.mubr.f32.mxu0 %v525
  %1548 = vmatmul.mubr.f32.gmra.mxu0 %v524
  %v1549 = vpop.f32.mrf.mxu0
  %v1550 = vadd.f32 %v1293, %v1549
  %v1551 = vpop.f32.mrf.mxu0
  %v1552 = vadd.f32 %v1295, %v1551
  %1553 = vdwg.mxu0
  %v1554 = vmax.f32 %v850, %v852
  %v1555 = vmax.f32 %v856, %v858
  %v1556 = vmax.f32 %v862, %v864
  %v1557 = vmax.f32 %v868, %v870
  %v1558 = vmax.f32 %v874, %v876
  %v1559 = vmax.f32 %v880, %v882
  %v1560 = vmax.f32 %v886, %v888
  %v1561 = vmax.f32 %v892, %v894
  %v1562 = vmax.f32 %v898, %v900
  %v1563 = vmax.f32 %v904, %v906
  %v1564 = vmax.f32 %v910, %v912
  %v1565 = vmax.f32 %v916, %v918
  %v1566 = vmax.f32 %v922, %v924
  %v1567 = vmax.f32 %v928, %v930
  %v1568 = vmax.f32 %v934, %v936
  %v1569 = vmax.f32 %v940, %v942
  %v1570 = vmax.f32 %v946, %v948
  %v1571 = vmax.f32 %v952, %v954
  %v1572 = vmax.f32 %v958, %v960
  %v1573 = vmax.f32 %v964, %v966
  %v1574 = vmax.f32 %v970, %v972
  %v1575 = vmax.f32 %v976, %v978
  %v1576 = vmax.f32 %v982, %v984
  %v1577 = vmax.f32 %v988, %v990
  %v1578 = vmax.f32 %v994, %v996
  %v1579 = vmax.f32 %v1000, %v1002
  %v1580 = vmax.f32 %v1006, %v1008
  %v1581 = vmax.f32 %v1012, %v1014
  %v1582 = vmax.f32 %v1018, %v1020
  %v1583 = vmax.f32 %v1024, %v1026
  %v1584 = vmax.f32 %v1030, %v1032
  %v1585 = vmax.f32 %v1036, %v1038
  %v1586 = vmax.f32 %v1364, %v1366
  %v1587 = vmax.f32 %v1370, %v1372
  %v1588 = vmax.f32 %v1376, %v1378
  %v1589 = vmax.f32 %v1382, %v1384
  %v1590 = vmax.f32 %v1388, %v1390
  %v1591 = vmax.f32 %v1394, %v1396
  %v1592 = vmax.f32 %v1400, %v1402
  %v1593 = vmax.f32 %v1406, %v1408
  %v1594 = vmax.f32 %v1412, %v1414
  %v1595 = vmax.f32 %v1418, %v1420
  %v1596 = vmax.f32 %v1424, %v1426
  %v1597 = vmax.f32 %v1430, %v1432
  %v1598 = vmax.f32 %v1436, %v1438
  %v1599 = vmax.f32 %v1442, %v1444
  %v1600 = vmax.f32 %v1448, %v1450
  %v1601 = vmax.f32 %v1454, %v1456
  %v1602 = vmax.f32 %v1460, %v1462
  %v1603 = vmax.f32 %v1466, %v1468
  %v1604 = vmax.f32 %v1472, %v1474
  %v1605 = vmax.f32 %v1478, %v1480
  %v1606 = vmax.f32 %v1484, %v1486
  %v1607 = vmax.f32 %v1490, %v1492
  %v1608 = vmax.f32 %v1496, %v1498
  %v1609 = vmax.f32 %v1502, %v1504
  %v1610 = vmax.f32 %v1508, %v1510
  %v1611 = vmax.f32 %v1514, %v1516
  %v1612 = vmax.f32 %v1520, %v1522
  %v1613 = vmax.f32 %v1526, %v1528
  %v1614 = vmax.f32 %v1532, %v1534
  %v1615 = vmax.f32 %v1538, %v1540
  %v1616 = vmax.f32 %v1544, %v1546
  %v1617 = vmax.f32 %v1550, %v1552
  %v1618 = vmax.f32 %v1554, %v1586
  %v1619 = vmax.f32 %v1555, %v1587
  %v1620 = vmax.f32 %v1556, %v1588
  %v1621 = vmax.f32 %v1557, %v1589
  %v1622 = vmax.f32 %v1558, %v1590
  %v1623 = vmax.f32 %v1559, %v1591
  %v1624 = vmax.f32 %v1560, %v1592
  %v1625 = vmax.f32 %v1561, %v1593
  %v1626 = vmax.f32 %v1562, %v1594
  %v1627 = vmax.f32 %v1563, %v1595
  %v1628 = vmax.f32 %v1564, %v1596
  %v1629 = vmax.f32 %v1565, %v1597
  %v1630 = vmax.f32 %v1566, %v1598
  %v1631 = vmax.f32 %v1567, %v1599
  %v1632 = vmax.f32 %v1568, %v1600
  %v1633 = vmax.f32 %v1569, %v1601
  %v1634 = vmax.f32 %v1570, %v1602
  %v1635 = vmax.f32 %v1571, %v1603
  %v1636 = vmax.f32 %v1572, %v1604
  %v1637 = vmax.f32 %v1573, %v1605
  %v1638 = vmax.f32 %v1574, %v1606
  %v1639 = vmax.f32 %v1575, %v1607
  %v1640 = vmax.f32 %v1576, %v1608
  %v1641 = vmax.f32 %v1577, %v1609
  %v1642 = vmax.f32 %v1578, %v1610
  %v1643 = vmax.f32 %v1579, %v1611
  %v1644 = vmax.f32 %v1580, %v1612
  %v1645 = vmax.f32 %v1581, %v1613
  %v1646 = vmax.f32 %v1582, %v1614
  %v1647 = vmax.f32 %v1583, %v1615
  %v1648 = vmax.f32 %v1584, %v1616
  %v1649 = vmax.f32 %v1585, %v1617
  %v1650 = vld [vmem:[%s2] sm:$0xff]
  %v1651 = vld [vmem:[%s2 + $0x8] sm:$0xff]
  %v1652 = vld [vmem:[%s2 + $0x10] sm:$0xff]
  %v1653 = vld [vmem:[%s2 + $0x18] sm:$0xff]
  %v1654 = vld [vmem:[%s2 + $0x20] sm:$0xff]
  %v1655 = vld [vmem:[%s2 + $0x28] sm:$0xff]
  %v1656 = vld [vmem:[%s2 + $0x30] sm:$0xff]
  %v1657 = vld [vmem:[%s2 + $0x38] sm:$0xff]
  %v1658 = vld [vmem:[%s2 + $0x40] sm:$0xff]
  %v1659 = vld [vmem:[%s2 + $0x48] sm:$0xff]
  %v1660 = vld [vmem:[%s2 + $0x50] sm:$0xff]
  %v1661 = vld [vmem:[%s2 + $0x58] sm:$0xff]
  %v1662 = vld [vmem:[%s2 + $0x60] sm:$0xff]
  %v1663 = vld [vmem:[%s2 + $0x68] sm:$0xff]
  %v1664 = vld [vmem:[%s2 + $0x70] sm:$0xff]
  %v1665 = vld [vmem:[%s2 + $0x78] sm:$0xff]
  %v1666 = vld [vmem:[%s2 + $0x80] sm:$0xff]
  %v1667 = vld [vmem:[%s2 + $0x88] sm:$0xff]
  %v1668 = vld [vmem:[%s2 + $0x90] sm:$0xff]
  %v1669 = vld [vmem:[%s2 + $0x98] sm:$0xff]
  %v1670 = vld [vmem:[%s2 + $0xa0] sm:$0xff]
  %v1671 = vld [vmem:[%s2 + $0xa8] sm:$0xff]
  %v1672 = vld [vmem:[%s2 + $0xb0] sm:$0xff]
  %v1673 = vld [vmem:[%s2 + $0xb8] sm:$0xff]
  %v1674 = vld [vmem:[%s2 + $0xc0] sm:$0xff]
  %v1675 = vld [vmem:[%s2 + $0xc8] sm:$0xff]
  %v1676 = vld [vmem:[%s2 + $0xd0] sm:$0xff]
  %v1677 = vld [vmem:[%s2 + $0xd8] sm:$0xff]
  %v1678 = vld [vmem:[%s2 + $0xe0] sm:$0xff]
  %v1679 = vld [vmem:[%s2 + $0xe8] sm:$0xff]
  %v1680 = vld [vmem:[%s2 + $0xf0] sm:$0xff]
  %v1681 = vld [vmem:[%s2 + $0xf8] sm:$0xff]
  %1683 = vset.pattern.permute.xlu0 0
  %1684 = vperm.xlu0 %1683, %v1650
  %v1685 = vpop.permute.xlu0 %1684
  %1688 = vset.pattern.permute.xlu0 0
  %1689 = vperm.xlu0 %1688, %v1651
  %v1690 = vpop.permute.xlu0 %1689
  %1693 = vset.pattern.permute.xlu0 0
  %1694 = vperm.xlu0 %1693, %v1652
  %v1695 = vpop.permute.xlu0 %1694
  %1698 = vset.pattern.permute.xlu0 0
  %1699 = vperm.xlu0 %1698, %v1653
  %v1700 = vpop.permute.xlu0 %1699
  %1703 = vset.pattern.permute.xlu0 0
  %1704 = vperm.xlu0 %1703, %v1654
  %v1705 = vpop.permute.xlu0 %1704
  %1708 = vset.pattern.permute.xlu0 0
  %1709 = vperm.xlu0 %1708, %v1655
  %v1710 = vpop.permute.xlu0 %1709
  %1713 = vset.pattern.permute.xlu0 0
  %1714 = vperm.xlu0 %1713, %v1656
  %v1715 = vpop.permute.xlu0 %1714
  %1718 = vset.pattern.permute.xlu0 0
  %1719 = vperm.xlu0 %1718, %v1657
  %v1720 = vpop.permute.xlu0 %1719
  %1723 = vset.pattern.permute.xlu0 0
  %1724 = vperm.xlu0 %1723, %v1658
  %v1725 = vpop.permute.xlu0 %1724
  %1728 = vset.pattern.permute.xlu0 0
  %1729 = vperm.xlu0 %1728, %v1659
  %v1730 = vpop.permute.xlu0 %1729
  %1733 = vset.pattern.permute.xlu0 0
  %1734 = vperm.xlu0 %1733, %v1660
  %v1735 = vpop.permute.xlu0 %1734
  %1738 = vset.pattern.permute.xlu0 0
  %1739 = vperm.xlu0 %1738, %v1661
  %v1740 = vpop.permute.xlu0 %1739
  %1743 = vset.pattern.permute.xlu0 0
  %1744 = vperm.xlu0 %1743, %v1662
  %v1745 = vpop.permute.xlu0 %1744
  %1748 = vset.pattern.permute.xlu0 0
  %1749 = vperm.xlu0 %1748, %v1663
  %v1750 = vpop.permute.xlu0 %1749
  %1753 = vset.pattern.permute.xlu0 0
  %1754 = vperm.xlu0 %1753, %v1664
  %v1755 = vpop.permute.xlu0 %1754
  %1758 = vset.pattern.permute.xlu0 0
  %1759 = vperm.xlu0 %1758, %v1665
  %v1760 = vpop.permute.xlu0 %1759
  %1763 = vset.pattern.permute.xlu0 0
  %1764 = vperm.xlu0 %1763, %v1666
  %v1765 = vpop.permute.xlu0 %1764
  %1768 = vset.pattern.permute.xlu0 0
  %1769 = vperm.xlu0 %1768, %v1667
  %v1770 = vpop.permute.xlu0 %1769
  %1773 = vset.pattern.permute.xlu0 0
  %1774 = vperm.xlu0 %1773, %v1668
  %v1775 = vpop.permute.xlu0 %1774
  %1778 = vset.pattern.permute.xlu0 0
  %1779 = vperm.xlu0 %1778, %v1669
  %v1780 = vpop.permute.xlu0 %1779
  %1783 = vset.pattern.permute.xlu0 0
  %1784 = vperm.xlu0 %1783, %v1670
  %v1785 = vpop.permute.xlu0 %1784
  %1788 = vset.pattern.permute.xlu0 0
  %1789 = vperm.xlu0 %1788, %v1671
  %v1790 = vpop.permute.xlu0 %1789
  %1793 = vset.pattern.permute.xlu0 0
  %1794 = vperm.xlu0 %1793, %v1672
  %v1795 = vpop.permute.xlu0 %1794
  %1798 = vset.pattern.permute.xlu0 0
  %1799 = vperm.xlu0 %1798, %v1673
  %v1800 = vpop.permute.xlu0 %1799
  %1803 = vset.pattern.permute.xlu0 0
  %1804 = vperm.xlu0 %1803, %v1674
  %v1805 = vpop.permute.xlu0 %1804
  %1808 = vset.pattern.permute.xlu0 0
  %1809 = vperm.xlu0 %1808, %v1675
  %v1810 = vpop.permute.xlu0 %1809
  %1813 = vset.pattern.permute.xlu0 0
  %1814 = vperm.xlu0 %1813, %v1676
  %v1815 = vpop.permute.xlu0 %1814
  %1818 = vset.pattern.permute.xlu0 0
  %1819 = vperm.xlu0 %1818, %v1677
  %v1820 = vpop.permute.xlu0 %1819
  %1823 = vset.pattern.permute.xlu0 0
  %1824 = vperm.xlu0 %1823, %v1678
  %v1825 = vpop.permute.xlu0 %1824
  %1828 = vset.pattern.permute.xlu0 0
  %1829 = vperm.xlu0 %1828, %v1679
  %v1830 = vpop.permute.xlu0 %1829
  %1833 = vset.pattern.permute.xlu0 0
  %1834 = vperm.xlu0 %1833, %v1680
  %v1835 = vpop.permute.xlu0 %1834
  %1838 = vset.pattern.permute.xlu0 0
  %1839 = vperm.xlu0 %1838, %v1681
  %v1840 = vpop.permute.xlu0 %1839
  %v1842 = vadd.f32 %v1618, %v1685
  %v1843 = vadd.f32 %v1619, %v1690
  %v1844 = vadd.f32 %v1620, %v1695
  %v1845 = vadd.f32 %v1621, %v1700
  %v1846 = vadd.f32 %v1622, %v1705
  %v1847 = vadd.f32 %v1623, %v1710
  %v1848 = vadd.f32 %v1624, %v1715
  %v1849 = vadd.f32 %v1625, %v1720
  %v1850 = vadd.f32 %v1626, %v1725
  %v1851 = vadd.f32 %v1627, %v1730
  %v1852 = vadd.f32 %v1628, %v1735
  %v1853 = vadd.f32 %v1629, %v1740
  %v1854 = vadd.f32 %v1630, %v1745
  %v1855 = vadd.f32 %v1631, %v1750
  %v1856 = vadd.f32 %v1632, %v1755
  %v1857 = vadd.f32 %v1633, %v1760
  %v1858 = vadd.f32 %v1634, %v1765
  %v1859 = vadd.f32 %v1635, %v1770
  %v1860 = vadd.f32 %v1636, %v1775
  %v1861 = vadd.f32 %v1637, %v1780
  %v1862 = vadd.f32 %v1638, %v1785
  %v1863 = vadd.f32 %v1639, %v1790
  %v1864 = vadd.f32 %v1640, %v1795
  %v1865 = vadd.f32 %v1641, %v1800
  %v1866 = vadd.f32 %v1642, %v1805
  %v1867 = vadd.f32 %v1643, %v1810
  %v1868 = vadd.f32 %v1644, %v1815
  %v1869 = vadd.f32 %v1645, %v1820
  %v1870 = vadd.f32 %v1646, %v1825
  %v1871 = vadd.f32 %v1647, %v1830
  %v1872 = vadd.f32 %v1648, %v1835
  %v1873 = vadd.f32 %v1649, %v1840
  %v1874 = vmax.f32 %v1842, 0.0
  %v1875 = vmax.f32 %v1843, 0.0
  %v1876 = vmax.f32 %v1844, 0.0
  %v1877 = vmax.f32 %v1845, 0.0
  %v1878 = vmax.f32 %v1846, 0.0
  %v1879 = vmax.f32 %v1847, 0.0
  %v1880 = vmax.f32 %v1848, 0.0
  %v1881 = vmax.f32 %v1849, 0.0
  %v1882 = vmax.f32 %v1850, 0.0
  %v1883 = vmax.f32 %v1851, 0.0
  %v1884 = vmax.f32 %v1852, 0.0
  %v1885 = vmax.f32 %v1853, 0.0
  %v1886 = vmax.f32 %v1854, 0.0
  %v1887 = vmax.f32 %v1855, 0.0
  %v1888 = vmax.f32 %v1856, 0.0
  %v1889 = vmax.f32 %v1857, 0.0
  %v1890 = vmax.f32 %v1858, 0.0
  %v1891 = vmax.f32 %v1859, 0.0
  %v1892 = vmax.f32 %v1860, 0.0
  %v1893 = vmax.f32 %v1861, 0.0
  %v1894 = vmax.f32 %v1862, 0.0
  %v1895 = vmax.f32 %v1863, 0.0
  %v1896 = vmax.f32 %v1864, 0.0
  %v1897 = vmax.f32 %v1865, 0.0
  %v1898 = vmax.f32 %v1866, 0.0
  %v1899 = vmax.f32 %v1867, 0.0
  %v1900 = vmax.f32 %v1868, 0.0
  %v1901 = vmax.f32 %v1869, 0.0
  %v1902 = vmax.f32 %v1870, 0.0
  %v1903 = vmax.f32 %v1871, 0.0
  %v1904 = vmax.f32 %v1872, 0.0
  %v1905 = vmax.f32 %v1873, 0.0
  %1906 = vst [vmem:[%s3] sm:$0xff] %v1874
  %1907 = vst [vmem:[%s3 + $0x8] sm:$0xff] %v1875
  %1908 = vst [vmem:[%s3 + $0x10] sm:$0xff] %v1876
  %1909 = vst [vmem:[%s3 + $0x18] sm:$0xff] %v1877
  %1910 = vst [vmem:[%s3 + $0x20] sm:$0xff] %v1878
  %1911 = vst [vmem:[%s3 + $0x28] sm:$0xff] %v1879
  %1912 = vst [vmem:[%s3 + $0x30] sm:$0xff] %v1880
  %1913 = vst [vmem:[%s3 + $0x38] sm:$0xff] %v1881
  %1914 = vst [vmem:[%s3 + $0x40] sm:$0xff] %v1882
  %1915 = vst [vmem:[%s3 + $0x48] sm:$0xff] %v1883
  %1916 = vst [vmem:[%s3 + $0x50] sm:$0xff] %v1884
  %1917 = vst [vmem:[%s3 + $0x58] sm:$0xff] %v1885
  %1918 = vst [vmem:[%s3 + $0x60] sm:$0xff] %v1886
  %1919 = vst [vmem:[%s3 + $0x68] sm:$0xff] %v1887
  %1920 = vst [vmem:[%s3 + $0x70] sm:$0xff] %v1888
  %1921 = vst [vmem:[%s3 + $0x78] sm:$0xff] %v1889
  %1922 = vst [vmem:[%s3 + $0x80] sm:$0xff] %v1890
  %1923 = vst [vmem:[%s3 + $0x88] sm:$0xff] %v1891
  %1924 = vst [vmem:[%s3 + $0x90] sm:$0xff] %v1892
  %1925 = vst [vmem:[%s3 + $0x98] sm:$0xff] %v1893
  %1926 = vst [vmem:[%s3 + $0xa0] sm:$0xff] %v1894
  %1927 = vst [vmem:[%s3 + $0xa8] sm:$0xff] %v1895
  %1928 = vst [vmem:[%s3 + $0xb0] sm:$0xff] %v1896
  %1929 = vst [vmem:[%s3 + $0xb8] sm:$0xff] %v1897
  %1930 = vst [vmem:[%s3 + $0xc0] sm:$0xff] %v1898
  %1931 = vst [vmem:[%s3 + $0xc8] sm:$0xff] %v1899
  %1932 = vst [vmem:[%s3 + $0xd0] sm:$0xff] %v1900
  %1933 = vst [vmem:[%s3 + $0xd8] sm:$0xff] %v1901
  %1934 = vst [vmem:[%s3 + $0xe0] sm:$0xff] %v1902
  %1935 = vst [vmem:[%s3 + $0xe8] sm:$0xff] %v1903
  %1936 = vst [vmem:[%s3 + $0xf0] sm:$0xff] %v1904
  %1937 = vst [vmem:[%s3 + $0xf8] sm:$0xff] %v1905
  // Predicated region
  $region14: #{scalo_cnn_forward.9} parent=0 // pred_check
    _
  $region15: #{scalo_cnn_forward.9} parent=0 // pred_check_branch
    %1939 = sbr.rel (0) target = $region17
  $region16: #{scalo_cnn_forward.9} parent=0 // pred_region
    _
  $region17: #{scalo_cnn_forward.9} parent=0 // pred_fallthru
    _
  // Predicated region
  $region18: #{scalo_cnn_forward.9} parent=0 // pred_check
    _
  $region19: #{scalo_cnn_forward.9} parent=0 // pred_check_branch
    %1941 = sbr.rel (0) target = $region21
  $region20: #{scalo_cnn_forward.9} parent=0 // pred_region
    _
  $region21: #{scalo_cnn_forward.9} parent=0 // pred_fallthru
    _

</llo_original>
